<compile_context>
chip_gen: v6e
topology: v6e:2x2x1
jax: 0.10.0
libtpu: 0.0.40
codegen_flags: <defaults>
</compile_context>

<pallas_src>
import jax
import jax.numpy as jnp
from jax import lax
from jax.experimental import pallas as pl
from jax.experimental.pallas import tpu as pltpu


# ------------------------- fused ExplainableNet kernel -------------------------
def make_fused_kernel(feat_cfgs, Bt, T, C):
    """Build the fused kernel for a static branch configuration and batch tile Bt."""
    any_text = any(cfg["is_text"] for cfg in feat_cfgs)
    n_inputs = 1 + sum(11 if c["is_text"] else 2 for c in feat_cfgs) + 1

    def kernel(*refs):
        in_refs = refs[:n_inputs]
        out_ref = refs[n_inputs]
        scratch_refs = refs[n_inputs + 1:]

        idx = 0
        lens_ref = in_refs[idx]; idx += 1          # (1, Bt, 1) int32, VMEM

        # --- sequence-mask bias, one vectorized compare + select (shared by branches) ---
        mask3 = None
        if any_text:
            t_idx = lax.broadcasted_iota(jnp.int32, (T, Bt, 1), 0)
            mask3 = jnp.where(t_idx < lens_ref[...], 0.0, -1e30).astype(jnp.float32)

        branch_feats = []                           # (is_text, feature f32, w_cls_ref)
        s_i = 0
        for cfg in feat_cfgs:
            if cfg["is_text"]:
                (x_ref, w_ir_ref, w_iz_ref, w_in_ref, w_hh_ref,
                 b_r_ref, b_z_ref, b_in_ref, b_hn_ref,
                 w_att_ref, w_cls_ref) = in_refs[idx:idx + 11]
                idx += 11
                hseq_ref = scratch_refs[s_i]; s_i += 1    # VMEM (T, Bt, H) f32
                E, H = cfg["embedding_size"], cfg["units"]

                # ---- hoisted input projection over all time steps (bf16 MXU, f32 acc) ----
                # x is time-major (T, Bt, E); reshape is free once Bt % 8 == 0.
                x2 = x_ref[...].reshape(T * Bt, E)
                gi_r = (jnp.dot(x2, w_ir_ref[...], preferred_element_type=jnp.float32)
                        + b_r_ref[...]).reshape(T, Bt, H)
                gi_z = (jnp.dot(x2, w_iz_ref[...], preferred_element_type=jnp.float32)
                        + b_z_ref[...]).reshape(T, Bt, H)
                gi_n = (jnp.dot(x2, w_in_ref[...], preferred_element_type=jnp.float32)
                        + b_in_ref[...]).reshape(T, Bt, H)

                w_hh = w_hh_ref[...]                       # (H, 3H) bf16, bands [r|z|n]
                b_hn = b_hn_ref[...]                       # (1, H) f32

                # ---- GRU recurrence, fully unrolled; ONE packed recurrent dot per step ----
                # t = 0: h0 == 0 -> the recurrent matmul vanishes.
                r = jax.nn.sigmoid(gi_r[0])
                z = jax.nn.sigmoid(gi_z[0])
                n = jnp.tanh(gi_n[0] + r * b_hn)
                h = (1.0 - z) * n
                hseq_ref[0] = h
                for t in range(1, T):
                    gh = jnp.dot(h.astype(jnp.bfloat16), w_hh,
                                 preferred_element_type=jnp.float32)      # (Bt, 3H)
                    r = jax.nn.sigmoid(gi_r[t] + gh[:, 0:H])
                    z = jax.nn.sigmoid(gi_z[t] + gh[:, H:2 * H])
                    n = jnp.tanh(gi_n[t] + r * (gh[:, 2 * H:3 * H] + b_hn))
                    h = (1.0 - z) * n + z * h
                    hseq_ref[t] = h                       # park in VMEM slab

                # ---- attention pool: one pass over the slab, masked softmax in f32 ----
                hseq = hseq_ref[...]                                       # (T, Bt, H) f32
                # scores computed as multiply + lane reduce over the whole slab (single
                # vectorized pass; avoids a lane-dim-changing reshape of a (T*Bt,1) dot).
                scores = jnp.sum(hseq * w_att_ref[...], axis=-1, keepdims=True)  # (T,Bt,1)
                scores = scores + mask3
                m = jnp.max(scores, axis=0, keepdims=True)
                e = jnp.exp(scores - m)
                # max-subtraction keeps denom >= 1 (no NaN even for seq_len == 0)
                denom = jnp.sum(e, axis=0, keepdims=True) + 1e-20
                alpha = e * pl.reciprocal(denom, approx=True)              # (T, Bt, 1)
                pooled = jnp.sum(alpha * hseq, axis=0)                     # (Bt, H) f32
                # nn.Dropout in eval mode -> identity
                branch_feats.append((True, pooled, w_cls_ref))
            else:
                x_ref, w_cls_ref = in_refs[idx:idx + 2]
                idx += 2
                branch_feats.append((False, x_ref[...].astype(jnp.float32), w_cls_ref))

        b_cls_ref = in_refs[idx]                    # (1, C) f32

        # ---- final Linear, "concat" folded in as per-branch partial matmuls ----
        acc = jnp.zeros((Bt, C), jnp.float32) + b_cls_ref[...]
        for is_text, feat, w_cls_ref in branch_feats:
            if is_text:
                acc = acc + jnp.dot(feat.astype(jnp.bfloat16), w_cls_ref[...],
                                    preferred_element_type=jnp.float32)
            else:
                acc = acc + feat * w_cls_ref[...]          # (Bt,1)*(1,C) broadcast
        out_ref[...] = acc.astype(out_ref.dtype)

    return kernel


def explainable_net_forward(kparams, feat_cfgs, inputs, seq_lens, *, b_tile=None):
    B = inputs[0].shape[0]
    text_inputs = [x for cfg, x in zip(feat_cfgs, inputs) if cfg["is_text"]]
    T = text_inputs[0].shape[1] if text_inputs else 1
    C = kparams["b_cls"].shape[-1]
    if b_tile is None:
        b_tile = B                      # toy shapes; production: multiple of 8, VMEM-budgeted
    assert B % b_tile == 0
    grid = (B // b_tile,)

    def wspec(arr):                     # weights: constant index_map -> stay VMEM-resident
        return pl.BlockSpec(arr.shape, lambda i, _n=arr.ndim: (0,) * _n)

    args = [jnp.asarray(seq_lens, dtype=jnp.int32).reshape(1, B, 1)]
    in_specs = [pl.BlockSpec((1, b_tile, 1), lambda i: (0, i, 0))]
    scratch_shapes = []
    for cfg, p, x in zip(feat_cfgs, kparams["single"], inputs):
        if cfg["is_text"]:
            H = cfg["units"]
            E = x.shape[-1]
            x_tm = jnp.transpose(x, (1, 0, 2)).astype(jnp.bfloat16)   # time-major (T,B,E)
            wlist = [p["w_ir"], p["w_iz"], p["w_in"], p["w_hh"],
                     p["b_r"], p["b_z"], p["b_in"], p["b_hn"], p["w_att"], p["w_cls"]]
            args += [x_tm] + wlist
            in_specs.append(pl.BlockSpec((T, b_tile, E), lambda i: (0, i, 0)))
            in_specs += [wspec(w) for w in wlist]
            scratch_shapes.append(pltpu.VMEM((T, b_tile, H), jnp.float32))
        else:
            args += [x, p["w_cls"]]
            in_specs += [pl.BlockSpec((b_tile, x.shape[-1]), lambda i: (i, 0)),
                         wspec(p["w_cls"])]
    args.append(kparams["b_cls"])
    in_specs.append(wspec(kparams["b_cls"]))

    kernel = make_fused_kernel(feat_cfgs, b_tile, T, C)
    return pl.pallas_call(
        kernel,
        out_shape=jax.ShapeDtypeStruct((B, C), jnp.float32),
        grid_spec=pltpu.PrefetchScalarGridSpec(
            num_scalar_prefetch=0,
            grid=grid,
            in_specs=in_specs,
            out_specs=pl.BlockSpec((b_tile, C), lambda i: (i, 0)),
            scratch_shapes=scratch_shapes),
        compiler_params=pltpu.CompilerParams(
            dimension_semantics=("parallel",),
            # 48 MiB: safe on v7x (64 MiB physical); raise toward ~100 MiB on v5e/v6e
            # when tiling larger batches.
            vmem_limit_bytes=48 * 1024 * 1024),
    )(*args)


# ------------------------- parameters (PyTorch layout -> kernel layout) -------------------------
def init_params(key, feat_cfgs, num_events):
    """PyTorch-layout parameters (nn.GRU / nn.Linear conventions)."""
    params = {"single": []}
    input_rnn = 0
    for cfg in feat_cfgs:
        if cfg["is_text"]:
            E, H = cfg["embedding_size"], cfg["units"]
            key, *ks = jax.random.split(key, 6)
            p = {
                "w_ih": 0.1 * jax.random.normal(ks[0], (3 * H, E), jnp.float32),  # gates [r|z|n]
                "w_hh": 0.1 * jax.random.normal(ks[1], (3 * H, H), jnp.float32),
                "b_ih": 0.1 * jax.random.normal(ks[2], (3 * H,), jnp.float32),
                "b_hh": 0.1 * jax.random.normal(ks[3], (3 * H,), jnp.float32),
                "w_att": 0.1 * jax.random.normal(ks[4], (H,), jnp.float32),
            }
            params["single"].append(p)
            input_rnn += H
        else:
            params["single"].append({})
            input_rnn += 1          # hidden_size = 1 for non-text SingleDomainNet
    key, k1, k2 = jax.random.split(key, 3)
    params["w_cls"] = 0.1 * jax.random.normal(k1, (num_events, input_rnn), jnp.float32)  # (C, F)
    params["b_cls"] = 0.1 * jax.random.normal(k2, (num_events,), jnp.float32)
    return params


def prepare_kernel_params(params, feat_cfgs):
    """One-time conversion: split/transpose gates, pack recurrent weights, bf16 matmul
    operands, merge r/z biases, split W_cls per branch."""
    kp = {"single": []}
    w_cls_t = jnp.transpose(params["w_cls"])          # (F, C)
    off = 0
    for cfg, p in zip(feat_cfgs, params["single"]):
        if cfg["is_text"]:
            H = cfg["units"]
            w_ih, w_hh, b_ih, b_hh = p["w_ih"], p["w_hh"], p["b_ih"], p["b_hh"]
            kp["single"].append({
                "w_ir": jnp.transpose(w_ih[0:H]).astype(jnp.bfloat16),        # (E, H)
                "w_iz": jnp.transpose(w_ih[H:2 * H]).astype(jnp.bfloat16),
                "w_in": jnp.transpose(w_ih[2 * H:3 * H]).astype(jnp.bfloat16),
                "w_hh": jnp.transpose(w_hh).astype(jnp.bfloat16),             # (H, 3H) packed [r|z|n]
                "b_r": (b_ih[0:H] + b_hh[0:H]).reshape(1, H),                 # merged r-gate bias, f32
                "b_z": (b_ih[H:2 * H] + b_hh[H:2 * H]).reshape(1, H),
                "b_in": b_ih[2 * H:3 * H].reshape(1, H),
                "b_hn": b_hh[2 * H:3 * H].reshape(1, H),                      # stays inside r*(...)
                "w_att": p["w_att"].reshape(1, 1, H),                         # f32 (VPU path)
                "w_cls": w_cls_t[off:off + H].astype(jnp.bfloat16),           # (H, C)
            })
            off += H
        else:
            kp["single"].append({"w_cls": w_cls_t[off:off + 1]})              # (1, C) f32
            off += 1
    kp["b_cls"] = params["b_cls"].reshape(1, -1)
    return kp


# ------------------------- pure-JAX reference (for validation) -------------------------
def reference_forward(params, feat_cfgs, inputs, seq_lens):
    feats = []
    for cfg, p, x in zip(feat_cfgs, params["single"], inputs):
        if cfg["is_text"]:
            H = cfg["units"]
            Bx, Tx, _ = x.shape
            h = jnp.zeros((Bx, H), jnp.float32)
            hs = []
            for t in range(Tx):
                x_t = x[:, t, :]
                gi = x_t @ p["w_ih"].T + p["b_ih"]
                gh = h @ p["w_hh"].T + p["b_hh"]
                i_r, i_z, i_n = gi[:, :H], gi[:, H:2 * H], gi[:, 2 * H:]
                h_r, h_z, h_n = gh[:, :H], gh[:, H:2 * H], gh[:, 2 * H:]
                r = jax.nn.sigmoid(i_r + h_r)
                z = jax.nn.sigmoid(i_z + h_z)
                n = jnp.tanh(i_n + r * h_n)
                h = (1.0 - z) * n + z * h
                hs.append(h)
            hseq = jnp.stack(hs, axis=1)                              # (B, T, H)
            scores = jnp.einsum("bth,h->bt", hseq, p["w_att"])
            mask = jnp.arange(Tx)[None, :] < seq_lens[:, None]
            scores = jnp.where(mask, scores, -1e30)
            alpha = jax.nn.softmax(scores, axis=-1)
            feats.append(jnp.einsum("bt,bth->bh", alpha, hseq))
        else:
            feats.append(x)
    xcat = jnp.concatenate(feats, axis=-1)
    return xcat @ params["w_cls"].T + params["b_cls"]


if __name__ == "__main__":
    B, T = 2, 8
    feat_cfgs = [
        {"name": "text_0", "is_text": True, "embedding_size": 16, "units": 32},
        {"name": "text_1", "is_text": True, "embedding_size": 12, "units": 16},
        {"name": "scalar_feat", "is_text": False},
    ]
    num_events = 4

    key = jax.random.PRNGKey(0)
    key, kx0, kx1, kx2 = jax.random.split(key, 4)
    x_text0 = jax.random.normal(kx0, (B, T, 16), jnp.float32)
    x_text1 = jax.random.normal(kx1, (B, T, 12), jnp.float32)
    x_scalar = jax.random.normal(kx2, (B, 1), jnp.float32)
    seq_lens = jnp.array([T, 5], dtype=jnp.int32)
    inputs = (x_text0, x_text1, x_scalar)

    torch_params = init_params(key, feat_cfgs, num_events)
    kparams = prepare_kernel_params(torch_params, feat_cfgs)

    out = explainable_net_forward(kparams, feat_cfgs, inputs, seq_lens)
    out = jax.block_until_ready(out)

    assert out.shape == (B, num_events), out.shape
    assert bool(jnp.all(jnp.isfinite(out)))

    ref = reference_forward(torch_params, feat_cfgs, inputs, seq_lens)
    # Tolerance widened vs the pure-f32 version: matmul operands (x, GRU weights,
    # classifier weights) are bf16 on the MXU (f32 accumulation / elementwise).
    assert bool(jnp.allclose(out, ref, rtol=2e-2, atol=2e-2)), (out, ref)

    print("KERNEL_OK")
</pallas_src>

<mosaic_0001>
module attributes {stable_mosaic.version = 11 : i64} {
  func.func @kernel(%arg0: i32, %arg1: memref<1x2x1xi32, #tpu.memory_space<vmem>>, %arg2: memref<8x2x16xbf16, #tpu.memory_space<vmem>>, %arg3: memref<16x32xbf16, #tpu.memory_space<vmem>>, %arg4: memref<16x32xbf16, #tpu.memory_space<vmem>>, %arg5: memref<16x32xbf16, #tpu.memory_space<vmem>>, %arg6: memref<32x96xbf16, #tpu.memory_space<vmem>>, %arg7: memref<1x32xf32, #tpu.memory_space<vmem>>, %arg8: memref<1x32xf32, #tpu.memory_space<vmem>>, %arg9: memref<1x32xf32, #tpu.memory_space<vmem>>, %arg10: memref<1x32xf32, #tpu.memory_space<vmem>>, %arg11: memref<1x1x32xf32, #tpu.memory_space<vmem>>, %arg12: memref<32x4xbf16, #tpu.memory_space<vmem>>, %arg13: memref<8x2x12xbf16, #tpu.memory_space<vmem>>, %arg14: memref<12x16xbf16, #tpu.memory_space<vmem>>, %arg15: memref<12x16xbf16, #tpu.memory_space<vmem>>, %arg16: memref<12x16xbf16, #tpu.memory_space<vmem>>, %arg17: memref<16x48xbf16, #tpu.memory_space<vmem>>, %arg18: memref<1x16xf32, #tpu.memory_space<vmem>>, %arg19: memref<1x16xf32, #tpu.memory_space<vmem>>, %arg20: memref<1x16xf32, #tpu.memory_space<vmem>>, %arg21: memref<1x16xf32, #tpu.memory_space<vmem>>, %arg22: memref<1x1x16xf32, #tpu.memory_space<vmem>>, %arg23: memref<16x4xbf16, #tpu.memory_space<vmem>>, %arg24: memref<2x1xf32, #tpu.memory_space<vmem>>, %arg25: memref<1x4xf32, #tpu.memory_space<vmem>>, %arg26: memref<1x4xf32, #tpu.memory_space<vmem>>, %arg27: memref<2x4xf32, #tpu.memory_space<vmem>>, %arg28: memref<8x2x32xf32, #tpu.memory_space<vmem>>, %arg29: memref<8x2x16xf32, #tpu.memory_space<vmem>>) attributes {dimension_semantics = [#tpu.dimension_semantics<parallel>], iteration_bounds = array<i64: 1>, scalar_prefetch = 0 : i64, scratch_operands = 2 : i64, tpu.core_type = #tpu.core_type<tc>, window_params = [{transform_indices = @transform_0, window_bounds = array<i64: 1, 2, 1>}, {transform_indices = @transform_1, window_bounds = array<i64: 8, 2, 16>}, {pipeline_mode = #tpu.pipeline_mode<synchronous>, transform_indices = @transform_2, window_bounds = array<i64: 16, 32>}, {pipeline_mode = #tpu.pipeline_mode<synchronous>, transform_indices = @transform_3, window_bounds = array<i64: 16, 32>}, {pipeline_mode = #tpu.pipeline_mode<synchronous>, transform_indices = @transform_4, window_bounds = array<i64: 16, 32>}, {pipeline_mode = #tpu.pipeline_mode<synchronous>, transform_indices = @transform_5, window_bounds = array<i64: 32, 96>}, {pipeline_mode = #tpu.pipeline_mode<synchronous>, transform_indices = @transform_6, window_bounds = array<i64: 1, 32>}, {pipeline_mode = #tpu.pipeline_mode<synchronous>, transform_indices = @transform_7, window_bounds = array<i64: 1, 32>}, {pipeline_mode = #tpu.pipeline_mode<synchronous>, transform_indices = @transform_8, window_bounds = array<i64: 1, 32>}, {pipeline_mode = #tpu.pipeline_mode<synchronous>, transform_indices = @transform_9, window_bounds = array<i64: 1, 32>}, {pipeline_mode = #tpu.pipeline_mode<synchronous>, transform_indices = @transform_10, window_bounds = array<i64: 1, 1, 32>}, {pipeline_mode = #tpu.pipeline_mode<synchronous>, transform_indices = @transform_11, window_bounds = array<i64: 32, 4>}, {transform_indices = @transform_12, window_bounds = array<i64: 8, 2, 12>}, {pipeline_mode = #tpu.pipeline_mode<synchronous>, transform_indices = @transform_13, window_bounds = array<i64: 12, 16>}, {pipeline_mode = #tpu.pipeline_mode<synchronous>, transform_indices = @transform_14, window_bounds = array<i64: 12, 16>}, {pipeline_mode = #tpu.pipeline_mode<synchronous>, transform_indices = @transform_15, window_bounds = array<i64: 12, 16>}, {pipeline_mode = #tpu.pipeline_mode<synchronous>, transform_indices = @transform_16, window_bounds = array<i64: 16, 48>}, {pipeline_mode = #tpu.pipeline_mode<synchronous>, transform_indices = @transform_17, window_bounds = array<i64: 1, 16>}, {pipeline_mode = #tpu.pipeline_mode<synchronous>, transform_indices = @transform_18, window_bounds = array<i64: 1, 16>}, {pipeline_mode = #tpu.pipeline_mode<synchronous>, transform_indices = @transform_19, window_bounds = array<i64: 1, 16>}, {pipeline_mode = #tpu.pipeline_mode<synchronous>, transform_indices = @transform_20, window_bounds = array<i64: 1, 16>}, {pipeline_mode = #tpu.pipeline_mode<synchronous>, transform_indices = @transform_21, window_bounds = array<i64: 1, 1, 16>}, {pipeline_mode = #tpu.pipeline_mode<synchronous>, transform_indices = @transform_22, window_bounds = array<i64: 16, 4>}, {transform_indices = @transform_23, window_bounds = array<i64: 2, 1>}, {pipeline_mode = #tpu.pipeline_mode<synchronous>, transform_indices = @transform_24, window_bounds = array<i64: 1, 4>}, {pipeline_mode = #tpu.pipeline_mode<synchronous>, transform_indices = @transform_25, window_bounds = array<i64: 1, 4>}, {transform_indices = @transform_26, window_bounds = array<i64: 2, 4>}]} {
    %0 = tpu.iota {dimensions = array<i32: 0>} : vector<8x2x1xi32>
    %c0 = arith.constant 0 : index
    %c0_0 = arith.constant 0 : index
    %c0_1 = arith.constant 0 : index
    %1 = vector.load %arg1[%c0, %c0_0, %c0_1] : memref<1x2x1xi32, #tpu.memory_space<vmem>>, vector<1x2x1xi32>
    %2 = vector.broadcast %1 : vector<1x2x1xi32> to vector<8x2x1xi32>
    %3 = arith.cmpi slt, %0, %2 : vector<8x2x1xi32>
    %cst = arith.constant 0.000000e+00 : f32
    %cst_2 = arith.constant -1.000000e+30 : f32
    %4 = vector.broadcast %cst : f32 to vector<8x2x1xf32>
    %5 = vector.broadcast %cst_2 : f32 to vector<8x2x1xf32>
    %6 = arith.select %3, %4, %5 : vector<8x2x1xi1>, vector<8x2x1xf32>
    %c0_3 = arith.constant 0 : index
    %c0_4 = arith.constant 0 : index
    %c0_5 = arith.constant 0 : index
    %7 = vector.load %arg2[%c0_3, %c0_4, %c0_5] : memref<8x2x16xbf16, #tpu.memory_space<vmem>>, vector<8x2x16xbf16>
    %8 = vector.shape_cast %7 : vector<8x2x16xbf16> to vector<16x16xbf16>
    %c0_6 = arith.constant 0 : index
    %c0_7 = arith.constant 0 : index
    %9 = vector.load %arg3[%c0_6, %c0_7] : memref<16x32xbf16, #tpu.memory_space<vmem>>, vector<16x32xbf16>
    %cst_8 = arith.constant dense<0.000000e+00> : vector<16x32xf32>
    %10 = tpu.matmul %8, %9, %cst_8 {dimension_numbers = #tpu.dot_dimension_numbers<[1], [0], [0], [1], [0, 0, 1, 1], [], []>} : vector<16x16xbf16>, vector<16x32xbf16>, vector<16x32xf32> -> vector<16x32xf32>
    %c0_9 = arith.constant 0 : index
    %c0_10 = arith.constant 0 : index
    %11 = vector.load %arg7[%c0_9, %c0_10] : memref<1x32xf32, #tpu.memory_space<vmem>>, vector<1x32xf32>
    %12 = vector.broadcast %11 : vector<1x32xf32> to vector<16x32xf32>
    %13 = arith.addf %10, %12 : vector<16x32xf32>
    %14 = vector.shape_cast %13 : vector<16x32xf32> to vector<8x2x32xf32>
    %c0_11 = arith.constant 0 : index
    %c0_12 = arith.constant 0 : index
    %15 = vector.load %arg4[%c0_11, %c0_12] : memref<16x32xbf16, #tpu.memory_space<vmem>>, vector<16x32xbf16>
    %cst_13 = arith.constant dense<0.000000e+00> : vector<16x32xf32>
    %16 = tpu.matmul %8, %15, %cst_13 {dimension_numbers = #tpu.dot_dimension_numbers<[1], [0], [0], [1], [0, 0, 1, 1], [], []>} : vector<16x16xbf16>, vector<16x32xbf16>, vector<16x32xf32> -> vector<16x32xf32>
    %c0_14 = arith.constant 0 : index
    %c0_15 = arith.constant 0 : index
    %17 = vector.load %arg8[%c0_14, %c0_15] : memref<1x32xf32, #tpu.memory_space<vmem>>, vector<1x32xf32>
    %18 = vector.broadcast %17 : vector<1x32xf32> to vector<16x32xf32>
    %19 = arith.addf %16, %18 : vector<16x32xf32>
    %20 = vector.shape_cast %19 : vector<16x32xf32> to vector<8x2x32xf32>
    %c0_16 = arith.constant 0 : index
    %c0_17 = arith.constant 0 : index
    %21 = vector.load %arg5[%c0_16, %c0_17] : memref<16x32xbf16, #tpu.memory_space<vmem>>, vector<16x32xbf16>
    %cst_18 = arith.constant dense<0.000000e+00> : vector<16x32xf32>
    %22 = tpu.matmul %8, %21, %cst_18 {dimension_numbers = #tpu.dot_dimension_numbers<[1], [0], [0], [1], [0, 0, 1, 1], [], []>} : vector<16x16xbf16>, vector<16x32xbf16>, vector<16x32xf32> -> vector<16x32xf32>
    %c0_19 = arith.constant 0 : index
    %c0_20 = arith.constant 0 : index
    %23 = vector.load %arg9[%c0_19, %c0_20] : memref<1x32xf32, #tpu.memory_space<vmem>>, vector<1x32xf32>
    %24 = vector.broadcast %23 : vector<1x32xf32> to vector<16x32xf32>
    %25 = arith.addf %22, %24 : vector<16x32xf32>
    %26 = vector.shape_cast %25 : vector<16x32xf32> to vector<8x2x32xf32>
    %c0_21 = arith.constant 0 : index
    %c0_22 = arith.constant 0 : index
    %27 = vector.load %arg6[%c0_21, %c0_22] : memref<32x96xbf16, #tpu.memory_space<vmem>>, vector<32x96xbf16>
    %c0_23 = arith.constant 0 : index
    %c0_24 = arith.constant 0 : index
    %28 = vector.load %arg10[%c0_23, %c0_24] : memref<1x32xf32, #tpu.memory_space<vmem>>, vector<1x32xf32>
    %29 = vector.extract_strided_slice %14 {offsets = [0, 0, 0], sizes = [1, 2, 32], strides = [1, 1, 1]} : vector<8x2x32xf32> to vector<1x2x32xf32>
    %30 = vector.shape_cast %29 : vector<1x2x32xf32> to vector<2x32xf32>
    %31 = arith.negf %30 : vector<2x32xf32>
    %32 = math.exp %31 : vector<2x32xf32>
    %cst_25 = arith.constant 1.000000e+00 : f32
    %33 = vector.broadcast %cst_25 : f32 to vector<2x32xf32>
    %34 = arith.addf %33, %32 : vector<2x32xf32>
    %35 = arith.divf %33, %34 : vector<2x32xf32>
    %36 = vector.extract_strided_slice %20 {offsets = [0, 0, 0], sizes = [1, 2, 32], strides = [1, 1, 1]} : vector<8x2x32xf32> to vector<1x2x32xf32>
    %37 = vector.shape_cast %36 : vector<1x2x32xf32> to vector<2x32xf32>
    %38 = arith.negf %37 : vector<2x32xf32>
    %39 = math.exp %38 : vector<2x32xf32>
    %cst_26 = arith.constant 1.000000e+00 : f32
    %40 = vector.broadcast %cst_26 : f32 to vector<2x32xf32>
    %41 = arith.addf %40, %39 : vector<2x32xf32>
    %42 = arith.divf %40, %41 : vector<2x32xf32>
    %43 = vector.extract_strided_slice %26 {offsets = [0, 0, 0], sizes = [1, 2, 32], strides = [1, 1, 1]} : vector<8x2x32xf32> to vector<1x2x32xf32>
    %44 = vector.shape_cast %43 : vector<1x2x32xf32> to vector<2x32xf32>
    %45 = vector.broadcast %28 : vector<1x32xf32> to vector<2x32xf32>
    %46 = arith.mulf %35, %45 : vector<2x32xf32>
    %47 = arith.addf %44, %46 : vector<2x32xf32>
    %48 = math.tanh %47 : vector<2x32xf32>
    %cst_27 = arith.constant 1.000000e+00 : f32
    %49 = vector.broadcast %cst_27 : f32 to vector<2x32xf32>
    %50 = arith.subf %49, %42 : vector<2x32xf32>
    %51 = arith.mulf %50, %48 : vector<2x32xf32>
    %c0_28 = arith.constant 0 : index
    %c0_29 = arith.constant 0 : index
    %c0_30 = arith.constant 0 : index
    %52 = vector.load %arg28[%c0_28, %c0_29, %c0_30] : memref<8x2x32xf32, #tpu.memory_space<vmem>>, vector<1x2x32xf32>
    %53 = vector.shape_cast %52 : vector<1x2x32xf32> to vector<2x32xf32>
    %54 = vector.shape_cast %51 : vector<2x32xf32> to vector<1x2x32xf32>
    tpu.vector_store %arg28[%c0_28, %c0_29, %c0_30], %54 {strides = array<i32>} : memref<8x2x32xf32, #tpu.memory_space<vmem>>, vector<1x2x32xf32>,
    %55 = arith.truncf %51 : vector<2x32xf32> to vector<2x32xbf16>
    %cst_31 = arith.constant dense<0.000000e+00> : vector<2x96xf32>
    %56 = tpu.matmul %55, %27, %cst_31 {dimension_numbers = #tpu.dot_dimension_numbers<[1], [0], [0], [1], [0, 0, 1, 1], [], []>} : vector<2x32xbf16>, vector<32x96xbf16>, vector<2x96xf32> -> vector<2x96xf32>
    %57 = vector.extract_strided_slice %14 {offsets = [1, 0, 0], sizes = [1, 2, 32], strides = [1, 1, 1]} : vector<8x2x32xf32> to vector<1x2x32xf32>
    %58 = vector.shape_cast %57 : vector<1x2x32xf32> to vector<2x32xf32>
    %59 = vector.extract_strided_slice %56 {offsets = [0, 0], sizes = [2, 32], strides = [1, 1]} : vector<2x96xf32> to vector<2x32xf32>
    %60 = arith.addf %58, %59 : vector<2x32xf32>
    %61 = arith.negf %60 : vector<2x32xf32>
    %62 = math.exp %61 : vector<2x32xf32>
    %cst_32 = arith.constant 1.000000e+00 : f32
    %63 = vector.broadcast %cst_32 : f32 to vector<2x32xf32>
    %64 = arith.addf %63, %62 : vector<2x32xf32>
    %65 = arith.divf %63, %64 : vector<2x32xf32>
    %66 = vector.extract_strided_slice %20 {offsets = [1, 0, 0], sizes = [1, 2, 32], strides = [1, 1, 1]} : vector<8x2x32xf32> to vector<1x2x32xf32>
    %67 = vector.shape_cast %66 : vector<1x2x32xf32> to vector<2x32xf32>
    %68 = vector.extract_strided_slice %56 {offsets = [0, 32], sizes = [2, 32], strides = [1, 1]} : vector<2x96xf32> to vector<2x32xf32>
    %69 = arith.addf %67, %68 : vector<2x32xf32>
    %70 = arith.negf %69 : vector<2x32xf32>
    %71 = math.exp %70 : vector<2x32xf32>
    %cst_33 = arith.constant 1.000000e+00 : f32
    %72 = vector.broadcast %cst_33 : f32 to vector<2x32xf32>
    %73 = arith.addf %72, %71 : vector<2x32xf32>
    %74 = arith.divf %72, %73 : vector<2x32xf32>
    %75 = vector.extract_strided_slice %26 {offsets = [1, 0, 0], sizes = [1, 2, 32], strides = [1, 1, 1]} : vector<8x2x32xf32> to vector<1x2x32xf32>
    %76 = vector.shape_cast %75 : vector<1x2x32xf32> to vector<2x32xf32>
    %77 = vector.extract_strided_slice %56 {offsets = [0, 64], sizes = [2, 32], strides = [1, 1]} : vector<2x96xf32> to vector<2x32xf32>
    %78 = vector.broadcast %28 : vector<1x32xf32> to vector<2x32xf32>
    %79 = arith.addf %77, %78 : vector<2x32xf32>
    %80 = arith.mulf %65, %79 : vector<2x32xf32>
    %81 = arith.addf %76, %80 : vector<2x32xf32>
    %82 = math.tanh %81 : vector<2x32xf32>
    %cst_34 = arith.constant 1.000000e+00 : f32
    %83 = vector.broadcast %cst_34 : f32 to vector<2x32xf32>
    %84 = arith.subf %83, %74 : vector<2x32xf32>
    %85 = arith.mulf %84, %82 : vector<2x32xf32>
    %86 = arith.mulf %74, %51 : vector<2x32xf32>
    %87 = arith.addf %85, %86 : vector<2x32xf32>
    %c1 = arith.constant 1 : index
    %c0_35 = arith.constant 0 : index
    %c0_36 = arith.constant 0 : index
    %88 = vector.load %arg28[%c1, %c0_35, %c0_36] : memref<8x2x32xf32, #tpu.memory_space<vmem>>, vector<1x2x32xf32>
    %89 = vector.shape_cast %88 : vector<1x2x32xf32> to vector<2x32xf32>
    %90 = vector.shape_cast %87 : vector<2x32xf32> to vector<1x2x32xf32>
    tpu.vector_store %arg28[%c1, %c0_35, %c0_36], %90 {strides = array<i32>} : memref<8x2x32xf32, #tpu.memory_space<vmem>>, vector<1x2x32xf32>,
    %91 = arith.truncf %87 : vector<2x32xf32> to vector<2x32xbf16>
    %cst_37 = arith.constant dense<0.000000e+00> : vector<2x96xf32>
    %92 = tpu.matmul %91, %27, %cst_37 {dimension_numbers = #tpu.dot_dimension_numbers<[1], [0], [0], [1], [0, 0, 1, 1], [], []>} : vector<2x32xbf16>, vector<32x96xbf16>, vector<2x96xf32> -> vector<2x96xf32>
    %93 = vector.extract_strided_slice %14 {offsets = [2, 0, 0], sizes = [1, 2, 32], strides = [1, 1, 1]} : vector<8x2x32xf32> to vector<1x2x32xf32>
    %94 = vector.shape_cast %93 : vector<1x2x32xf32> to vector<2x32xf32>
    %95 = vector.extract_strided_slice %92 {offsets = [0, 0], sizes = [2, 32], strides = [1, 1]} : vector<2x96xf32> to vector<2x32xf32>
    %96 = arith.addf %94, %95 : vector<2x32xf32>
    %97 = arith.negf %96 : vector<2x32xf32>
    %98 = math.exp %97 : vector<2x32xf32>
    %cst_38 = arith.constant 1.000000e+00 : f32
    %99 = vector.broadcast %cst_38 : f32 to vector<2x32xf32>
    %100 = arith.addf %99, %98 : vector<2x32xf32>
    %101 = arith.divf %99, %100 : vector<2x32xf32>
    %102 = vector.extract_strided_slice %20 {offsets = [2, 0, 0], sizes = [1, 2, 32], strides = [1, 1, 1]} : vector<8x2x32xf32> to vector<1x2x32xf32>
    %103 = vector.shape_cast %102 : vector<1x2x32xf32> to vector<2x32xf32>
    %104 = vector.extract_strided_slice %92 {offsets = [0, 32], sizes = [2, 32], strides = [1, 1]} : vector<2x96xf32> to vector<2x32xf32>
    %105 = arith.addf %103, %104 : vector<2x32xf32>
    %106 = arith.negf %105 : vector<2x32xf32>
    %107 = math.exp %106 : vector<2x32xf32>
    %cst_39 = arith.constant 1.000000e+00 : f32
    %108 = vector.broadcast %cst_39 : f32 to vector<2x32xf32>
    %109 = arith.addf %108, %107 : vector<2x32xf32>
    %110 = arith.divf %108, %109 : vector<2x32xf32>
    %111 = vector.extract_strided_slice %26 {offsets = [2, 0, 0], sizes = [1, 2, 32], strides = [1, 1, 1]} : vector<8x2x32xf32> to vector<1x2x32xf32>
    %112 = vector.shape_cast %111 : vector<1x2x32xf32> to vector<2x32xf32>
    %113 = vector.extract_strided_slice %92 {offsets = [0, 64], sizes = [2, 32], strides = [1, 1]} : vector<2x96xf32> to vector<2x32xf32>
    %114 = vector.broadcast %28 : vector<1x32xf32> to vector<2x32xf32>
    %115 = arith.addf %113, %114 : vector<2x32xf32>
    %116 = arith.mulf %101, %115 : vector<2x32xf32>
    %117 = arith.addf %112, %116 : vector<2x32xf32>
    %118 = math.tanh %117 : vector<2x32xf32>
    %cst_40 = arith.constant 1.000000e+00 : f32
    %119 = vector.broadcast %cst_40 : f32 to vector<2x32xf32>
    %120 = arith.subf %119, %110 : vector<2x32xf32>
    %121 = arith.mulf %120, %118 : vector<2x32xf32>
    %122 = arith.mulf %110, %87 : vector<2x32xf32>
    %123 = arith.addf %121, %122 : vector<2x32xf32>
    %c2 = arith.constant 2 : index
    %c0_41 = arith.constant 0 : index
    %c0_42 = arith.constant 0 : index
    %124 = vector.load %arg28[%c2, %c0_41, %c0_42] : memref<8x2x32xf32, #tpu.memory_space<vmem>>, vector<1x2x32xf32>
    %125 = vector.shape_cast %124 : vector<1x2x32xf32> to vector<2x32xf32>
    %126 = vector.shape_cast %123 : vector<2x32xf32> to vector<1x2x32xf32>
    tpu.vector_store %arg28[%c2, %c0_41, %c0_42], %126 {strides = array<i32>} : memref<8x2x32xf32, #tpu.memory_space<vmem>>, vector<1x2x32xf32>,
    %127 = arith.truncf %123 : vector<2x32xf32> to vector<2x32xbf16>
    %cst_43 = arith.constant dense<0.000000e+00> : vector<2x96xf32>
    %128 = tpu.matmul %127, %27, %cst_43 {dimension_numbers = #tpu.dot_dimension_numbers<[1], [0], [0], [1], [0, 0, 1, 1], [], []>} : vector<2x32xbf16>, vector<32x96xbf16>, vector<2x96xf32> -> vector<2x96xf32>
    %129 = vector.extract_strided_slice %14 {offsets = [3, 0, 0], sizes = [1, 2, 32], strides = [1, 1, 1]} : vector<8x2x32xf32> to vector<1x2x32xf32>
    %130 = vector.shape_cast %129 : vector<1x2x32xf32> to vector<2x32xf32>
    %131 = vector.extract_strided_slice %128 {offsets = [0, 0], sizes = [2, 32], strides = [1, 1]} : vector<2x96xf32> to vector<2x32xf32>
    %132 = arith.addf %130, %131 : vector<2x32xf32>
    %133 = arith.negf %132 : vector<2x32xf32>
    %134 = math.exp %133 : vector<2x32xf32>
    %cst_44 = arith.constant 1.000000e+00 : f32
    %135 = vector.broadcast %cst_44 : f32 to vector<2x32xf32>
    %136 = arith.addf %135, %134 : vector<2x32xf32>
    %137 = arith.divf %135, %136 : vector<2x32xf32>
    %138 = vector.extract_strided_slice %20 {offsets = [3, 0, 0], sizes = [1, 2, 32], strides = [1, 1, 1]} : vector<8x2x32xf32> to vector<1x2x32xf32>
    %139 = vector.shape_cast %138 : vector<1x2x32xf32> to vector<2x32xf32>
    %140 = vector.extract_strided_slice %128 {offsets = [0, 32], sizes = [2, 32], strides = [1, 1]} : vector<2x96xf32> to vector<2x32xf32>
    %141 = arith.addf %139, %140 : vector<2x32xf32>
    %142 = arith.negf %141 : vector<2x32xf32>
    %143 = math.exp %142 : vector<2x32xf32>
    %cst_45 = arith.constant 1.000000e+00 : f32
    %144 = vector.broadcast %cst_45 : f32 to vector<2x32xf32>
    %145 = arith.addf %144, %143 : vector<2x32xf32>
    %146 = arith.divf %144, %145 : vector<2x32xf32>
    %147 = vector.extract_strided_slice %26 {offsets = [3, 0, 0], sizes = [1, 2, 32], strides = [1, 1, 1]} : vector<8x2x32xf32> to vector<1x2x32xf32>
    %148 = vector.shape_cast %147 : vector<1x2x32xf32> to vector<2x32xf32>
    %149 = vector.extract_strided_slice %128 {offsets = [0, 64], sizes = [2, 32], strides = [1, 1]} : vector<2x96xf32> to vector<2x32xf32>
    %150 = vector.broadcast %28 : vector<1x32xf32> to vector<2x32xf32>
    %151 = arith.addf %149, %150 : vector<2x32xf32>
    %152 = arith.mulf %137, %151 : vector<2x32xf32>
    %153 = arith.addf %148, %152 : vector<2x32xf32>
    %154 = math.tanh %153 : vector<2x32xf32>
    %cst_46 = arith.constant 1.000000e+00 : f32
    %155 = vector.broadcast %cst_46 : f32 to vector<2x32xf32>
    %156 = arith.subf %155, %146 : vector<2x32xf32>
    %157 = arith.mulf %156, %154 : vector<2x32xf32>
    %158 = arith.mulf %146, %123 : vector<2x32xf32>
    %159 = arith.addf %157, %158 : vector<2x32xf32>
    %c3 = arith.constant 3 : index
    %c0_47 = arith.constant 0 : index
    %c0_48 = arith.constant 0 : index
    %160 = vector.load %arg28[%c3, %c0_47, %c0_48] : memref<8x2x32xf32, #tpu.memory_space<vmem>>, vector<1x2x32xf32>
    %161 = vector.shape_cast %160 : vector<1x2x32xf32> to vector<2x32xf32>
    %162 = vector.shape_cast %159 : vector<2x32xf32> to vector<1x2x32xf32>
    tpu.vector_store %arg28[%c3, %c0_47, %c0_48], %162 {strides = array<i32>} : memref<8x2x32xf32, #tpu.memory_space<vmem>>, vector<1x2x32xf32>,
    %163 = arith.truncf %159 : vector<2x32xf32> to vector<2x32xbf16>
    %cst_49 = arith.constant dense<0.000000e+00> : vector<2x96xf32>
    %164 = tpu.matmul %163, %27, %cst_49 {dimension_numbers = #tpu.dot_dimension_numbers<[1], [0], [0], [1], [0, 0, 1, 1], [], []>} : vector<2x32xbf16>, vector<32x96xbf16>, vector<2x96xf32> -> vector<2x96xf32>
    %165 = vector.extract_strided_slice %14 {offsets = [4, 0, 0], sizes = [1, 2, 32], strides = [1, 1, 1]} : vector<8x2x32xf32> to vector<1x2x32xf32>
    %166 = vector.shape_cast %165 : vector<1x2x32xf32> to vector<2x32xf32>
    %167 = vector.extract_strided_slice %164 {offsets = [0, 0], sizes = [2, 32], strides = [1, 1]} : vector<2x96xf32> to vector<2x32xf32>
    %168 = arith.addf %166, %167 : vector<2x32xf32>
    %169 = arith.negf %168 : vector<2x32xf32>
    %170 = math.exp %169 : vector<2x32xf32>
    %cst_50 = arith.constant 1.000000e+00 : f32
    %171 = vector.broadcast %cst_50 : f32 to vector<2x32xf32>
    %172 = arith.addf %171, %170 : vector<2x32xf32>
    %173 = arith.divf %171, %172 : vector<2x32xf32>
    %174 = vector.extract_strided_slice %20 {offsets = [4, 0, 0], sizes = [1, 2, 32], strides = [1, 1, 1]} : vector<8x2x32xf32> to vector<1x2x32xf32>
    %175 = vector.shape_cast %174 : vector<1x2x32xf32> to vector<2x32xf32>
    %176 = vector.extract_strided_slice %164 {offsets = [0, 32], sizes = [2, 32], strides = [1, 1]} : vector<2x96xf32> to vector<2x32xf32>
    %177 = arith.addf %175, %176 : vector<2x32xf32>
    %178 = arith.negf %177 : vector<2x32xf32>
    %179 = math.exp %178 : vector<2x32xf32>
    %cst_51 = arith.constant 1.000000e+00 : f32
    %180 = vector.broadcast %cst_51 : f32 to vector<2x32xf32>
    %181 = arith.addf %180, %179 : vector<2x32xf32>
    %182 = arith.divf %180, %181 : vector<2x32xf32>
    %183 = vector.extract_strided_slice %26 {offsets = [4, 0, 0], sizes = [1, 2, 32], strides = [1, 1, 1]} : vector<8x2x32xf32> to vector<1x2x32xf32>
    %184 = vector.shape_cast %183 : vector<1x2x32xf32> to vector<2x32xf32>
    %185 = vector.extract_strided_slice %164 {offsets = [0, 64], sizes = [2, 32], strides = [1, 1]} : vector<2x96xf32> to vector<2x32xf32>
    %186 = vector.broadcast %28 : vector<1x32xf32> to vector<2x32xf32>
    %187 = arith.addf %185, %186 : vector<2x32xf32>
    %188 = arith.mulf %173, %187 : vector<2x32xf32>
    %189 = arith.addf %184, %188 : vector<2x32xf32>
    %190 = math.tanh %189 : vector<2x32xf32>
    %cst_52 = arith.constant 1.000000e+00 : f32
    %191 = vector.broadcast %cst_52 : f32 to vector<2x32xf32>
    %192 = arith.subf %191, %182 : vector<2x32xf32>
    %193 = arith.mulf %192, %190 : vector<2x32xf32>
    %194 = arith.mulf %182, %159 : vector<2x32xf32>
    %195 = arith.addf %193, %194 : vector<2x32xf32>
    %c4 = arith.constant 4 : index
    %c0_53 = arith.constant 0 : index
    %c0_54 = arith.constant 0 : index
    %196 = vector.load %arg28[%c4, %c0_53, %c0_54] : memref<8x2x32xf32, #tpu.memory_space<vmem>>, vector<1x2x32xf32>
    %197 = vector.shape_cast %196 : vector<1x2x32xf32> to vector<2x32xf32>
    %198 = vector.shape_cast %195 : vector<2x32xf32> to vector<1x2x32xf32>
    tpu.vector_store %arg28[%c4, %c0_53, %c0_54], %198 {strides = array<i32>} : memref<8x2x32xf32, #tpu.memory_space<vmem>>, vector<1x2x32xf32>,
    %199 = arith.truncf %195 : vector<2x32xf32> to vector<2x32xbf16>
    %cst_55 = arith.constant dense<0.000000e+00> : vector<2x96xf32>
    %200 = tpu.matmul %199, %27, %cst_55 {dimension_numbers = #tpu.dot_dimension_numbers<[1], [0], [0], [1], [0, 0, 1, 1], [], []>} : vector<2x32xbf16>, vector<32x96xbf16>, vector<2x96xf32> -> vector<2x96xf32>
    %201 = vector.extract_strided_slice %14 {offsets = [5, 0, 0], sizes = [1, 2, 32], strides = [1, 1, 1]} : vector<8x2x32xf32> to vector<1x2x32xf32>
    %202 = vector.shape_cast %201 : vector<1x2x32xf32> to vector<2x32xf32>
    %203 = vector.extract_strided_slice %200 {offsets = [0, 0], sizes = [2, 32], strides = [1, 1]} : vector<2x96xf32> to vector<2x32xf32>
    %204 = arith.addf %202, %203 : vector<2x32xf32>
    %205 = arith.negf %204 : vector<2x32xf32>
    %206 = math.exp %205 : vector<2x32xf32>
    %cst_56 = arith.constant 1.000000e+00 : f32
    %207 = vector.broadcast %cst_56 : f32 to vector<2x32xf32>
    %208 = arith.addf %207, %206 : vector<2x32xf32>
    %209 = arith.divf %207, %208 : vector<2x32xf32>
    %210 = vector.extract_strided_slice %20 {offsets = [5, 0, 0], sizes = [1, 2, 32], strides = [1, 1, 1]} : vector<8x2x32xf32> to vector<1x2x32xf32>
    %211 = vector.shape_cast %210 : vector<1x2x32xf32> to vector<2x32xf32>
    %212 = vector.extract_strided_slice %200 {offsets = [0, 32], sizes = [2, 32], strides = [1, 1]} : vector<2x96xf32> to vector<2x32xf32>
    %213 = arith.addf %211, %212 : vector<2x32xf32>
    %214 = arith.negf %213 : vector<2x32xf32>
    %215 = math.exp %214 : vector<2x32xf32>
    %cst_57 = arith.constant 1.000000e+00 : f32
    %216 = vector.broadcast %cst_57 : f32 to vector<2x32xf32>
    %217 = arith.addf %216, %215 : vector<2x32xf32>
    %218 = arith.divf %216, %217 : vector<2x32xf32>
    %219 = vector.extract_strided_slice %26 {offsets = [5, 0, 0], sizes = [1, 2, 32], strides = [1, 1, 1]} : vector<8x2x32xf32> to vector<1x2x32xf32>
    %220 = vector.shape_cast %219 : vector<1x2x32xf32> to vector<2x32xf32>
    %221 = vector.extract_strided_slice %200 {offsets = [0, 64], sizes = [2, 32], strides = [1, 1]} : vector<2x96xf32> to vector<2x32xf32>
    %222 = vector.broadcast %28 : vector<1x32xf32> to vector<2x32xf32>
    %223 = arith.addf %221, %222 : vector<2x32xf32>
    %224 = arith.mulf %209, %223 : vector<2x32xf32>
    %225 = arith.addf %220, %224 : vector<2x32xf32>
    %226 = math.tanh %225 : vector<2x32xf32>
    %cst_58 = arith.constant 1.000000e+00 : f32
    %227 = vector.broadcast %cst_58 : f32 to vector<2x32xf32>
    %228 = arith.subf %227, %218 : vector<2x32xf32>
    %229 = arith.mulf %228, %226 : vector<2x32xf32>
    %230 = arith.mulf %218, %195 : vector<2x32xf32>
    %231 = arith.addf %229, %230 : vector<2x32xf32>
    %c5 = arith.constant 5 : index
    %c0_59 = arith.constant 0 : index
    %c0_60 = arith.constant 0 : index
    %232 = vector.load %arg28[%c5, %c0_59, %c0_60] : memref<8x2x32xf32, #tpu.memory_space<vmem>>, vector<1x2x32xf32>
    %233 = vector.shape_cast %232 : vector<1x2x32xf32> to vector<2x32xf32>
    %234 = vector.shape_cast %231 : vector<2x32xf32> to vector<1x2x32xf32>
    tpu.vector_store %arg28[%c5, %c0_59, %c0_60], %234 {strides = array<i32>} : memref<8x2x32xf32, #tpu.memory_space<vmem>>, vector<1x2x32xf32>,
    %235 = arith.truncf %231 : vector<2x32xf32> to vector<2x32xbf16>
    %cst_61 = arith.constant dense<0.000000e+00> : vector<2x96xf32>
    %236 = tpu.matmul %235, %27, %cst_61 {dimension_numbers = #tpu.dot_dimension_numbers<[1], [0], [0], [1], [0, 0, 1, 1], [], []>} : vector<2x32xbf16>, vector<32x96xbf16>, vector<2x96xf32> -> vector<2x96xf32>
    %237 = vector.extract_strided_slice %14 {offsets = [6, 0, 0], sizes = [1, 2, 32], strides = [1, 1, 1]} : vector<8x2x32xf32> to vector<1x2x32xf32>
    %238 = vector.shape_cast %237 : vector<1x2x32xf32> to vector<2x32xf32>
    %239 = vector.extract_strided_slice %236 {offsets = [0, 0], sizes = [2, 32], strides = [1, 1]} : vector<2x96xf32> to vector<2x32xf32>
    %240 = arith.addf %238, %239 : vector<2x32xf32>
    %241 = arith.negf %240 : vector<2x32xf32>
    %242 = math.exp %241 : vector<2x32xf32>
    %cst_62 = arith.constant 1.000000e+00 : f32
    %243 = vector.broadcast %cst_62 : f32 to vector<2x32xf32>
    %244 = arith.addf %243, %242 : vector<2x32xf32>
    %245 = arith.divf %243, %244 : vector<2x32xf32>
    %246 = vector.extract_strided_slice %20 {offsets = [6, 0, 0], sizes = [1, 2, 32], strides = [1, 1, 1]} : vector<8x2x32xf32> to vector<1x2x32xf32>
    %247 = vector.shape_cast %246 : vector<1x2x32xf32> to vector<2x32xf32>
    %248 = vector.extract_strided_slice %236 {offsets = [0, 32], sizes = [2, 32], strides = [1, 1]} : vector<2x96xf32> to vector<2x32xf32>
    %249 = arith.addf %247, %248 : vector<2x32xf32>
    %250 = arith.negf %249 : vector<2x32xf32>
    %251 = math.exp %250 : vector<2x32xf32>
    %cst_63 = arith.constant 1.000000e+00 : f32
    %252 = vector.broadcast %cst_63 : f32 to vector<2x32xf32>
    %253 = arith.addf %252, %251 : vector<2x32xf32>
    %254 = arith.divf %252, %253 : vector<2x32xf32>
    %255 = vector.extract_strided_slice %26 {offsets = [6, 0, 0], sizes = [1, 2, 32], strides = [1, 1, 1]} : vector<8x2x32xf32> to vector<1x2x32xf32>
    %256 = vector.shape_cast %255 : vector<1x2x32xf32> to vector<2x32xf32>
    %257 = vector.extract_strided_slice %236 {offsets = [0, 64], sizes = [2, 32], strides = [1, 1]} : vector<2x96xf32> to vector<2x32xf32>
    %258 = vector.broadcast %28 : vector<1x32xf32> to vector<2x32xf32>
    %259 = arith.addf %257, %258 : vector<2x32xf32>
    %260 = arith.mulf %245, %259 : vector<2x32xf32>
    %261 = arith.addf %256, %260 : vector<2x32xf32>
    %262 = math.tanh %261 : vector<2x32xf32>
    %cst_64 = arith.constant 1.000000e+00 : f32
    %263 = vector.broadcast %cst_64 : f32 to vector<2x32xf32>
    %264 = arith.subf %263, %254 : vector<2x32xf32>
    %265 = arith.mulf %264, %262 : vector<2x32xf32>
    %266 = arith.mulf %254, %231 : vector<2x32xf32>
    %267 = arith.addf %265, %266 : vector<2x32xf32>
    %c6 = arith.constant 6 : index
    %c0_65 = arith.constant 0 : index
    %c0_66 = arith.constant 0 : index
    %268 = vector.load %arg28[%c6, %c0_65, %c0_66] : memref<8x2x32xf32, #tpu.memory_space<vmem>>, vector<1x2x32xf32>
    %269 = vector.shape_cast %268 : vector<1x2x32xf32> to vector<2x32xf32>
    %270 = vector.shape_cast %267 : vector<2x32xf32> to vector<1x2x32xf32>
    tpu.vector_store %arg28[%c6, %c0_65, %c0_66], %270 {strides = array<i32>} : memref<8x2x32xf32, #tpu.memory_space<vmem>>, vector<1x2x32xf32>,
    %271 = arith.truncf %267 : vector<2x32xf32> to vector<2x32xbf16>
    %cst_67 = arith.constant dense<0.000000e+00> : vector<2x96xf32>
    %272 = tpu.matmul %271, %27, %cst_67 {dimension_numbers = #tpu.dot_dimension_numbers<[1], [0], [0], [1], [0, 0, 1, 1], [], []>} : vector<2x32xbf16>, vector<32x96xbf16>, vector<2x96xf32> -> vector<2x96xf32>
    %273 = vector.extract_strided_slice %14 {offsets = [7, 0, 0], sizes = [1, 2, 32], strides = [1, 1, 1]} : vector<8x2x32xf32> to vector<1x2x32xf32>
    %274 = vector.shape_cast %273 : vector<1x2x32xf32> to vector<2x32xf32>
    %275 = vector.extract_strided_slice %272 {offsets = [0, 0], sizes = [2, 32], strides = [1, 1]} : vector<2x96xf32> to vector<2x32xf32>
    %276 = arith.addf %274, %275 : vector<2x32xf32>
    %277 = arith.negf %276 : vector<2x32xf32>
    %278 = math.exp %277 : vector<2x32xf32>
    %cst_68 = arith.constant 1.000000e+00 : f32
    %279 = vector.broadcast %cst_68 : f32 to vector<2x32xf32>
    %280 = arith.addf %279, %278 : vector<2x32xf32>
    %281 = arith.divf %279, %280 : vector<2x32xf32>
    %282 = vector.extract_strided_slice %20 {offsets = [7, 0, 0], sizes = [1, 2, 32], strides = [1, 1, 1]} : vector<8x2x32xf32> to vector<1x2x32xf32>
    %283 = vector.shape_cast %282 : vector<1x2x32xf32> to vector<2x32xf32>
    %284 = vector.extract_strided_slice %272 {offsets = [0, 32], sizes = [2, 32], strides = [1, 1]} : vector<2x96xf32> to vector<2x32xf32>
    %285 = arith.addf %283, %284 : vector<2x32xf32>
    %286 = arith.negf %285 : vector<2x32xf32>
    %287 = math.exp %286 : vector<2x32xf32>
    %cst_69 = arith.constant 1.000000e+00 : f32
    %288 = vector.broadcast %cst_69 : f32 to vector<2x32xf32>
    %289 = arith.addf %288, %287 : vector<2x32xf32>
    %290 = arith.divf %288, %289 : vector<2x32xf32>
    %291 = vector.extract_strided_slice %26 {offsets = [7, 0, 0], sizes = [1, 2, 32], strides = [1, 1, 1]} : vector<8x2x32xf32> to vector<1x2x32xf32>
    %292 = vector.shape_cast %291 : vector<1x2x32xf32> to vector<2x32xf32>
    %293 = vector.extract_strided_slice %272 {offsets = [0, 64], sizes = [2, 32], strides = [1, 1]} : vector<2x96xf32> to vector<2x32xf32>
    %294 = vector.broadcast %28 : vector<1x32xf32> to vector<2x32xf32>
    %295 = arith.addf %293, %294 : vector<2x32xf32>
    %296 = arith.mulf %281, %295 : vector<2x32xf32>
    %297 = arith.addf %292, %296 : vector<2x32xf32>
    %298 = math.tanh %297 : vector<2x32xf32>
    %cst_70 = arith.constant 1.000000e+00 : f32
    %299 = vector.broadcast %cst_70 : f32 to vector<2x32xf32>
    %300 = arith.subf %299, %290 : vector<2x32xf32>
    %301 = arith.mulf %300, %298 : vector<2x32xf32>
    %302 = arith.mulf %290, %267 : vector<2x32xf32>
    %303 = arith.addf %301, %302 : vector<2x32xf32>
    %c7 = arith.constant 7 : index
    %c0_71 = arith.constant 0 : index
    %c0_72 = arith.constant 0 : index
    %304 = vector.load %arg28[%c7, %c0_71, %c0_72] : memref<8x2x32xf32, #tpu.memory_space<vmem>>, vector<1x2x32xf32>
    %305 = vector.shape_cast %304 : vector<1x2x32xf32> to vector<2x32xf32>
    %306 = vector.shape_cast %303 : vector<2x32xf32> to vector<1x2x32xf32>
    tpu.vector_store %arg28[%c7, %c0_71, %c0_72], %306 {strides = array<i32>} : memref<8x2x32xf32, #tpu.memory_space<vmem>>, vector<1x2x32xf32>,
    %c0_73 = arith.constant 0 : index
    %c0_74 = arith.constant 0 : index
    %c0_75 = arith.constant 0 : index
    %307 = vector.load %arg28[%c0_73, %c0_74, %c0_75] : memref<8x2x32xf32, #tpu.memory_space<vmem>>, vector<8x2x32xf32>
    %c0_76 = arith.constant 0 : index
    %c0_77 = arith.constant 0 : index
    %c0_78 = arith.constant 0 : index
    %308 = vector.load %arg11[%c0_76, %c0_77, %c0_78] : memref<1x1x32xf32, #tpu.memory_space<vmem>>, vector<1x1x32xf32>
    %309 = vector.broadcast %308 : vector<1x1x32xf32> to vector<8x2x32xf32>
    %310 = arith.mulf %307, %309 : vector<8x2x32xf32>
    %cst_79 = arith.constant dense<0.000000e+00> : vector<8x2xf32>
    %311 = vector.multi_reduction <add>, %310, %cst_79 [2] : vector<8x2x32xf32> to vector<8x2xf32>
    %312 = vector.shape_cast %311 : vector<8x2xf32> to vector<8x2x1xf32>
    %313 = arith.addf %312, %6 : vector<8x2x1xf32>
    %cst_80 = arith.constant dense<0xFF800000> : vector<2x1xf32>
    %314 = vector.multi_reduction <maximumf>, %313, %cst_80 [0] : vector<8x2x1xf32> to vector<2x1xf32>
    %315 = vector.shape_cast %314 : vector<2x1xf32> to vector<1x2x1xf32>
    %316 = vector.broadcast %315 : vector<1x2x1xf32> to vector<8x2x1xf32>
    %317 = arith.subf %313, %316 : vector<8x2x1xf32>
    %318 = math.exp %317 : vector<8x2x1xf32>
    %cst_81 = arith.constant dense<0.000000e+00> : vector<2x1xf32>
    %319 = vector.multi_reduction <add>, %318, %cst_81 [0] : vector<8x2x1xf32> to vector<2x1xf32>
    %320 = vector.shape_cast %319 : vector<2x1xf32> to vector<1x2x1xf32>
    %cst_82 = arith.constant 9.99999968E-21 : f32
    %321 = vector.broadcast %cst_82 : f32 to vector<1x2x1xf32>
    %322 = arith.addf %320, %321 : vector<1x2x1xf32>
    %323 = tpu.reciprocal %322 {approx = true} : vector<1x2x1xf32> -> vector<1x2x1xf32>
    %324 = vector.broadcast %323 : vector<1x2x1xf32> to vector<8x2x1xf32>
    %325 = arith.mulf %318, %324 : vector<8x2x1xf32>
    %326 = vector.broadcast %325 : vector<8x2x1xf32> to vector<8x2x32xf32>
    %327 = arith.mulf %326, %307 : vector<8x2x32xf32>
    %cst_83 = arith.constant dense<0.000000e+00> : vector<2x32xf32>
    %328 = vector.multi_reduction <add>, %327, %cst_83 [0] : vector<8x2x32xf32> to vector<2x32xf32>
    %c0_84 = arith.constant 0 : index
    %c0_85 = arith.constant 0 : index
    %c0_86 = arith.constant 0 : index
    %329 = vector.load %arg13[%c0_84, %c0_85, %c0_86] : memref<8x2x12xbf16, #tpu.memory_space<vmem>>, vector<8x2x12xbf16>
    %330 = vector.shape_cast %329 : vector<8x2x12xbf16> to vector<16x12xbf16>
    %c0_87 = arith.constant 0 : index
    %c0_88 = arith.constant 0 : index
    %331 = vector.load %arg14[%c0_87, %c0_88] : memref<12x16xbf16, #tpu.memory_space<vmem>>, vector<12x16xbf16>
    %cst_89 = arith.constant dense<0.000000e+00> : vector<16x16xf32>
    %332 = tpu.matmul %330, %331, %cst_89 {dimension_numbers = #tpu.dot_dimension_numbers<[1], [0], [0], [1], [0, 0, 1, 1], [], []>} : vector<16x12xbf16>, vector<12x16xbf16>, vector<16x16xf32> -> vector<16x16xf32>
    %c0_90 = arith.constant 0 : index
    %c0_91 = arith.constant 0 : index
    %333 = vector.load %arg18[%c0_90, %c0_91] : memref<1x16xf32, #tpu.memory_space<vmem>>, vector<1x16xf32>
    %334 = vector.broadcast %333 : vector<1x16xf32> to vector<16x16xf32>
    %335 = arith.addf %332, %334 : vector<16x16xf32>
    %336 = vector.shape_cast %335 : vector<16x16xf32> to vector<8x2x16xf32>
    %c0_92 = arith.constant 0 : index
    %c0_93 = arith.constant 0 : index
    %337 = vector.load %arg15[%c0_92, %c0_93] : memref<12x16xbf16, #tpu.memory_space<vmem>>, vector<12x16xbf16>
    %cst_94 = arith.constant dense<0.000000e+00> : vector<16x16xf32>
    %338 = tpu.matmul %330, %337, %cst_94 {dimension_numbers = #tpu.dot_dimension_numbers<[1], [0], [0], [1], [0, 0, 1, 1], [], []>} : vector<16x12xbf16>, vector<12x16xbf16>, vector<16x16xf32> -> vector<16x16xf32>
    %c0_95 = arith.constant 0 : index
    %c0_96 = arith.constant 0 : index
    %339 = vector.load %arg19[%c0_95, %c0_96] : memref<1x16xf32, #tpu.memory_space<vmem>>, vector<1x16xf32>
    %340 = vector.broadcast %339 : vector<1x16xf32> to vector<16x16xf32>
    %341 = arith.addf %338, %340 : vector<16x16xf32>
    %342 = vector.shape_cast %341 : vector<16x16xf32> to vector<8x2x16xf32>
    %c0_97 = arith.constant 0 : index
    %c0_98 = arith.constant 0 : index
    %343 = vector.load %arg16[%c0_97, %c0_98] : memref<12x16xbf16, #tpu.memory_space<vmem>>, vector<12x16xbf16>
    %cst_99 = arith.constant dense<0.000000e+00> : vector<16x16xf32>
    %344 = tpu.matmul %330, %343, %cst_99 {dimension_numbers = #tpu.dot_dimension_numbers<[1], [0], [0], [1], [0, 0, 1, 1], [], []>} : vector<16x12xbf16>, vector<12x16xbf16>, vector<16x16xf32> -> vector<16x16xf32>
    %c0_100 = arith.constant 0 : index
    %c0_101 = arith.constant 0 : index
    %345 = vector.load %arg20[%c0_100, %c0_101] : memref<1x16xf32, #tpu.memory_space<vmem>>, vector<1x16xf32>
    %346 = vector.broadcast %345 : vector<1x16xf32> to vector<16x16xf32>
    %347 = arith.addf %344, %346 : vector<16x16xf32>
    %348 = vector.shape_cast %347 : vector<16x16xf32> to vector<8x2x16xf32>
    %c0_102 = arith.constant 0 : index
    %c0_103 = arith.constant 0 : index
    %349 = vector.load %arg17[%c0_102, %c0_103] : memref<16x48xbf16, #tpu.memory_space<vmem>>, vector<16x48xbf16>
    %c0_104 = arith.constant 0 : index
    %c0_105 = arith.constant 0 : index
    %350 = vector.load %arg21[%c0_104, %c0_105] : memref<1x16xf32, #tpu.memory_space<vmem>>, vector<1x16xf32>
    %351 = vector.extract_strided_slice %336 {offsets = [0, 0, 0], sizes = [1, 2, 16], strides = [1, 1, 1]} : vector<8x2x16xf32> to vector<1x2x16xf32>
    %352 = vector.shape_cast %351 : vector<1x2x16xf32> to vector<2x16xf32>
    %353 = arith.negf %352 : vector<2x16xf32>
    %354 = math.exp %353 : vector<2x16xf32>
    %cst_106 = arith.constant 1.000000e+00 : f32
    %355 = vector.broadcast %cst_106 : f32 to vector<2x16xf32>
    %356 = arith.addf %355, %354 : vector<2x16xf32>
    %357 = arith.divf %355, %356 : vector<2x16xf32>
    %358 = vector.extract_strided_slice %342 {offsets = [0, 0, 0], sizes = [1, 2, 16], strides = [1, 1, 1]} : vector<8x2x16xf32> to vector<1x2x16xf32>
    %359 = vector.shape_cast %358 : vector<1x2x16xf32> to vector<2x16xf32>
    %360 = arith.negf %359 : vector<2x16xf32>
    %361 = math.exp %360 : vector<2x16xf32>
    %cst_107 = arith.constant 1.000000e+00 : f32
    %362 = vector.broadcast %cst_107 : f32 to vector<2x16xf32>
    %363 = arith.addf %362, %361 : vector<2x16xf32>
    %364 = arith.divf %362, %363 : vector<2x16xf32>
    %365 = vector.extract_strided_slice %348 {offsets = [0, 0, 0], sizes = [1, 2, 16], strides = [1, 1, 1]} : vector<8x2x16xf32> to vector<1x2x16xf32>
    %366 = vector.shape_cast %365 : vector<1x2x16xf32> to vector<2x16xf32>
    %367 = vector.broadcast %350 : vector<1x16xf32> to vector<2x16xf32>
    %368 = arith.mulf %357, %367 : vector<2x16xf32>
    %369 = arith.addf %366, %368 : vector<2x16xf32>
    %370 = math.tanh %369 : vector<2x16xf32>
    %cst_108 = arith.constant 1.000000e+00 : f32
    %371 = vector.broadcast %cst_108 : f32 to vector<2x16xf32>
    %372 = arith.subf %371, %364 : vector<2x16xf32>
    %373 = arith.mulf %372, %370 : vector<2x16xf32>
    %c0_109 = arith.constant 0 : index
    %c0_110 = arith.constant 0 : index
    %c0_111 = arith.constant 0 : index
    %374 = vector.load %arg29[%c0_109, %c0_110, %c0_111] : memref<8x2x16xf32, #tpu.memory_space<vmem>>, vector<1x2x16xf32>
    %375 = vector.shape_cast %374 : vector<1x2x16xf32> to vector<2x16xf32>
    %376 = vector.shape_cast %373 : vector<2x16xf32> to vector<1x2x16xf32>
    tpu.vector_store %arg29[%c0_109, %c0_110, %c0_111], %376 {strides = array<i32>} : memref<8x2x16xf32, #tpu.memory_space<vmem>>, vector<1x2x16xf32>,
    %377 = arith.truncf %373 : vector<2x16xf32> to vector<2x16xbf16>
    %cst_112 = arith.constant dense<0.000000e+00> : vector<2x48xf32>
    %378 = tpu.matmul %377, %349, %cst_112 {dimension_numbers = #tpu.dot_dimension_numbers<[1], [0], [0], [1], [0, 0, 1, 1], [], []>} : vector<2x16xbf16>, vector<16x48xbf16>, vector<2x48xf32> -> vector<2x48xf32>
    %379 = vector.extract_strided_slice %336 {offsets = [1, 0, 0], sizes = [1, 2, 16], strides = [1, 1, 1]} : vector<8x2x16xf32> to vector<1x2x16xf32>
    %380 = vector.shape_cast %379 : vector<1x2x16xf32> to vector<2x16xf32>
    %381 = vector.extract_strided_slice %378 {offsets = [0, 0], sizes = [2, 16], strides = [1, 1]} : vector<2x48xf32> to vector<2x16xf32>
    %382 = arith.addf %380, %381 : vector<2x16xf32>
    %383 = arith.negf %382 : vector<2x16xf32>
    %384 = math.exp %383 : vector<2x16xf32>
    %cst_113 = arith.constant 1.000000e+00 : f32
    %385 = vector.broadcast %cst_113 : f32 to vector<2x16xf32>
    %386 = arith.addf %385, %384 : vector<2x16xf32>
    %387 = arith.divf %385, %386 : vector<2x16xf32>
    %388 = vector.extract_strided_slice %342 {offsets = [1, 0, 0], sizes = [1, 2, 16], strides = [1, 1, 1]} : vector<8x2x16xf32> to vector<1x2x16xf32>
    %389 = vector.shape_cast %388 : vector<1x2x16xf32> to vector<2x16xf32>
    %390 = vector.extract_strided_slice %378 {offsets = [0, 16], sizes = [2, 16], strides = [1, 1]} : vector<2x48xf32> to vector<2x16xf32>
    %391 = arith.addf %389, %390 : vector<2x16xf32>
    %392 = arith.negf %391 : vector<2x16xf32>
    %393 = math.exp %392 : vector<2x16xf32>
    %cst_114 = arith.constant 1.000000e+00 : f32
    %394 = vector.broadcast %cst_114 : f32 to vector<2x16xf32>
    %395 = arith.addf %394, %393 : vector<2x16xf32>
    %396 = arith.divf %394, %395 : vector<2x16xf32>
    %397 = vector.extract_strided_slice %348 {offsets = [1, 0, 0], sizes = [1, 2, 16], strides = [1, 1, 1]} : vector<8x2x16xf32> to vector<1x2x16xf32>
    %398 = vector.shape_cast %397 : vector<1x2x16xf32> to vector<2x16xf32>
    %399 = vector.extract_strided_slice %378 {offsets = [0, 32], sizes = [2, 16], strides = [1, 1]} : vector<2x48xf32> to vector<2x16xf32>
    %400 = vector.broadcast %350 : vector<1x16xf32> to vector<2x16xf32>
    %401 = arith.addf %399, %400 : vector<2x16xf32>
    %402 = arith.mulf %387, %401 : vector<2x16xf32>
    %403 = arith.addf %398, %402 : vector<2x16xf32>
    %404 = math.tanh %403 : vector<2x16xf32>
    %cst_115 = arith.constant 1.000000e+00 : f32
    %405 = vector.broadcast %cst_115 : f32 to vector<2x16xf32>
    %406 = arith.subf %405, %396 : vector<2x16xf32>
    %407 = arith.mulf %406, %404 : vector<2x16xf32>
    %408 = arith.mulf %396, %373 : vector<2x16xf32>
    %409 = arith.addf %407, %408 : vector<2x16xf32>
    %c1_116 = arith.constant 1 : index
    %c0_117 = arith.constant 0 : index
    %c0_118 = arith.constant 0 : index
    %410 = vector.load %arg29[%c1_116, %c0_117, %c0_118] : memref<8x2x16xf32, #tpu.memory_space<vmem>>, vector<1x2x16xf32>
    %411 = vector.shape_cast %410 : vector<1x2x16xf32> to vector<2x16xf32>
    %412 = vector.shape_cast %409 : vector<2x16xf32> to vector<1x2x16xf32>
    tpu.vector_store %arg29[%c1_116, %c0_117, %c0_118], %412 {strides = array<i32>} : memref<8x2x16xf32, #tpu.memory_space<vmem>>, vector<1x2x16xf32>,
    %413 = arith.truncf %409 : vector<2x16xf32> to vector<2x16xbf16>
    %cst_119 = arith.constant dense<0.000000e+00> : vector<2x48xf32>
    %414 = tpu.matmul %413, %349, %cst_119 {dimension_numbers = #tpu.dot_dimension_numbers<[1], [0], [0], [1], [0, 0, 1, 1], [], []>} : vector<2x16xbf16>, vector<16x48xbf16>, vector<2x48xf32> -> vector<2x48xf32>
    %415 = vector.extract_strided_slice %336 {offsets = [2, 0, 0], sizes = [1, 2, 16], strides = [1, 1, 1]} : vector<8x2x16xf32> to vector<1x2x16xf32>
    %416 = vector.shape_cast %415 : vector<1x2x16xf32> to vector<2x16xf32>
    %417 = vector.extract_strided_slice %414 {offsets = [0, 0], sizes = [2, 16], strides = [1, 1]} : vector<2x48xf32> to vector<2x16xf32>
    %418 = arith.addf %416, %417 : vector<2x16xf32>
    %419 = arith.negf %418 : vector<2x16xf32>
    %420 = math.exp %419 : vector<2x16xf32>
    %cst_120 = arith.constant 1.000000e+00 : f32
    %421 = vector.broadcast %cst_120 : f32 to vector<2x16xf32>
    %422 = arith.addf %421, %420 : vector<2x16xf32>
    %423 = arith.divf %421, %422 : vector<2x16xf32>
    %424 = vector.extract_strided_slice %342 {offsets = [2, 0, 0], sizes = [1, 2, 16], strides = [1, 1, 1]} : vector<8x2x16xf32> to vector<1x2x16xf32>
    %425 = vector.shape_cast %424 : vector<1x2x16xf32> to vector<2x16xf32>
    %426 = vector.extract_strided_slice %414 {offsets = [0, 16], sizes = [2, 16], strides = [1, 1]} : vector<2x48xf32> to vector<2x16xf32>
    %427 = arith.addf %425, %426 : vector<2x16xf32>
    %428 = arith.negf %427 : vector<2x16xf32>
    %429 = math.exp %428 : vector<2x16xf32>
    %cst_121 = arith.constant 1.000000e+00 : f32
    %430 = vector.broadcast %cst_121 : f32 to vector<2x16xf32>
    %431 = arith.addf %430, %429 : vector<2x16xf32>
    %432 = arith.divf %430, %431 : vector<2x16xf32>
    %433 = vector.extract_strided_slice %348 {offsets = [2, 0, 0], sizes = [1, 2, 16], strides = [1, 1, 1]} : vector<8x2x16xf32> to vector<1x2x16xf32>
    %434 = vector.shape_cast %433 : vector<1x2x16xf32> to vector<2x16xf32>
    %435 = vector.extract_strided_slice %414 {offsets = [0, 32], sizes = [2, 16], strides = [1, 1]} : vector<2x48xf32> to vector<2x16xf32>
    %436 = vector.broadcast %350 : vector<1x16xf32> to vector<2x16xf32>
    %437 = arith.addf %435, %436 : vector<2x16xf32>
    %438 = arith.mulf %423, %437 : vector<2x16xf32>
    %439 = arith.addf %434, %438 : vector<2x16xf32>
    %440 = math.tanh %439 : vector<2x16xf32>
    %cst_122 = arith.constant 1.000000e+00 : f32
    %441 = vector.broadcast %cst_122 : f32 to vector<2x16xf32>
    %442 = arith.subf %441, %432 : vector<2x16xf32>
    %443 = arith.mulf %442, %440 : vector<2x16xf32>
    %444 = arith.mulf %432, %409 : vector<2x16xf32>
    %445 = arith.addf %443, %444 : vector<2x16xf32>
    %c2_123 = arith.constant 2 : index
    %c0_124 = arith.constant 0 : index
    %c0_125 = arith.constant 0 : index
    %446 = vector.load %arg29[%c2_123, %c0_124, %c0_125] : memref<8x2x16xf32, #tpu.memory_space<vmem>>, vector<1x2x16xf32>
    %447 = vector.shape_cast %446 : vector<1x2x16xf32> to vector<2x16xf32>
    %448 = vector.shape_cast %445 : vector<2x16xf32> to vector<1x2x16xf32>
    tpu.vector_store %arg29[%c2_123, %c0_124, %c0_125], %448 {strides = array<i32>} : memref<8x2x16xf32, #tpu.memory_space<vmem>>, vector<1x2x16xf32>,
    %449 = arith.truncf %445 : vector<2x16xf32> to vector<2x16xbf16>
    %cst_126 = arith.constant dense<0.000000e+00> : vector<2x48xf32>
    %450 = tpu.matmul %449, %349, %cst_126 {dimension_numbers = #tpu.dot_dimension_numbers<[1], [0], [0], [1], [0, 0, 1, 1], [], []>} : vector<2x16xbf16>, vector<16x48xbf16>, vector<2x48xf32> -> vector<2x48xf32>
    %451 = vector.extract_strided_slice %336 {offsets = [3, 0, 0], sizes = [1, 2, 16], strides = [1, 1, 1]} : vector<8x2x16xf32> to vector<1x2x16xf32>
    %452 = vector.shape_cast %451 : vector<1x2x16xf32> to vector<2x16xf32>
    %453 = vector.extract_strided_slice %450 {offsets = [0, 0], sizes = [2, 16], strides = [1, 1]} : vector<2x48xf32> to vector<2x16xf32>
    %454 = arith.addf %452, %453 : vector<2x16xf32>
    %455 = arith.negf %454 : vector<2x16xf32>
    %456 = math.exp %455 : vector<2x16xf32>
    %cst_127 = arith.constant 1.000000e+00 : f32
    %457 = vector.broadcast %cst_127 : f32 to vector<2x16xf32>
    %458 = arith.addf %457, %456 : vector<2x16xf32>
    %459 = arith.divf %457, %458 : vector<2x16xf32>
    %460 = vector.extract_strided_slice %342 {offsets = [3, 0, 0], sizes = [1, 2, 16], strides = [1, 1, 1]} : vector<8x2x16xf32> to vector<1x2x16xf32>
    %461 = vector.shape_cast %460 : vector<1x2x16xf32> to vector<2x16xf32>
    %462 = vector.extract_strided_slice %450 {offsets = [0, 16], sizes = [2, 16], strides = [1, 1]} : vector<2x48xf32> to vector<2x16xf32>
    %463 = arith.addf %461, %462 : vector<2x16xf32>
    %464 = arith.negf %463 : vector<2x16xf32>
    %465 = math.exp %464 : vector<2x16xf32>
    %cst_128 = arith.constant 1.000000e+00 : f32
    %466 = vector.broadcast %cst_128 : f32 to vector<2x16xf32>
    %467 = arith.addf %466, %465 : vector<2x16xf32>
    %468 = arith.divf %466, %467 : vector<2x16xf32>
    %469 = vector.extract_strided_slice %348 {offsets = [3, 0, 0], sizes = [1, 2, 16], strides = [1, 1, 1]} : vector<8x2x16xf32> to vector<1x2x16xf32>
    %470 = vector.shape_cast %469 : vector<1x2x16xf32> to vector<2x16xf32>
    %471 = vector.extract_strided_slice %450 {offsets = [0, 32], sizes = [2, 16], strides = [1, 1]} : vector<2x48xf32> to vector<2x16xf32>
    %472 = vector.broadcast %350 : vector<1x16xf32> to vector<2x16xf32>
    %473 = arith.addf %471, %472 : vector<2x16xf32>
    %474 = arith.mulf %459, %473 : vector<2x16xf32>
    %475 = arith.addf %470, %474 : vector<2x16xf32>
    %476 = math.tanh %475 : vector<2x16xf32>
    %cst_129 = arith.constant 1.000000e+00 : f32
    %477 = vector.broadcast %cst_129 : f32 to vector<2x16xf32>
    %478 = arith.subf %477, %468 : vector<2x16xf32>
    %479 = arith.mulf %478, %476 : vector<2x16xf32>
    %480 = arith.mulf %468, %445 : vector<2x16xf32>
    %481 = arith.addf %479, %480 : vector<2x16xf32>
    %c3_130 = arith.constant 3 : index
    %c0_131 = arith.constant 0 : index
    %c0_132 = arith.constant 0 : index
    %482 = vector.load %arg29[%c3_130, %c0_131, %c0_132] : memref<8x2x16xf32, #tpu.memory_space<vmem>>, vector<1x2x16xf32>
    %483 = vector.shape_cast %482 : vector<1x2x16xf32> to vector<2x16xf32>
    %484 = vector.shape_cast %481 : vector<2x16xf32> to vector<1x2x16xf32>
    tpu.vector_store %arg29[%c3_130, %c0_131, %c0_132], %484 {strides = array<i32>} : memref<8x2x16xf32, #tpu.memory_space<vmem>>, vector<1x2x16xf32>,
    %485 = arith.truncf %481 : vector<2x16xf32> to vector<2x16xbf16>
    %cst_133 = arith.constant dense<0.000000e+00> : vector<2x48xf32>
    %486 = tpu.matmul %485, %349, %cst_133 {dimension_numbers = #tpu.dot_dimension_numbers<[1], [0], [0], [1], [0, 0, 1, 1], [], []>} : vector<2x16xbf16>, vector<16x48xbf16>, vector<2x48xf32> -> vector<2x48xf32>
    %487 = vector.extract_strided_slice %336 {offsets = [4, 0, 0], sizes = [1, 2, 16], strides = [1, 1, 1]} : vector<8x2x16xf32> to vector<1x2x16xf32>
    %488 = vector.shape_cast %487 : vector<1x2x16xf32> to vector<2x16xf32>
    %489 = vector.extract_strided_slice %486 {offsets = [0, 0], sizes = [2, 16], strides = [1, 1]} : vector<2x48xf32> to vector<2x16xf32>
    %490 = arith.addf %488, %489 : vector<2x16xf32>
    %491 = arith.negf %490 : vector<2x16xf32>
    %492 = math.exp %491 : vector<2x16xf32>
    %cst_134 = arith.constant 1.000000e+00 : f32
    %493 = vector.broadcast %cst_134 : f32 to vector<2x16xf32>
    %494 = arith.addf %493, %492 : vector<2x16xf32>
    %495 = arith.divf %493, %494 : vector<2x16xf32>
    %496 = vector.extract_strided_slice %342 {offsets = [4, 0, 0], sizes = [1, 2, 16], strides = [1, 1, 1]} : vector<8x2x16xf32> to vector<1x2x16xf32>
    %497 = vector.shape_cast %496 : vector<1x2x16xf32> to vector<2x16xf32>
    %498 = vector.extract_strided_slice %486 {offsets = [0, 16], sizes = [2, 16], strides = [1, 1]} : vector<2x48xf32> to vector<2x16xf32>
    %499 = arith.addf %497, %498 : vector<2x16xf32>
    %500 = arith.negf %499 : vector<2x16xf32>
    %501 = math.exp %500 : vector<2x16xf32>
    %cst_135 = arith.constant 1.000000e+00 : f32
    %502 = vector.broadcast %cst_135 : f32 to vector<2x16xf32>
    %503 = arith.addf %502, %501 : vector<2x16xf32>
    %504 = arith.divf %502, %503 : vector<2x16xf32>
    %505 = vector.extract_strided_slice %348 {offsets = [4, 0, 0], sizes = [1, 2, 16], strides = [1, 1, 1]} : vector<8x2x16xf32> to vector<1x2x16xf32>
    %506 = vector.shape_cast %505 : vector<1x2x16xf32> to vector<2x16xf32>
    %507 = vector.extract_strided_slice %486 {offsets = [0, 32], sizes = [2, 16], strides = [1, 1]} : vector<2x48xf32> to vector<2x16xf32>
    %508 = vector.broadcast %350 : vector<1x16xf32> to vector<2x16xf32>
    %509 = arith.addf %507, %508 : vector<2x16xf32>
    %510 = arith.mulf %495, %509 : vector<2x16xf32>
    %511 = arith.addf %506, %510 : vector<2x16xf32>
    %512 = math.tanh %511 : vector<2x16xf32>
    %cst_136 = arith.constant 1.000000e+00 : f32
    %513 = vector.broadcast %cst_136 : f32 to vector<2x16xf32>
    %514 = arith.subf %513, %504 : vector<2x16xf32>
    %515 = arith.mulf %514, %512 : vector<2x16xf32>
    %516 = arith.mulf %504, %481 : vector<2x16xf32>
    %517 = arith.addf %515, %516 : vector<2x16xf32>
    %c4_137 = arith.constant 4 : index
    %c0_138 = arith.constant 0 : index
    %c0_139 = arith.constant 0 : index
    %518 = vector.load %arg29[%c4_137, %c0_138, %c0_139] : memref<8x2x16xf32, #tpu.memory_space<vmem>>, vector<1x2x16xf32>
    %519 = vector.shape_cast %518 : vector<1x2x16xf32> to vector<2x16xf32>
    %520 = vector.shape_cast %517 : vector<2x16xf32> to vector<1x2x16xf32>
    tpu.vector_store %arg29[%c4_137, %c0_138, %c0_139], %520 {strides = array<i32>} : memref<8x2x16xf32, #tpu.memory_space<vmem>>, vector<1x2x16xf32>,
    %521 = arith.truncf %517 : vector<2x16xf32> to vector<2x16xbf16>
    %cst_140 = arith.constant dense<0.000000e+00> : vector<2x48xf32>
    %522 = tpu.matmul %521, %349, %cst_140 {dimension_numbers = #tpu.dot_dimension_numbers<[1], [0], [0], [1], [0, 0, 1, 1], [], []>} : vector<2x16xbf16>, vector<16x48xbf16>, vector<2x48xf32> -> vector<2x48xf32>
    %523 = vector.extract_strided_slice %336 {offsets = [5, 0, 0], sizes = [1, 2, 16], strides = [1, 1, 1]} : vector<8x2x16xf32> to vector<1x2x16xf32>
    %524 = vector.shape_cast %523 : vector<1x2x16xf32> to vector<2x16xf32>
    %525 = vector.extract_strided_slice %522 {offsets = [0, 0], sizes = [2, 16], strides = [1, 1]} : vector<2x48xf32> to vector<2x16xf32>
    %526 = arith.addf %524, %525 : vector<2x16xf32>
    %527 = arith.negf %526 : vector<2x16xf32>
    %528 = math.exp %527 : vector<2x16xf32>
    %cst_141 = arith.constant 1.000000e+00 : f32
    %529 = vector.broadcast %cst_141 : f32 to vector<2x16xf32>
    %530 = arith.addf %529, %528 : vector<2x16xf32>
    %531 = arith.divf %529, %530 : vector<2x16xf32>
    %532 = vector.extract_strided_slice %342 {offsets = [5, 0, 0], sizes = [1, 2, 16], strides = [1, 1, 1]} : vector<8x2x16xf32> to vector<1x2x16xf32>
    %533 = vector.shape_cast %532 : vector<1x2x16xf32> to vector<2x16xf32>
    %534 = vector.extract_strided_slice %522 {offsets = [0, 16], sizes = [2, 16], strides = [1, 1]} : vector<2x48xf32> to vector<2x16xf32>
    %535 = arith.addf %533, %534 : vector<2x16xf32>
    %536 = arith.negf %535 : vector<2x16xf32>
    %537 = math.exp %536 : vector<2x16xf32>
    %cst_142 = arith.constant 1.000000e+00 : f32
    %538 = vector.broadcast %cst_142 : f32 to vector<2x16xf32>
    %539 = arith.addf %538, %537 : vector<2x16xf32>
    %540 = arith.divf %538, %539 : vector<2x16xf32>
    %541 = vector.extract_strided_slice %348 {offsets = [5, 0, 0], sizes = [1, 2, 16], strides = [1, 1, 1]} : vector<8x2x16xf32> to vector<1x2x16xf32>
    %542 = vector.shape_cast %541 : vector<1x2x16xf32> to vector<2x16xf32>
    %543 = vector.extract_strided_slice %522 {offsets = [0, 32], sizes = [2, 16], strides = [1, 1]} : vector<2x48xf32> to vector<2x16xf32>
    %544 = vector.broadcast %350 : vector<1x16xf32> to vector<2x16xf32>
    %545 = arith.addf %543, %544 : vector<2x16xf32>
    %546 = arith.mulf %531, %545 : vector<2x16xf32>
    %547 = arith.addf %542, %546 : vector<2x16xf32>
    %548 = math.tanh %547 : vector<2x16xf32>
    %cst_143 = arith.constant 1.000000e+00 : f32
    %549 = vector.broadcast %cst_143 : f32 to vector<2x16xf32>
    %550 = arith.subf %549, %540 : vector<2x16xf32>
    %551 = arith.mulf %550, %548 : vector<2x16xf32>
    %552 = arith.mulf %540, %517 : vector<2x16xf32>
    %553 = arith.addf %551, %552 : vector<2x16xf32>
    %c5_144 = arith.constant 5 : index
    %c0_145 = arith.constant 0 : index
    %c0_146 = arith.constant 0 : index
    %554 = vector.load %arg29[%c5_144, %c0_145, %c0_146] : memref<8x2x16xf32, #tpu.memory_space<vmem>>, vector<1x2x16xf32>
    %555 = vector.shape_cast %554 : vector<1x2x16xf32> to vector<2x16xf32>
    %556 = vector.shape_cast %553 : vector<2x16xf32> to vector<1x2x16xf32>
    tpu.vector_store %arg29[%c5_144, %c0_145, %c0_146], %556 {strides = array<i32>} : memref<8x2x16xf32, #tpu.memory_space<vmem>>, vector<1x2x16xf32>,
    %557 = arith.truncf %553 : vector<2x16xf32> to vector<2x16xbf16>
    %cst_147 = arith.constant dense<0.000000e+00> : vector<2x48xf32>
    %558 = tpu.matmul %557, %349, %cst_147 {dimension_numbers = #tpu.dot_dimension_numbers<[1], [0], [0], [1], [0, 0, 1, 1], [], []>} : vector<2x16xbf16>, vector<16x48xbf16>, vector<2x48xf32> -> vector<2x48xf32>
    %559 = vector.extract_strided_slice %336 {offsets = [6, 0, 0], sizes = [1, 2, 16], strides = [1, 1, 1]} : vector<8x2x16xf32> to vector<1x2x16xf32>
    %560 = vector.shape_cast %559 : vector<1x2x16xf32> to vector<2x16xf32>
    %561 = vector.extract_strided_slice %558 {offsets = [0, 0], sizes = [2, 16], strides = [1, 1]} : vector<2x48xf32> to vector<2x16xf32>
    %562 = arith.addf %560, %561 : vector<2x16xf32>
    %563 = arith.negf %562 : vector<2x16xf32>
    %564 = math.exp %563 : vector<2x16xf32>
    %cst_148 = arith.constant 1.000000e+00 : f32
    %565 = vector.broadcast %cst_148 : f32 to vector<2x16xf32>
    %566 = arith.addf %565, %564 : vector<2x16xf32>
    %567 = arith.divf %565, %566 : vector<2x16xf32>
    %568 = vector.extract_strided_slice %342 {offsets = [6, 0, 0], sizes = [1, 2, 16], strides = [1, 1, 1]} : vector<8x2x16xf32> to vector<1x2x16xf32>
    %569 = vector.shape_cast %568 : vector<1x2x16xf32> to vector<2x16xf32>
    %570 = vector.extract_strided_slice %558 {offsets = [0, 16], sizes = [2, 16], strides = [1, 1]} : vector<2x48xf32> to vector<2x16xf32>
    %571 = arith.addf %569, %570 : vector<2x16xf32>
    %572 = arith.negf %571 : vector<2x16xf32>
    %573 = math.exp %572 : vector<2x16xf32>
    %cst_149 = arith.constant 1.000000e+00 : f32
    %574 = vector.broadcast %cst_149 : f32 to vector<2x16xf32>
    %575 = arith.addf %574, %573 : vector<2x16xf32>
    %576 = arith.divf %574, %575 : vector<2x16xf32>
    %577 = vector.extract_strided_slice %348 {offsets = [6, 0, 0], sizes = [1, 2, 16], strides = [1, 1, 1]} : vector<8x2x16xf32> to vector<1x2x16xf32>
    %578 = vector.shape_cast %577 : vector<1x2x16xf32> to vector<2x16xf32>
    %579 = vector.extract_strided_slice %558 {offsets = [0, 32], sizes = [2, 16], strides = [1, 1]} : vector<2x48xf32> to vector<2x16xf32>
    %580 = vector.broadcast %350 : vector<1x16xf32> to vector<2x16xf32>
    %581 = arith.addf %579, %580 : vector<2x16xf32>
    %582 = arith.mulf %567, %581 : vector<2x16xf32>
    %583 = arith.addf %578, %582 : vector<2x16xf32>
    %584 = math.tanh %583 : vector<2x16xf32>
    %cst_150 = arith.constant 1.000000e+00 : f32
    %585 = vector.broadcast %cst_150 : f32 to vector<2x16xf32>
    %586 = arith.subf %585, %576 : vector<2x16xf32>
    %587 = arith.mulf %586, %584 : vector<2x16xf32>
    %588 = arith.mulf %576, %553 : vector<2x16xf32>
    %589 = arith.addf %587, %588 : vector<2x16xf32>
    %c6_151 = arith.constant 6 : index
    %c0_152 = arith.constant 0 : index
    %c0_153 = arith.constant 0 : index
    %590 = vector.load %arg29[%c6_151, %c0_152, %c0_153] : memref<8x2x16xf32, #tpu.memory_space<vmem>>, vector<1x2x16xf32>
    %591 = vector.shape_cast %590 : vector<1x2x16xf32> to vector<2x16xf32>
    %592 = vector.shape_cast %589 : vector<2x16xf32> to vector<1x2x16xf32>
    tpu.vector_store %arg29[%c6_151, %c0_152, %c0_153], %592 {strides = array<i32>} : memref<8x2x16xf32, #tpu.memory_space<vmem>>, vector<1x2x16xf32>,
    %593 = arith.truncf %589 : vector<2x16xf32> to vector<2x16xbf16>
    %cst_154 = arith.constant dense<0.000000e+00> : vector<2x48xf32>
    %594 = tpu.matmul %593, %349, %cst_154 {dimension_numbers = #tpu.dot_dimension_numbers<[1], [0], [0], [1], [0, 0, 1, 1], [], []>} : vector<2x16xbf16>, vector<16x48xbf16>, vector<2x48xf32> -> vector<2x48xf32>
    %595 = vector.extract_strided_slice %336 {offsets = [7, 0, 0], sizes = [1, 2, 16], strides = [1, 1, 1]} : vector<8x2x16xf32> to vector<1x2x16xf32>
    %596 = vector.shape_cast %595 : vector<1x2x16xf32> to vector<2x16xf32>
    %597 = vector.extract_strided_slice %594 {offsets = [0, 0], sizes = [2, 16], strides = [1, 1]} : vector<2x48xf32> to vector<2x16xf32>
    %598 = arith.addf %596, %597 : vector<2x16xf32>
    %599 = arith.negf %598 : vector<2x16xf32>
    %600 = math.exp %599 : vector<2x16xf32>
    %cst_155 = arith.constant 1.000000e+00 : f32
    %601 = vector.broadcast %cst_155 : f32 to vector<2x16xf32>
    %602 = arith.addf %601, %600 : vector<2x16xf32>
    %603 = arith.divf %601, %602 : vector<2x16xf32>
    %604 = vector.extract_strided_slice %342 {offsets = [7, 0, 0], sizes = [1, 2, 16], strides = [1, 1, 1]} : vector<8x2x16xf32> to vector<1x2x16xf32>
    %605 = vector.shape_cast %604 : vector<1x2x16xf32> to vector<2x16xf32>
    %606 = vector.extract_strided_slice %594 {offsets = [0, 16], sizes = [2, 16], strides = [1, 1]} : vector<2x48xf32> to vector<2x16xf32>
    %607 = arith.addf %605, %606 : vector<2x16xf32>
    %608 = arith.negf %607 : vector<2x16xf32>
    %609 = math.exp %608 : vector<2x16xf32>
    %cst_156 = arith.constant 1.000000e+00 : f32
    %610 = vector.broadcast %cst_156 : f32 to vector<2x16xf32>
    %611 = arith.addf %610, %609 : vector<2x16xf32>
    %612 = arith.divf %610, %611 : vector<2x16xf32>
    %613 = vector.extract_strided_slice %348 {offsets = [7, 0, 0], sizes = [1, 2, 16], strides = [1, 1, 1]} : vector<8x2x16xf32> to vector<1x2x16xf32>
    %614 = vector.shape_cast %613 : vector<1x2x16xf32> to vector<2x16xf32>
    %615 = vector.extract_strided_slice %594 {offsets = [0, 32], sizes = [2, 16], strides = [1, 1]} : vector<2x48xf32> to vector<2x16xf32>
    %616 = vector.broadcast %350 : vector<1x16xf32> to vector<2x16xf32>
    %617 = arith.addf %615, %616 : vector<2x16xf32>
    %618 = arith.mulf %603, %617 : vector<2x16xf32>
    %619 = arith.addf %614, %618 : vector<2x16xf32>
    %620 = math.tanh %619 : vector<2x16xf32>
    %cst_157 = arith.constant 1.000000e+00 : f32
    %621 = vector.broadcast %cst_157 : f32 to vector<2x16xf32>
    %622 = arith.subf %621, %612 : vector<2x16xf32>
    %623 = arith.mulf %622, %620 : vector<2x16xf32>
    %624 = arith.mulf %612, %589 : vector<2x16xf32>
    %625 = arith.addf %623, %624 : vector<2x16xf32>
    %c7_158 = arith.constant 7 : index
    %c0_159 = arith.constant 0 : index
    %c0_160 = arith.constant 0 : index
    %626 = vector.load %arg29[%c7_158, %c0_159, %c0_160] : memref<8x2x16xf32, #tpu.memory_space<vmem>>, vector<1x2x16xf32>
    %627 = vector.shape_cast %626 : vector<1x2x16xf32> to vector<2x16xf32>
    %628 = vector.shape_cast %625 : vector<2x16xf32> to vector<1x2x16xf32>
    tpu.vector_store %arg29[%c7_158, %c0_159, %c0_160], %628 {strides = array<i32>} : memref<8x2x16xf32, #tpu.memory_space<vmem>>, vector<1x2x16xf32>,
    %c0_161 = arith.constant 0 : index
    %c0_162 = arith.constant 0 : index
    %c0_163 = arith.constant 0 : index
    %629 = vector.load %arg29[%c0_161, %c0_162, %c0_163] : memref<8x2x16xf32, #tpu.memory_space<vmem>>, vector<8x2x16xf32>
    %c0_164 = arith.constant 0 : index
    %c0_165 = arith.constant 0 : index
    %c0_166 = arith.constant 0 : index
    %630 = vector.load %arg22[%c0_164, %c0_165, %c0_166] : memref<1x1x16xf32, #tpu.memory_space<vmem>>, vector<1x1x16xf32>
    %631 = vector.broadcast %630 : vector<1x1x16xf32> to vector<8x2x16xf32>
    %632 = arith.mulf %629, %631 : vector<8x2x16xf32>
    %cst_167 = arith.constant dense<0.000000e+00> : vector<8x2xf32>
    %633 = vector.multi_reduction <add>, %632, %cst_167 [2] : vector<8x2x16xf32> to vector<8x2xf32>
    %634 = vector.shape_cast %633 : vector<8x2xf32> to vector<8x2x1xf32>
    %635 = arith.addf %634, %6 : vector<8x2x1xf32>
    %cst_168 = arith.constant dense<0xFF800000> : vector<2x1xf32>
    %636 = vector.multi_reduction <maximumf>, %635, %cst_168 [0] : vector<8x2x1xf32> to vector<2x1xf32>
    %637 = vector.shape_cast %636 : vector<2x1xf32> to vector<1x2x1xf32>
    %638 = vector.broadcast %637 : vector<1x2x1xf32> to vector<8x2x1xf32>
    %639 = arith.subf %635, %638 : vector<8x2x1xf32>
    %640 = math.exp %639 : vector<8x2x1xf32>
    %cst_169 = arith.constant dense<0.000000e+00> : vector<2x1xf32>
    %641 = vector.multi_reduction <add>, %640, %cst_169 [0] : vector<8x2x1xf32> to vector<2x1xf32>
    %642 = vector.shape_cast %641 : vector<2x1xf32> to vector<1x2x1xf32>
    %cst_170 = arith.constant 9.99999968E-21 : f32
    %643 = vector.broadcast %cst_170 : f32 to vector<1x2x1xf32>
    %644 = arith.addf %642, %643 : vector<1x2x1xf32>
    %645 = tpu.reciprocal %644 {approx = true} : vector<1x2x1xf32> -> vector<1x2x1xf32>
    %646 = vector.broadcast %645 : vector<1x2x1xf32> to vector<8x2x1xf32>
    %647 = arith.mulf %640, %646 : vector<8x2x1xf32>
    %648 = vector.broadcast %647 : vector<8x2x1xf32> to vector<8x2x16xf32>
    %649 = arith.mulf %648, %629 : vector<8x2x16xf32>
    %cst_171 = arith.constant dense<0.000000e+00> : vector<2x16xf32>
    %650 = vector.multi_reduction <add>, %649, %cst_171 [0] : vector<8x2x16xf32> to vector<2x16xf32>
    %c0_172 = arith.constant 0 : index
    %c0_173 = arith.constant 0 : index
    %651 = vector.load %arg24[%c0_172, %c0_173] : memref<2x1xf32, #tpu.memory_space<vmem>>, vector<2x1xf32>
    %cst_174 = arith.constant 0.000000e+00 : f32
    %652 = vector.broadcast %cst_174 : f32 to vector<2x4xf32>
    %c0_175 = arith.constant 0 : index
    %c0_176 = arith.constant 0 : index
    %653 = vector.load %arg26[%c0_175, %c0_176] : memref<1x4xf32, #tpu.memory_space<vmem>>, vector<1x4xf32>
    %654 = vector.broadcast %653 : vector<1x4xf32> to vector<2x4xf32>
    %655 = arith.addf %652, %654 : vector<2x4xf32>
    %656 = arith.truncf %328 : vector<2x32xf32> to vector<2x32xbf16>
    %c0_177 = arith.constant 0 : index
    %c0_178 = arith.constant 0 : index
    %657 = vector.load %arg12[%c0_177, %c0_178] : memref<32x4xbf16, #tpu.memory_space<vmem>>, vector<32x4xbf16>
    %cst_179 = arith.constant dense<0.000000e+00> : vector<2x4xf32>
    %658 = tpu.matmul %656, %657, %cst_179 {dimension_numbers = #tpu.dot_dimension_numbers<[1], [0], [0], [1], [0, 0, 1, 1], [], []>} : vector<2x32xbf16>, vector<32x4xbf16>, vector<2x4xf32> -> vector<2x4xf32>
    %659 = arith.addf %655, %658 : vector<2x4xf32>
    %660 = arith.truncf %650 : vector<2x16xf32> to vector<2x16xbf16>
    %c0_180 = arith.constant 0 : index
    %c0_181 = arith.constant 0 : index
    %661 = vector.load %arg23[%c0_180, %c0_181] : memref<16x4xbf16, #tpu.memory_space<vmem>>, vector<16x4xbf16>
    %cst_182 = arith.constant dense<0.000000e+00> : vector<2x4xf32>
    %662 = tpu.matmul %660, %661, %cst_182 {dimension_numbers = #tpu.dot_dimension_numbers<[1], [0], [0], [1], [0, 0, 1, 1], [], []>} : vector<2x16xbf16>, vector<16x4xbf16>, vector<2x4xf32> -> vector<2x4xf32>
    %663 = arith.addf %659, %662 : vector<2x4xf32>
    %c0_183 = arith.constant 0 : index
    %c0_184 = arith.constant 0 : index
    %664 = vector.load %arg25[%c0_183, %c0_184] : memref<1x4xf32, #tpu.memory_space<vmem>>, vector<1x4xf32>
    %665 = vector.broadcast %651 : vector<2x1xf32> to vector<2x4xf32>
    %666 = vector.broadcast %664 : vector<1x4xf32> to vector<2x4xf32>
    %667 = arith.mulf %665, %666 : vector<2x4xf32>
    %668 = arith.addf %663, %667 : vector<2x4xf32>
    %c0_185 = arith.constant 0 : index
    %c0_186 = arith.constant 0 : index
    %669 = vector.load %arg27[%c0_185, %c0_186] : memref<2x4xf32, #tpu.memory_space<vmem>>, vector<2x4xf32>
    tpu.vector_store %arg27[%c0_185, %c0_186], %668 {strides = array<i32>} : memref<2x4xf32, #tpu.memory_space<vmem>>, vector<2x4xf32>,
    return
  }
  func.func @transform_0(%arg0: i32) -> (i32, i32, i32) {
    %c0_i32 = arith.constant 0 : i32
    %c0_i32_0 = arith.constant 0 : i32
    %c0_i32_1 = arith.constant 0 : i32
    return %c0_i32, %arg0, %c0_i32_0 : i32, i32, i32
  }
  func.func @transform_1(%arg0: i32) -> (i32, i32, i32) {
    %c0_i32 = arith.constant 0 : i32
    %c0_i32_0 = arith.constant 0 : i32
    %c0_i32_1 = arith.constant 0 : i32
    return %c0_i32, %arg0, %c0_i32_0 : i32, i32, i32
  }
  func.func @transform_2(%arg0: i32) -> (i32, i32) {
    %c0_i32 = arith.constant 0 : i32
    %c0_i32_0 = arith.constant 0 : i32
    %c0_i32_1 = arith.constant 0 : i32
    return %c0_i32, %c0_i32_0 : i32, i32
  }
  func.func @transform_3(%arg0: i32) -> (i32, i32) {
    %c0_i32 = arith.constant 0 : i32
    %c0_i32_0 = arith.constant 0 : i32
    %c0_i32_1 = arith.constant 0 : i32
    return %c0_i32, %c0_i32_0 : i32, i32
  }
  func.func @transform_4(%arg0: i32) -> (i32, i32) {
    %c0_i32 = arith.constant 0 : i32
    %c0_i32_0 = arith.constant 0 : i32
    %c0_i32_1 = arith.constant 0 : i32
    return %c0_i32, %c0_i32_0 : i32, i32
  }
  func.func @transform_5(%arg0: i32) -> (i32, i32) {
    %c0_i32 = arith.constant 0 : i32
    %c0_i32_0 = arith.constant 0 : i32
    %c0_i32_1 = arith.constant 0 : i32
    return %c0_i32, %c0_i32_0 : i32, i32
  }
  func.func @transform_6(%arg0: i32) -> (i32, i32) {
    %c0_i32 = arith.constant 0 : i32
    %c0_i32_0 = arith.constant 0 : i32
    %c0_i32_1 = arith.constant 0 : i32
    return %c0_i32, %c0_i32_0 : i32, i32
  }
  func.func @transform_7(%arg0: i32) -> (i32, i32) {
    %c0_i32 = arith.constant 0 : i32
    %c0_i32_0 = arith.constant 0 : i32
    %c0_i32_1 = arith.constant 0 : i32
    return %c0_i32, %c0_i32_0 : i32, i32
  }
  func.func @transform_8(%arg0: i32) -> (i32, i32) {
    %c0_i32 = arith.constant 0 : i32
    %c0_i32_0 = arith.constant 0 : i32
    %c0_i32_1 = arith.constant 0 : i32
    return %c0_i32, %c0_i32_0 : i32, i32
  }
  func.func @transform_9(%arg0: i32) -> (i32, i32) {
    %c0_i32 = arith.constant 0 : i32
    %c0_i32_0 = arith.constant 0 : i32
    %c0_i32_1 = arith.constant 0 : i32
    return %c0_i32, %c0_i32_0 : i32, i32
  }
  func.func @transform_10(%arg0: i32) -> (i32, i32, i32) {
    %c0_i32 = arith.constant 0 : i32
    %c0_i32_0 = arith.constant 0 : i32
    %c0_i32_1 = arith.constant 0 : i32
    %c0_i32_2 = arith.constant 0 : i32
    return %c0_i32, %c0_i32_0, %c0_i32_1 : i32, i32, i32
  }
  func.func @transform_11(%arg0: i32) -> (i32, i32) {
    %c0_i32 = arith.constant 0 : i32
    %c0_i32_0 = arith.constant 0 : i32
    %c0_i32_1 = arith.constant 0 : i32
    return %c0_i32, %c0_i32_0 : i32, i32
  }
  func.func @transform_12(%arg0: i32) -> (i32, i32, i32) {
    %c0_i32 = arith.constant 0 : i32
    %c0_i32_0 = arith.constant 0 : i32
    %c0_i32_1 = arith.constant 0 : i32
    return %c0_i32, %arg0, %c0_i32_0 : i32, i32, i32
  }
  func.func @transform_13(%arg0: i32) -> (i32, i32) {
    %c0_i32 = arith.constant 0 : i32
    %c0_i32_0 = arith.constant 0 : i32
    %c0_i32_1 = arith.constant 0 : i32
    return %c0_i32, %c0_i32_0 : i32, i32
  }
  func.func @transform_14(%arg0: i32) -> (i32, i32) {
    %c0_i32 = arith.constant 0 : i32
    %c0_i32_0 = arith.constant 0 : i32
    %c0_i32_1 = arith.constant 0 : i32
    return %c0_i32, %c0_i32_0 : i32, i32
  }
  func.func @transform_15(%arg0: i32) -> (i32, i32) {
    %c0_i32 = arith.constant 0 : i32
    %c0_i32_0 = arith.constant 0 : i32
    %c0_i32_1 = arith.constant 0 : i32
    return %c0_i32, %c0_i32_0 : i32, i32
  }
  func.func @transform_16(%arg0: i32) -> (i32, i32) {
    %c0_i32 = arith.constant 0 : i32
    %c0_i32_0 = arith.constant 0 : i32
    %c0_i32_1 = arith.constant 0 : i32
    return %c0_i32, %c0_i32_0 : i32, i32
  }
  func.func @transform_17(%arg0: i32) -> (i32, i32) {
    %c0_i32 = arith.constant 0 : i32
    %c0_i32_0 = arith.constant 0 : i32
    %c0_i32_1 = arith.constant 0 : i32
    return %c0_i32, %c0_i32_0 : i32, i32
  }
  func.func @transform_18(%arg0: i32) -> (i32, i32) {
    %c0_i32 = arith.constant 0 : i32
    %c0_i32_0 = arith.constant 0 : i32
    %c0_i32_1 = arith.constant 0 : i32
    return %c0_i32, %c0_i32_0 : i32, i32
  }
  func.func @transform_19(%arg0: i32) -> (i32, i32) {
    %c0_i32 = arith.constant 0 : i32
    %c0_i32_0 = arith.constant 0 : i32
    %c0_i32_1 = arith.constant 0 : i32
    return %c0_i32, %c0_i32_0 : i32, i32
  }
  func.func @transform_20(%arg0: i32) -> (i32, i32) {
    %c0_i32 = arith.constant 0 : i32
    %c0_i32_0 = arith.constant 0 : i32
    %c0_i32_1 = arith.constant 0 : i32
    return %c0_i32, %c0_i32_0 : i32, i32
  }
  func.func @transform_21(%arg0: i32) -> (i32, i32, i32) {
    %c0_i32 = arith.constant 0 : i32
    %c0_i32_0 = arith.constant 0 : i32
    %c0_i32_1 = arith.constant 0 : i32
    %c0_i32_2 = arith.constant 0 : i32
    return %c0_i32, %c0_i32_0, %c0_i32_1 : i32, i32, i32
  }
  func.func @transform_22(%arg0: i32) -> (i32, i32) {
    %c0_i32 = arith.constant 0 : i32
    %c0_i32_0 = arith.constant 0 : i32
    %c0_i32_1 = arith.constant 0 : i32
    return %c0_i32, %c0_i32_0 : i32, i32
  }
  func.func @transform_23(%arg0: i32) -> (i32, i32) {
    %c0_i32 = arith.constant 0 : i32
    %c0_i32_0 = arith.constant 0 : i32
    return %arg0, %c0_i32 : i32, i32
  }
  func.func @transform_24(%arg0: i32) -> (i32, i32) {
    %c0_i32 = arith.constant 0 : i32
    %c0_i32_0 = arith.constant 0 : i32
    %c0_i32_1 = arith.constant 0 : i32
    return %c0_i32, %c0_i32_0 : i32, i32
  }
  func.func @transform_25(%arg0: i32) -> (i32, i32) {
    %c0_i32 = arith.constant 0 : i32
    %c0_i32_0 = arith.constant 0 : i32
    %c0_i32_1 = arith.constant 0 : i32
    return %c0_i32, %c0_i32_0 : i32, i32
  }
  func.func @transform_26(%arg0: i32) -> (i32, i32) {
    %c0_i32 = arith.constant 0 : i32
    %c0_i32_0 = arith.constant 0 : i32
    return %arg0, %c0_i32 : i32, i32
  }
}

</mosaic_0001>

<llo_original>
// kernel: tpu_custom_call.1
$region0: #{tpu_custom_call.1}
  #allocation0 [shape = 'u32[]', space=smem, size = 0x4, offset = 0x4, fixed_abs, tag = 'smem constant byte address 0x4 - core index']
  #allocation1 [shape = 'u32[144,128]{1,0:T(1,128)}', space=vmem, size = 0x12000, scoped, tag = 'internal scratch']
  #allocation2 [shape = 'f32[8,2,32]{2,1,0:T(2,128)}', space=vmem, size = 0x2000, scoped, tag = 'scratch operand']
  #allocation3 [shape = 'f32[8,2,16]{2,1,0:T(2,128)}', space=vmem, size = 0x2000, scoped, tag = 'scratch operand']
  %s0 = inlined_call_operand.vmem [shape: s32[1,2,1], index: 0, kind: input, shape index: {}]
  %s1 = inlined_call_operand.vmem [shape: bf16[8,2,16], index: 1, kind: input, shape index: {}]
  %s2 = inlined_call_operand.vmem [shape: bf16[16,32], index: 2, kind: input, shape index: {}]
  %s3 = inlined_call_operand.hbm [shape: bf16[16,32], index: 3, kind: input, shape index: {}]
  %s4 = inlined_call_operand.vmem [shape: bf16[16,32], index: 4, kind: input, shape index: {}]
  %s5 = inlined_call_operand.vmem [shape: bf16[32,96], index: 5, kind: input, shape index: {}]
  %s6 = inlined_call_operand.hbm [shape: f32[1,32], index: 6, kind: input, shape index: {}]
  %s7 = inlined_call_operand.hbm [shape: f32[1,32], index: 7, kind: input, shape index: {}]
  %s8 = inlined_call_operand.hbm [shape: f32[1,32], index: 8, kind: input, shape index: {}]
  %s9 = inlined_call_operand.hbm [shape: f32[1,32], index: 9, kind: input, shape index: {}]
  %s10 = inlined_call_operand.hbm [shape: f32[1,1,32], index: 10, kind: input, shape index: {}]
  %s11 = inlined_call_operand.vmem [shape: bf16[32,4], index: 11, kind: input, shape index: {}]
  %s12 = inlined_call_operand.vmem [shape: bf16[8,2,12], index: 12, kind: input, shape index: {}]
  %s13 = inlined_call_operand.vmem [shape: bf16[12,16], index: 13, kind: input, shape index: {}]
  %s14 = inlined_call_operand.hbm [shape: bf16[12,16], index: 14, kind: input, shape index: {}]
  %s15 = inlined_call_operand.hbm [shape: bf16[12,16], index: 15, kind: input, shape index: {}]
  %s16 = inlined_call_operand.hbm [shape: bf16[16,48], index: 16, kind: input, shape index: {}]
  %s17 = inlined_call_operand.vmem [shape: f32[1,16], index: 17, kind: input, shape index: {}]
  %s18 = inlined_call_operand.vmem [shape: f32[1,16], index: 18, kind: input, shape index: {}]
  %s19 = inlined_call_operand.vmem [shape: f32[1,16], index: 19, kind: input, shape index: {}]
  %s20 = inlined_call_operand.vmem [shape: f32[1,16], index: 20, kind: input, shape index: {}]
  %s21 = inlined_call_operand.vmem [shape: f32[1,1,16], index: 21, kind: input, shape index: {}]
  %s22 = inlined_call_operand.vmem [shape: bf16[16,4], index: 22, kind: input, shape index: {}]
  %s23 = inlined_call_operand.vmem [shape: f32[2,1], index: 23, kind: input, shape index: {}]
  %s24 = inlined_call_operand.vmem [shape: f32[1,4], index: 24, kind: input, shape index: {}]
  %s25 = inlined_call_operand.vmem [shape: f32[1,4], index: 25, kind: input, shape index: {}]
  %s26 = inlined_call_operand.hbm [shape: f32[2,4], index: 26, kind: output, shape index: {}]
  %s27 = sld [smem:[#allocation0]]
  $region150: #{tpu_custom_call.1} parent=0
    _
  %s29 = ssub.s32 1, %s27
  %s30 = scalar_select 0, %s29, %s27
  $region1: #{tpu_custom_call.1} parent=0
    #allocation4 [shape = 'u8[4096]{0}', space=vmem, size = 0x1000, scoped, tag = 'input window, operand 3, single buffered']
    #allocation5 [shape = 's32[1]{0}', space=sflag, size = 0x4, scoped, tag = 'scoped memory for tpu_custom_call.1']
    #allocation6 [shape = 's32[1]{0}', space=sflag, size = 0x4, scoped, tag = 'scoped memory for tpu_custom_call.1']
    #allocation7 [shape = 'u8[512]{0}', space=vmem, size = 0x400, scoped, tag = 'input window, operand 6, single buffered']
    #allocation8 [shape = 's32[1]{0}', space=sflag, size = 0x4, scoped, tag = 'scoped memory for tpu_custom_call.1']
    #allocation9 [shape = 'u8[512]{0}', space=vmem, size = 0x400, scoped, tag = 'input window, operand 7, single buffered']
    #allocation10 [shape = 'u8[512]{0}', space=vmem, size = 0x400, scoped, tag = 'input window, operand 8, single buffered']
    #allocation11 [shape = 's32[1]{0}', space=sflag, size = 0x4, scoped, tag = 'scoped memory for tpu_custom_call.1']
    #allocation12 [shape = 'u8[512]{0}', space=vmem, size = 0x400, scoped, tag = 'input window, operand 9, single buffered']
    #allocation13 [shape = 'u8[512]{0}', space=vmem, size = 0x400, scoped, tag = 'input window, operand 10, single buffered']
    #allocation14 [shape = 's32[1]{0}', space=sflag, size = 0x4, scoped, tag = 'scoped memory for tpu_custom_call.1']
    #allocation15 [shape = 'u8[4096]{0}', space=vmem, size = 0x1000, scoped, tag = 'input window, operand 14, single buffered']
    #allocation16 [shape = 'u8[4096]{0}', space=vmem, size = 0x1000, scoped, tag = 'input window, operand 15, single buffered']
    #allocation17 [shape = 's32[1]{0}', space=sflag, size = 0x4, scoped, tag = 'scoped memory for tpu_custom_call.1']
    #allocation18 [shape = 'u8[4096]{0}', space=vmem, size = 0x1000, scoped, tag = 'input window, operand 16, single buffered']
    #allocation19 [shape = 'u8[1024]{0}', space=vmem, size = 0x400, scoped, tag = 'output window, operand 0, single buffered']
    %31 = vsyncpa [#allocation5], 0
    %32 = vsyncpa [#allocation8], 0
    %33 = vsyncpa [#allocation11], 0
    %34 = vsyncpa [#allocation14], 0
    %35 = vsyncpa [#allocation17], 0
    %36 = vsyncpa [#allocation6], 0
    // Predicated region
    $region2: #{tpu_custom_call.1} parent=1 // pred_check
      _
    $region3: #{tpu_custom_call.1} parent=1 // pred_check_branch
      %38 = sbr.rel (0) target = $region5
    $region4: #{tpu_custom_call.1} parent=1 // pred_region
      _
    $region5: #{tpu_custom_call.1} parent=1 // pred_fallthru
      _
    // Predicated region
    $region6: #{tpu_custom_call.1} parent=1 // pred_check
      _
    $region7: #{tpu_custom_call.1} parent=1 // pred_check_branch
      %40 = sbr.rel (0) target = $region9
    $region8: #{tpu_custom_call.1} parent=1 // pred_region
      _
    $region9: #{tpu_custom_call.1} parent=1 // pred_fallthru
      _
    // Predicated region
    $region10: #{tpu_custom_call.1} parent=1 // pred_check
      _
    $region11: #{tpu_custom_call.1} parent=1 // pred_check_branch
      %42 = sbr.rel (0) target = $region13
    $region12: #{tpu_custom_call.1} parent=1 // pred_region
      _
    $region13: #{tpu_custom_call.1} parent=1 // pred_fallthru
      _
    // Predicated region
    $region14: #{tpu_custom_call.1} parent=1 // pred_check
      _
    $region15: #{tpu_custom_call.1} parent=1 // pred_check_branch
      %44 = sbr.rel (0) target = $region17
    $region16: #{tpu_custom_call.1} parent=1 // pred_region
      %s46 = ssub.s32 128, 128
      %47 = vsyncadd [#allocation5], %s46
      %s48 = sshll.u32 [#allocation4], 4
      %s49 = int_to_ptr.vmem [resolvable:$true] %s48
      %54 = dma.hbm_to_vmem [thread:$0]  %s3, 128, %s49, [#allocation5], 64, 64, 4
    $region17: #{tpu_custom_call.1} parent=1 // pred_fallthru
      _
    // Predicated region
    $region18: #{tpu_custom_call.1} parent=1 // pred_check
      _
    $region19: #{tpu_custom_call.1} parent=1 // pred_check_branch
      %56 = sbr.rel (0) target = $region21
    $region20: #{tpu_custom_call.1} parent=1 // pred_region
      _
    $region21: #{tpu_custom_call.1} parent=1 // pred_fallthru
      _
    // Predicated region
    $region22: #{tpu_custom_call.1} parent=1 // pred_check
      _
    $region23: #{tpu_custom_call.1} parent=1 // pred_check_branch
      %58 = sbr.rel (0) target = $region25
    $region24: #{tpu_custom_call.1} parent=1 // pred_region
      _
    $region25: #{tpu_custom_call.1} parent=1 // pred_fallthru
      _
    // Predicated region
    $region26: #{tpu_custom_call.1} parent=1 // pred_check
      _
    $region27: #{tpu_custom_call.1} parent=1 // pred_check_branch
      %60 = sbr.rel (0) target = $region29
    $region28: #{tpu_custom_call.1} parent=1 // pred_region
      %s62 = ssub.s32 16, 16
      %63 = vsyncadd [#allocation8], %s62
      %s65 = sshll.u32 [#allocation7], 4
      %s66 = int_to_ptr.vmem [resolvable:$true] %s65
      %68 = dma.hbm_to_vmem [thread:$0]  %s6, 16, %s66, [#allocation8]
    $region29: #{tpu_custom_call.1} parent=1 // pred_fallthru
      _
    // Predicated region
    $region30: #{tpu_custom_call.1} parent=1 // pred_check
      _
    $region31: #{tpu_custom_call.1} parent=1 // pred_check_branch
      %70 = sbr.rel (0) target = $region33
    $region32: #{tpu_custom_call.1} parent=1 // pred_region
      %s72 = ssub.s32 16, 16
      %73 = vsyncadd [#allocation8], %s72
      %s75 = sshll.u32 [#allocation9], 4
      %s76 = int_to_ptr.vmem [resolvable:$true] %s75
      %78 = dma.hbm_to_vmem [thread:$0]  %s7, 16, %s76, [#allocation8]
    $region33: #{tpu_custom_call.1} parent=1 // pred_fallthru
      _
    // Predicated region
    $region34: #{tpu_custom_call.1} parent=1 // pred_check
      _
    $region35: #{tpu_custom_call.1} parent=1 // pred_check_branch
      %80 = sbr.rel (0) target = $region37
    $region36: #{tpu_custom_call.1} parent=1 // pred_region
      %s82 = ssub.s32 16, 16
      %83 = vsyncadd [#allocation11], %s82
      %s85 = sshll.u32 [#allocation10], 4
      %s86 = int_to_ptr.vmem [resolvable:$true] %s85
      %88 = dma.hbm_to_vmem [thread:$0]  %s8, 16, %s86, [#allocation11]
    $region37: #{tpu_custom_call.1} parent=1 // pred_fallthru
      _
    // Predicated region
    $region38: #{tpu_custom_call.1} parent=1 // pred_check
      _
    $region39: #{tpu_custom_call.1} parent=1 // pred_check_branch
      %90 = sbr.rel (0) target = $region41
    $region40: #{tpu_custom_call.1} parent=1 // pred_region
      %s92 = ssub.s32 16, 16
      %93 = vsyncadd [#allocation11], %s92
      %s95 = sshll.u32 [#allocation12], 4
      %s96 = int_to_ptr.vmem [resolvable:$true] %s95
      %98 = dma.hbm_to_vmem [thread:$0]  %s9, 16, %s96, [#allocation11]
    $region41: #{tpu_custom_call.1} parent=1 // pred_fallthru
      _
    // Predicated region
    $region42: #{tpu_custom_call.1} parent=1 // pred_check
      _
    $region43: #{tpu_custom_call.1} parent=1 // pred_check_branch
      %100 = sbr.rel (0) target = $region45
    $region44: #{tpu_custom_call.1} parent=1 // pred_region
      %s102 = ssub.s32 16, 16
      %103 = vsyncadd [#allocation14], %s102
      %s105 = sshll.u32 [#allocation13], 4
      %s106 = int_to_ptr.vmem [resolvable:$true] %s105
      %108 = dma.hbm_to_vmem [thread:$0]  %s10, 16, %s106, [#allocation14]
    $region45: #{tpu_custom_call.1} parent=1 // pred_fallthru
      _
    // Predicated region
    $region46: #{tpu_custom_call.1} parent=1 // pred_check
      _
    $region47: #{tpu_custom_call.1} parent=1 // pred_check_branch
      %110 = sbr.rel (0) target = $region49
    $region48: #{tpu_custom_call.1} parent=1 // pred_region
      _
    $region49: #{tpu_custom_call.1} parent=1 // pred_fallthru
      _
    // Predicated region
    $region50: #{tpu_custom_call.1} parent=1 // pred_check
      _
    $region51: #{tpu_custom_call.1} parent=1 // pred_check_branch
      %112 = sbr.rel (0) target = $region53
    $region52: #{tpu_custom_call.1} parent=1 // pred_region
      _
    $region53: #{tpu_custom_call.1} parent=1 // pred_fallthru
      _
    // Predicated region
    $region54: #{tpu_custom_call.1} parent=1 // pred_check
      _
    $region55: #{tpu_custom_call.1} parent=1 // pred_check_branch
      %114 = sbr.rel (0) target = $region57
    $region56: #{tpu_custom_call.1} parent=1 // pred_region
      _
    $region57: #{tpu_custom_call.1} parent=1 // pred_fallthru
      _
    // Predicated region
    $region58: #{tpu_custom_call.1} parent=1 // pred_check
      _
    $region59: #{tpu_custom_call.1} parent=1 // pred_check_branch
      %116 = sbr.rel (0) target = $region61
    $region60: #{tpu_custom_call.1} parent=1 // pred_region
      %s118 = ssub.s32 128, 128
      %119 = vsyncadd [#allocation14], %s118
      %s120 = sshll.u32 [#allocation15], 4
      %s121 = int_to_ptr.vmem [resolvable:$true] %s120
      %126 = dma.hbm_to_vmem [thread:$0]  %s14, 128, %s121, [#allocation14], 64, 64, 4
    $region61: #{tpu_custom_call.1} parent=1 // pred_fallthru
      _
    // Predicated region
    $region62: #{tpu_custom_call.1} parent=1 // pred_check
      _
    $region63: #{tpu_custom_call.1} parent=1 // pred_check_branch
      %128 = sbr.rel (0) target = $region65
    $region64: #{tpu_custom_call.1} parent=1 // pred_region
      %s130 = ssub.s32 128, 128
      %131 = vsyncadd [#allocation17], %s130
      %s132 = sshll.u32 [#allocation16], 4
      %s133 = int_to_ptr.vmem [resolvable:$true] %s132
      %138 = dma.hbm_to_vmem [thread:$0]  %s15, 128, %s133, [#allocation17], 64, 64, 4
    $region65: #{tpu_custom_call.1} parent=1 // pred_fallthru
      _
    // Predicated region
    $region66: #{tpu_custom_call.1} parent=1 // pred_check
      _
    $region67: #{tpu_custom_call.1} parent=1 // pred_check_branch
      %140 = sbr.rel (0) target = $region69
    $region68: #{tpu_custom_call.1} parent=1 // pred_region
      %s142 = ssub.s32 128, 128
      %143 = vsyncadd [#allocation17], %s142
      %s144 = sshll.u32 [#allocation18], 4
      %s145 = int_to_ptr.vmem [resolvable:$true] %s144
      %150 = dma.hbm_to_vmem [thread:$0]  %s16, 128, %s145, [#allocation17], 64, 64, 4
    $region69: #{tpu_custom_call.1} parent=1 // pred_fallthru
      _
    // Predicated region
    $region70: #{tpu_custom_call.1} parent=1 // pred_check
      _
    $region71: #{tpu_custom_call.1} parent=1 // pred_check_branch
      %152 = sbr.rel (0) target = $region73
    $region72: #{tpu_custom_call.1} parent=1 // pred_region
      _
    $region73: #{tpu_custom_call.1} parent=1 // pred_fallthru
      _
    // Predicated region
    $region74: #{tpu_custom_call.1} parent=1 // pred_check
      _
    $region75: #{tpu_custom_call.1} parent=1 // pred_check_branch
      %154 = sbr.rel (0) target = $region77
    $region76: #{tpu_custom_call.1} parent=1 // pred_region
      _
    $region77: #{tpu_custom_call.1} parent=1 // pred_fallthru
      _
    // Predicated region
    $region78: #{tpu_custom_call.1} parent=1 // pred_check
      _
    $region79: #{tpu_custom_call.1} parent=1 // pred_check_branch
      %156 = sbr.rel (0) target = $region81
    $region80: #{tpu_custom_call.1} parent=1 // pred_region
      _
    $region81: #{tpu_custom_call.1} parent=1 // pred_fallthru
      _
    // Predicated region
    $region82: #{tpu_custom_call.1} parent=1 // pred_check
      _
    $region83: #{tpu_custom_call.1} parent=1 // pred_check_branch
      %158 = sbr.rel (0) target = $region85
    $region84: #{tpu_custom_call.1} parent=1 // pred_region
      _
    $region85: #{tpu_custom_call.1} parent=1 // pred_fallthru
      _
    // Predicated region
    $region86: #{tpu_custom_call.1} parent=1 // pred_check
      _
    $region87: #{tpu_custom_call.1} parent=1 // pred_check_branch
      %160 = sbr.rel (0) target = $region89
    $region88: #{tpu_custom_call.1} parent=1 // pred_region
      _
    $region89: #{tpu_custom_call.1} parent=1 // pred_fallthru
      _
    // Predicated region
    $region90: #{tpu_custom_call.1} parent=1 // pred_check
      _
    $region91: #{tpu_custom_call.1} parent=1 // pred_check_branch
      %162 = sbr.rel (0) target = $region93
    $region92: #{tpu_custom_call.1} parent=1 // pred_region
      _
    $region93: #{tpu_custom_call.1} parent=1 // pred_fallthru
      _
    // Predicated region
    $region94: #{tpu_custom_call.1} parent=1 // pred_check
      _
    $region95: #{tpu_custom_call.1} parent=1 // pred_check_branch
      %164 = sbr.rel (0) target = $region97
    $region96: #{tpu_custom_call.1} parent=1 // pred_region
      _
    $region97: #{tpu_custom_call.1} parent=1 // pred_fallthru
      _
    // Predicated region
    $region98: #{tpu_custom_call.1} parent=1 // pred_check
      _
    $region99: #{tpu_custom_call.1} parent=1 // pred_check_branch
      %166 = sbr.rel (0) target = $region101
    $region100: #{tpu_custom_call.1} parent=1 // pred_region
      _
    $region101: #{tpu_custom_call.1} parent=1 // pred_fallthru
      _
    // Predicated region
    $region102: #{tpu_custom_call.1} parent=1 // pred_check
      _
    $region103: #{tpu_custom_call.1} parent=1 // pred_check_branch
      %168 = sbr.rel (0) target = $region105
    $region104: #{tpu_custom_call.1} parent=1 // pred_region
      _
    $region105: #{tpu_custom_call.1} parent=1 // pred_fallthru
      _
    // Predicated region
    $region106: #{tpu_custom_call.1} parent=1 // pred_check
      _
    $region107: #{tpu_custom_call.1} parent=1 // pred_check_branch
      %170 = sbr.rel (0) target = $region109
    $region108: #{tpu_custom_call.1} parent=1 // pred_region
      %171 = dma.done [#allocation5], 128
    $region109: #{tpu_custom_call.1} parent=1 // pred_fallthru
      _
    // Predicated region
    $region110: #{tpu_custom_call.1} parent=1 // pred_check
      _
    $region111: #{tpu_custom_call.1} parent=1 // pred_check_branch
      %173 = sbr.rel (0) target = $region113
    $region112: #{tpu_custom_call.1} parent=1 // pred_region
      %174 = dma.done [#allocation8], 16
    $region113: #{tpu_custom_call.1} parent=1 // pred_fallthru
      _
    // Predicated region
    $region114: #{tpu_custom_call.1} parent=1 // pred_check
      _
    $region115: #{tpu_custom_call.1} parent=1 // pred_check_branch
      %176 = sbr.rel (0) target = $region117
    $region116: #{tpu_custom_call.1} parent=1 // pred_region
      %177 = dma.done [#allocation8], 16
    $region117: #{tpu_custom_call.1} parent=1 // pred_fallthru
      _
    // Predicated region
    $region118: #{tpu_custom_call.1} parent=1 // pred_check
      _
    $region119: #{tpu_custom_call.1} parent=1 // pred_check_branch
      %179 = sbr.rel (0) target = $region121
    $region120: #{tpu_custom_call.1} parent=1 // pred_region
      %180 = dma.done [#allocation11], 16
    $region121: #{tpu_custom_call.1} parent=1 // pred_fallthru
      _
    // Predicated region
    $region122: #{tpu_custom_call.1} parent=1 // pred_check
      _
    $region123: #{tpu_custom_call.1} parent=1 // pred_check_branch
      %182 = sbr.rel (0) target = $region125
    $region124: #{tpu_custom_call.1} parent=1 // pred_region
      %183 = dma.done [#allocation11], 16
    $region125: #{tpu_custom_call.1} parent=1 // pred_fallthru
      _
    // Predicated region
    $region126: #{tpu_custom_call.1} parent=1 // pred_check
      _
    $region127: #{tpu_custom_call.1} parent=1 // pred_check_branch
      %185 = sbr.rel (0) target = $region129
    $region128: #{tpu_custom_call.1} parent=1 // pred_region
      %186 = dma.done [#allocation14], 16
    $region129: #{tpu_custom_call.1} parent=1 // pred_fallthru
      _
    // Predicated region
    $region130: #{tpu_custom_call.1} parent=1 // pred_check
      _
    $region131: #{tpu_custom_call.1} parent=1 // pred_check_branch
      %188 = sbr.rel (0) target = $region133
    $region132: #{tpu_custom_call.1} parent=1 // pred_region
      %189 = dma.done [#allocation14], 128
    $region133: #{tpu_custom_call.1} parent=1 // pred_fallthru
      _
    // Predicated region
    $region134: #{tpu_custom_call.1} parent=1 // pred_check
      _
    $region135: #{tpu_custom_call.1} parent=1 // pred_check_branch
      %191 = sbr.rel (0) target = $region137
    $region136: #{tpu_custom_call.1} parent=1 // pred_region
      %192 = dma.done [#allocation17], 128
    $region137: #{tpu_custom_call.1} parent=1 // pred_fallthru
      _
    // Predicated region
    $region138: #{tpu_custom_call.1} parent=1 // pred_check
      _
    $region139: #{tpu_custom_call.1} parent=1 // pred_check_branch
      %194 = sbr.rel (0) target = $region141
    $region140: #{tpu_custom_call.1} parent=1 // pred_region
      %195 = dma.done [#allocation17], 128
    $region141: #{tpu_custom_call.1} parent=1 // pred_fallthru
      _
    %v197 = vld [vmem:[%s0] sm:$0x3]
    %vm198 = vcmp.gt.s32.totalorder %v197, 0
    %vm199 = vcmp.gt.s32.totalorder %v197, 1
    %vm200 = vcmp.gt.s32.totalorder %v197, 2
    %vm201 = vcmp.gt.s32.totalorder %v197, 3
    %vm202 = vcmp.gt.s32.totalorder %v197, 4
    %vm203 = vcmp.gt.s32.totalorder %v197, 5
    %vm204 = vcmp.gt.s32.totalorder %v197, 6
    %vm205 = vcmp.gt.s32.totalorder %v197, 7
    %v206 = vsel %vm198, 0.0, -1e+30
    %v207 = vsel %vm199, 0.0, -1e+30
    %v208 = vsel %vm200, 0.0, -1e+30
    %v209 = vsel %vm201, 0.0, -1e+30
    %v210 = vsel %vm202, 0.0, -1e+30
    %v211 = vsel %vm203, 0.0, -1e+30
    %v212 = vsel %vm204, 0.0, -1e+30
    %v213 = vsel %vm205, 0.0, -1e+30
    %v214 = vld [vmem:[%s1] sm:$0x1]
    %v215 = vld [vmem:[%s1 + $0x1] sm:$0x1]
    %v216 = vld [vmem:[%s1 + $0x2] sm:$0x1]
    %v217 = vld [vmem:[%s1 + $0x3] sm:$0x1]
    %v218 = vld [vmem:[%s1 + $0x4] sm:$0x1]
    %v219 = vld [vmem:[%s1 + $0x5] sm:$0x1]
    %v220 = vld [vmem:[%s1 + $0x6] sm:$0x1]
    %v221 = vld [vmem:[%s1 + $0x7] sm:$0x1]
    %v222 = vld [vmem:[%s2] sm:$0xf]
    %v223 = vld [vmem:[%s2 + $0x4] sm:$0xf]
    %v224 = vld [vmem:[#allocation7] sm:$0x1]
    %v226 = vlaneseq
    %v227 = vshrl.u32 %v226, 7
    %v228 = vsub.s32 0, %v227
    %v229 = vrot.slane %v224, %v228
    %v239 = vcombine.low %v214, %v215
    %v240 = vcombine.low %v216, %v217
    %v241 = vcombine.low %v218, %v219
    %v242 = vcombine.low %v220, %v221
    %v244 = vunpack.c.l.s4 1966171168
    %v245 = vunpack.c.0.s8 %v244
    %v246 = vlaneseq
    %v247 = vshrl.u32 %v246, 7
    %v248 = vsub.s32 %v245, %v247
    %v249 = vrot.slane %v239, %v248
    %v251 = vunpack.c.l.s4 1966171168
    %v252 = vunpack.c.0.s8 %v251
    %v253 = vlaneseq
    %v254 = vshrl.u32 %v253, 7
    %v255 = vsub.s32 %v252, %v254
    %v256 = vrot.slane %v240, %v255
    %v258 = vunpack.c.l.s4 1966171168
    %v259 = vunpack.c.0.s8 %v258
    %v260 = vlaneseq
    %v261 = vshrl.u32 %v260, 7
    %v262 = vsub.s32 %v259, %v261
    %v263 = vrot.slane %v241, %v262
    %v265 = vunpack.c.l.s4 1966171168
    %v266 = vunpack.c.0.s8 %v265
    %v267 = vlaneseq
    %v268 = vshrl.u32 %v267, 7
    %v269 = vsub.s32 %v266, %v268
    %v270 = vrot.slane %v242, %v269
    %v271 = vcombine.low %v249, %v256
    %v272 = vcombine.low %v263, %v270
    %v274 = vunpack.c.l.s4 1966171168
    %v275 = vunpack.c.0.s8 %v274
    %v276 = vlaneseq
    %v277 = vshrl.u32 %v276, 7
    %v278 = vsub.s32 %v275, %v277
    %v279 = vrot.slane %v271, %v278
    %v281 = vunpack.c.l.s4 1966171168
    %v282 = vunpack.c.0.s8 %v281
    %v283 = vlaneseq
    %v284 = vshrl.u32 %v283, 7
    %v285 = vsub.s32 %v282, %v284
    %v286 = vrot.slane %v272, %v285
    %v287 = vcombine.low %v279, %v286
    %v290 = vunpack.c.l.b16 %v222
    %v291 = vunpack.c.l.b16 %v223
    %v292 = vpack.c.b16 %v291, %v290
    %vm294 = vcmask 130048
    %v296 = vsel %vm294, %v287, 0
    %298 = vmatprep.subr.bf16.mxu0 0
    %299 = vmatpush1.bf16.msra.mxu0 0
    %300 = vmatprep.subr.bf16.mxu0 0
    %301 = vmatpush1.bf16.msra.mxu0 0
    %302 = vmatprep.subr.bf16.mxu0 0
    %303 = vmatpush1.bf16.msra.mxu0 0
    %304 = vmatprep.subr.bf16.mxu0 0
    %305 = vmatpush1.bf16.msra.mxu0 0
    %306 = vmatprep.subr.bf16.mxu0 0
    %307 = vmatpush1.bf16.msra.mxu0 0
    %308 = vmatprep.subr.bf16.mxu0 0
    %309 = vmatpush1.bf16.msra.mxu0 0
    %310 = vmatprep.subr.bf16.mxu0 0
    %311 = vmatpush1.bf16.msra.mxu0 0
    %312 = vmatprep.subr.bf16.mxu0 0
    %313 = vmatpush1.bf16.msra.mxu0 %v292
    %314 = vmatprep.subr.bf16.mxu0 0
    %315 = vmatpush2.bf16.msra.mxu0 0
    %316 = vmatprep.subr.bf16.mxu0 0
    %317 = vmatpush2.bf16.msra.mxu0 0
    %318 = vmatprep.subr.bf16.mxu0 0
    %319 = vmatpush2.bf16.msra.mxu0 0
    %320 = vmatprep.subr.bf16.mxu0 0
    %321 = vmatpush2.bf16.msra.mxu0 0
    %322 = vmatprep.subr.bf16.mxu0 0
    %323 = vmatpush2.bf16.msra.mxu0 0
    %324 = vmatprep.subr.bf16.mxu0 0
    %325 = vmatpush2.bf16.msra.mxu0 0
    %326 = vmatprep.subr.bf16.mxu0 0
    %327 = vmatpush2.bf16.msra.mxu0 0
    %328 = vmatprep.subr.bf16.mxu0 0
    %329 = vmatpush2.bf16.msra.mxu0 0
    %330 = vmatprep.mubr.bf16.mxu0 0
    %331 = vmatmul.mubr.bf16.gmra.mxu0 %v296
    %v332 = vpop.f32.mrf.mxu0
    %v333 = vadd.f32 %v229, %v332
    %v334 = vpop.f32.mrf.mxu0
    %v335 = vpop.f32.mrf.mxu0
    %v336 = vadd.f32 %v229, %v335
    %v337 = vpop.f32.mrf.mxu0
    %338 = vdwg.mxu0
    %v341 = vcombine.high %v333, %v333
    %v343 = vunpack.c.l.s4 1983009808
    %v344 = vunpack.c.0.s8 %v343
    %v345 = vlaneseq
    %v346 = vshrl.u32 %v345, 7
    %v347 = vsub.s32 %v344, %v346
    %v348 = vrot.slane %v333, %v347
    %v350 = vunpack.c.l.s4 1983009808
    %v351 = vunpack.c.0.s8 %v350
    %v352 = vlaneseq
    %v353 = vshrl.u32 %v352, 7
    %v354 = vsub.s32 %v351, %v353
    %v355 = vrot.slane %v341, %v354
    %v356 = vcombine.high %v348, %v348
    %v357 = vcombine.high %v355, %v355
    %v358 = vcombine.high %v336, %v336
    %v360 = vunpack.c.l.s4 1983009808
    %v361 = vunpack.c.0.s8 %v360
    %v362 = vlaneseq
    %v363 = vshrl.u32 %v362, 7
    %v364 = vsub.s32 %v361, %v363
    %v365 = vrot.slane %v336, %v364
    %v367 = vunpack.c.l.s4 1983009808
    %v368 = vunpack.c.0.s8 %v367
    %v369 = vlaneseq
    %v370 = vshrl.u32 %v369, 7
    %v371 = vsub.s32 %v368, %v370
    %v372 = vrot.slane %v358, %v371
    %v373 = vcombine.high %v365, %v365
    %v374 = vcombine.high %v372, %v372
    %v383 = vld [vmem:[#allocation4] sm:$0xf]
    %v384 = vld [vmem:[#allocation4 + $0x4] sm:$0xf]
    %v385 = vld [vmem:[#allocation9] sm:$0x1]
    %v387 = vlaneseq
    %v388 = vshrl.u32 %v387, 7
    %v389 = vsub.s32 0, %v388
    %v390 = vrot.slane %v385, %v389
    %v394 = vunpack.c.l.b16 %v383
    %v395 = vunpack.c.l.b16 %v384
    %v396 = vpack.c.b16 %v395, %v394
    %398 = vmatprep.subr.bf16.mxu0 0
    %399 = vmatpush1.bf16.msra.mxu0 0
    %400 = vmatprep.subr.bf16.mxu0 0
    %401 = vmatpush1.bf16.msra.mxu0 0
    %402 = vmatprep.subr.bf16.mxu0 0
    %403 = vmatpush1.bf16.msra.mxu0 0
    %404 = vmatprep.subr.bf16.mxu0 0
    %405 = vmatpush1.bf16.msra.mxu0 0
    %406 = vmatprep.subr.bf16.mxu0 0
    %407 = vmatpush1.bf16.msra.mxu0 0
    %408 = vmatprep.subr.bf16.mxu0 0
    %409 = vmatpush1.bf16.msra.mxu0 0
    %410 = vmatprep.subr.bf16.mxu0 0
    %411 = vmatpush1.bf16.msra.mxu0 0
    %412 = vmatprep.subr.bf16.mxu0 0
    %413 = vmatpush1.bf16.msra.mxu0 %v396
    %414 = vmatprep.subr.bf16.mxu0 0
    %415 = vmatpush2.bf16.msra.mxu0 0
    %416 = vmatprep.subr.bf16.mxu0 0
    %417 = vmatpush2.bf16.msra.mxu0 0
    %418 = vmatprep.subr.bf16.mxu0 0
    %419 = vmatpush2.bf16.msra.mxu0 0
    %420 = vmatprep.subr.bf16.mxu0 0
    %421 = vmatpush2.bf16.msra.mxu0 0
    %422 = vmatprep.subr.bf16.mxu0 0
    %423 = vmatpush2.bf16.msra.mxu0 0
    %424 = vmatprep.subr.bf16.mxu0 0
    %425 = vmatpush2.bf16.msra.mxu0 0
    %426 = vmatprep.subr.bf16.mxu0 0
    %427 = vmatpush2.bf16.msra.mxu0 0
    %428 = vmatprep.subr.bf16.mxu0 0
    %429 = vmatpush2.bf16.msra.mxu0 0
    %430 = vmatprep.mubr.bf16.mxu0 0
    %431 = vmatmul.mubr.bf16.gmra.mxu0 %v296
    %v432 = vpop.f32.mrf.mxu0
    %v433 = vadd.f32 %v390, %v432
    %v434 = vpop.f32.mrf.mxu0
    %v435 = vpop.f32.mrf.mxu0
    %v436 = vadd.f32 %v390, %v435
    %v437 = vpop.f32.mrf.mxu0
    %438 = vdwg.mxu0
    %v441 = vcombine.high %v433, %v433
    %v443 = vunpack.c.l.s4 1983009808
    %v444 = vunpack.c.0.s8 %v443
    %v445 = vlaneseq
    %v446 = vshrl.u32 %v445, 7
    %v447 = vsub.s32 %v444, %v446
    %v448 = vrot.slane %v433, %v447
    %v450 = vunpack.c.l.s4 1983009808
    %v451 = vunpack.c.0.s8 %v450
    %v452 = vlaneseq
    %v453 = vshrl.u32 %v452, 7
    %v454 = vsub.s32 %v451, %v453
    %v455 = vrot.slane %v441, %v454
    %v456 = vcombine.high %v448, %v448
    %v457 = vcombine.high %v455, %v455
    %v458 = vcombine.high %v436, %v436
    %v460 = vunpack.c.l.s4 1983009808
    %v461 = vunpack.c.0.s8 %v460
    %v462 = vlaneseq
    %v463 = vshrl.u32 %v462, 7
    %v464 = vsub.s32 %v461, %v463
    %v465 = vrot.slane %v436, %v464
    %v467 = vunpack.c.l.s4 1983009808
    %v468 = vunpack.c.0.s8 %v467
    %v469 = vlaneseq
    %v470 = vshrl.u32 %v469, 7
    %v471 = vsub.s32 %v468, %v470
    %v472 = vrot.slane %v458, %v471
    %v473 = vcombine.high %v465, %v465
    %v474 = vcombine.high %v472, %v472
    %v483 = vld [vmem:[%s4] sm:$0xf]
    %v484 = vld [vmem:[%s4 + $0x4] sm:$0xf]
    %v485 = vld [vmem:[#allocation10] sm:$0x1]
    %v487 = vlaneseq
    %v488 = vshrl.u32 %v487, 7
    %v489 = vsub.s32 0, %v488
    %v490 = vrot.slane %v485, %v489
    %v494 = vunpack.c.l.b16 %v483
    %v495 = vunpack.c.l.b16 %v484
    %v496 = vpack.c.b16 %v495, %v494
    %498 = vmatprep.subr.bf16.mxu0 0
    %499 = vmatpush1.bf16.msra.mxu0 0
    %500 = vmatprep.subr.bf16.mxu0 0
    %501 = vmatpush1.bf16.msra.mxu0 0
    %502 = vmatprep.subr.bf16.mxu0 0
    %503 = vmatpush1.bf16.msra.mxu0 0
    %504 = vmatprep.subr.bf16.mxu0 0
    %505 = vmatpush1.bf16.msra.mxu0 0
    %506 = vmatprep.subr.bf16.mxu0 0
    %507 = vmatpush1.bf16.msra.mxu0 0
    %508 = vmatprep.subr.bf16.mxu0 0
    %509 = vmatpush1.bf16.msra.mxu0 0
    %510 = vmatprep.subr.bf16.mxu0 0
    %511 = vmatpush1.bf16.msra.mxu0 0
    %512 = vmatprep.subr.bf16.mxu0 0
    %513 = vmatpush1.bf16.msra.mxu0 %v496
    %514 = vmatprep.subr.bf16.mxu0 0
    %515 = vmatpush2.bf16.msra.mxu0 0
    %516 = vmatprep.subr.bf16.mxu0 0
    %517 = vmatpush2.bf16.msra.mxu0 0
    %518 = vmatprep.subr.bf16.mxu0 0
    %519 = vmatpush2.bf16.msra.mxu0 0
    %520 = vmatprep.subr.bf16.mxu0 0
    %521 = vmatpush2.bf16.msra.mxu0 0
    %522 = vmatprep.subr.bf16.mxu0 0
    %523 = vmatpush2.bf16.msra.mxu0 0
    %524 = vmatprep.subr.bf16.mxu0 0
    %525 = vmatpush2.bf16.msra.mxu0 0
    %526 = vmatprep.subr.bf16.mxu0 0
    %527 = vmatpush2.bf16.msra.mxu0 0
    %528 = vmatprep.subr.bf16.mxu0 0
    %529 = vmatpush2.bf16.msra.mxu0 0
    %530 = vmatprep.mubr.bf16.mxu0 0
    %531 = vmatmul.mubr.bf16.gmra.mxu0 %v296
    %v532 = vpop.f32.mrf.mxu0
    %v533 = vadd.f32 %v490, %v532
    %v534 = vpop.f32.mrf.mxu0
    %v535 = vpop.f32.mrf.mxu0
    %v536 = vadd.f32 %v490, %v535
    %v537 = vpop.f32.mrf.mxu0
    %538 = vdwg.mxu0
    %v541 = vcombine.high %v533, %v533
    %v543 = vunpack.c.l.s4 1983009808
    %v544 = vunpack.c.0.s8 %v543
    %v545 = vlaneseq
    %v546 = vshrl.u32 %v545, 7
    %v547 = vsub.s32 %v544, %v546
    %v548 = vrot.slane %v533, %v547
    %v550 = vunpack.c.l.s4 1983009808
    %v551 = vunpack.c.0.s8 %v550
    %v552 = vlaneseq
    %v553 = vshrl.u32 %v552, 7
    %v554 = vsub.s32 %v551, %v553
    %v555 = vrot.slane %v541, %v554
    %v556 = vcombine.high %v548, %v548
    %v557 = vcombine.high %v555, %v555
    %v558 = vcombine.high %v536, %v536
    %v560 = vunpack.c.l.s4 1983009808
    %v561 = vunpack.c.0.s8 %v560
    %v562 = vlaneseq
    %v563 = vshrl.u32 %v562, 7
    %v564 = vsub.s32 %v561, %v563
    %v565 = vrot.slane %v536, %v564
    %v567 = vunpack.c.l.s4 1983009808
    %v568 = vunpack.c.0.s8 %v567
    %v569 = vlaneseq
    %v570 = vshrl.u32 %v569, 7
    %v571 = vsub.s32 %v568, %v570
    %v572 = vrot.slane %v558, %v571
    %v573 = vcombine.high %v565, %v565
    %v574 = vcombine.high %v572, %v572
    %v583 = vld [vmem:[%s5] sm:$0xf]
    %v584 = vld [vmem:[%s5 + $0x4] sm:$0xf]
    %v585 = vld [vmem:[%s5 + $0x8] sm:$0xf]
    %v586 = vld [vmem:[%s5 + $0xc] sm:$0xf]
    %v587 = vld [vmem:[#allocation12] sm:$0x1]
    %v588 = vxor.u32 %v348, 2147483648
    %v589 = vmul.f32 %v588, 1.442695
    %v590 = vpow.pop %v589
    %v591 = vadd.f32 %v590, 1.0
    %v592 = vrcp.pop %v591
    %v593 = vmul.f32 1.0, %v592
    %v594 = vxor.u32 %v448, 2147483648
    %v595 = vmul.f32 %v594, 1.442695
    %v596 = vpow.pop %v595
    %v597 = vadd.f32 %v596, 1.0
    %v598 = vrcp.pop %v597
    %v599 = vmul.f32 1.0, %v598
    %v601 = vlaneseq
    %v602 = vshrl.u32 %v601, 7
    %v603 = vsub.s32 0, %v602
    %v604 = vrot.slane %v587, %v603
    %v606 = vmul.f32 %v593, %v604
    %v607 = vadd.f32 %v548, %v606
    %v608 = vtanh.pop %v607
    %v609 = vsub.f32 1.0, %v599
    %v610 = vmul.f32 %v609, %v608
    %vm611 = vcmask 254976
    %612 = vst.msk [vmem:[#allocation2] sm:$0x3] %vm611, %v610
    %v613 = vpack.c.bf16 %v610, %v610
    %v618 = vunpack.c.l.b16 %v583
    %v619 = vunpack.c.l.b16 %v584
    %v620 = vunpack.c.l.b16 %v585
    %v621 = vunpack.c.l.b16 %v586
    %v622 = vpack.c.b16 %v619, %v618
    %v623 = vpack.c.b16 %v621, %v620
    %vm626 = vcmask 261120
    %v628 = vsel %vm626, %v613, 0
    %630 = vmatprep.subr.bf16.mxu0 0
    %631 = vmatpush1.bf16.msra.mxu0 0
    %632 = vmatprep.subr.bf16.mxu0 0
    %633 = vmatpush1.bf16.msra.mxu0 0
    %634 = vmatprep.subr.bf16.mxu0 0
    %635 = vmatpush1.bf16.msra.mxu0 0
    %636 = vmatprep.subr.bf16.mxu0 0
    %637 = vmatpush1.bf16.msra.mxu0 0
    %638 = vmatprep.subr.bf16.mxu0 0
    %639 = vmatpush1.bf16.msra.mxu0 0
    %640 = vmatprep.subr.bf16.mxu0 0
    %641 = vmatpush1.bf16.msra.mxu0 0
    %642 = vmatprep.subr.bf16.mxu0 0
    %643 = vmatpush1.bf16.msra.mxu0 %v623
    %644 = vmatprep.subr.bf16.mxu0 0
    %645 = vmatpush1.bf16.msra.mxu0 %v622
    %646 = vmatprep.subr.bf16.mxu0 0
    %647 = vmatpush2.bf16.msra.mxu0 0
    %648 = vmatprep.subr.bf16.mxu0 0
    %649 = vmatpush2.bf16.msra.mxu0 0
    %650 = vmatprep.subr.bf16.mxu0 0
    %651 = vmatpush2.bf16.msra.mxu0 0
    %652 = vmatprep.subr.bf16.mxu0 0
    %653 = vmatpush2.bf16.msra.mxu0 0
    %654 = vmatprep.subr.bf16.mxu0 0
    %655 = vmatpush2.bf16.msra.mxu0 0
    %656 = vmatprep.subr.bf16.mxu0 0
    %657 = vmatpush2.bf16.msra.mxu0 0
    %658 = vmatprep.subr.bf16.mxu0 0
    %659 = vmatpush2.bf16.msra.mxu0 0
    %660 = vmatprep.subr.bf16.mxu0 0
    %661 = vmatpush2.bf16.msra.mxu0 0
    %662 = vmatprep.mubr.bf16.mxu0 0
    %663 = vmatmul.mubr.bf16.gmra.mxu0 %v628
    %v664 = vpop.f32.mrf.mxu0
    %v665 = vadd.f32 0.0, %v664
    %v666 = vpop.f32.mrf.mxu0
    %v667 = vpop.f32.mrf.mxu0
    %v668 = vpop.f32.mrf.mxu0
    %669 = vdwg.mxu0
    %v670 = vadd.f32 %v356, %v665
    %v671 = vxor.u32 %v670, 2147483648
    %v672 = vmul.f32 %v671, 1.442695
    %v673 = vpow.pop %v672
    %v674 = vadd.f32 %v673, 1.0
    %v675 = vrcp.pop %v674
    %v676 = vmul.f32 1.0, %v675
    %v679 = vunpack.c.l.s4 1983009808
    %v680 = vunpack.c.0.s8 %v679
    %v681 = vlaneseq
    %v682 = vshrl.u32 %v681, 7
    %v683 = vsub.s32 %v680, %v682
    %v684 = vrot.slane %v665, %v683
    %685 = vrot.lane.b32.xlu0 %v684, 96
    %v686 = vpop.permute.xlu0 %685
    %v688 = vadd.f32 %v456, %v686
    %v689 = vxor.u32 %v688, 2147483648
    %v690 = vmul.f32 %v689, 1.442695
    %v691 = vpow.pop %v690
    %v692 = vadd.f32 %v691, 1.0
    %v693 = vrcp.pop %v692
    %v694 = vmul.f32 1.0, %v693
    %695 = vrot.lane.b32.xlu0 %v604, 64
    %v696 = vpop.permute.xlu0 %695
    %v698 = vadd.f32 %v665, %v696
    %v701 = vunpack.c.l.s4 1983009808
    %v702 = vunpack.c.0.s8 %v701
    %v703 = vlaneseq
    %v704 = vshrl.u32 %v703, 7
    %v705 = vsub.s32 %v702, %v704
    %v706 = vrot.slane %v698, %v705
    %707 = vrot.lane.b32.xlu0 %v706, 64
    %v708 = vpop.permute.xlu0 %707
    %v710 = vmul.f32 %v676, %v708
    %v711 = vadd.f32 %v556, %v710
    %v712 = vtanh.pop %v711
    %v713 = vsub.f32 1.0, %v694
    %v714 = vmul.f32 %v713, %v712
    %v715 = vmul.f32 %v694, %v610
    %v716 = vadd.f32 %v714, %v715
    %s717 = scalar_lea.vmem [#allocation2], 2
    %718 = vst.msk [vmem:[%s717] sm:$0x3] %vm611, %v716
    %v719 = vpack.c.bf16 %v716, %v716
    %v721 = vsel %vm626, %v719, 0
    %723 = vmatprep.subr.bf16.mxu0 0
    %724 = vmatpush1.bf16.msra.mxu0 0
    %725 = vmatprep.subr.bf16.mxu0 0
    %726 = vmatpush1.bf16.msra.mxu0 0
    %727 = vmatprep.subr.bf16.mxu0 0
    %728 = vmatpush1.bf16.msra.mxu0 0
    %729 = vmatprep.subr.bf16.mxu0 0
    %730 = vmatpush1.bf16.msra.mxu0 0
    %731 = vmatprep.subr.bf16.mxu0 0
    %732 = vmatpush1.bf16.msra.mxu0 0
    %733 = vmatprep.subr.bf16.mxu0 0
    %734 = vmatpush1.bf16.msra.mxu0 0
    %735 = vmatprep.subr.bf16.mxu0 0
    %736 = vmatpush1.bf16.msra.mxu0 %v623
    %737 = vmatprep.subr.bf16.mxu0 0
    %738 = vmatpush1.bf16.msra.mxu0 %v622
    %739 = vmatprep.subr.bf16.mxu0 0
    %740 = vmatpush2.bf16.msra.mxu0 0
    %741 = vmatprep.subr.bf16.mxu0 0
    %742 = vmatpush2.bf16.msra.mxu0 0
    %743 = vmatprep.subr.bf16.mxu0 0
    %744 = vmatpush2.bf16.msra.mxu0 0
    %745 = vmatprep.subr.bf16.mxu0 0
    %746 = vmatpush2.bf16.msra.mxu0 0
    %747 = vmatprep.subr.bf16.mxu0 0
    %748 = vmatpush2.bf16.msra.mxu0 0
    %749 = vmatprep.subr.bf16.mxu0 0
    %750 = vmatpush2.bf16.msra.mxu0 0
    %751 = vmatprep.subr.bf16.mxu0 0
    %752 = vmatpush2.bf16.msra.mxu0 0
    %753 = vmatprep.subr.bf16.mxu0 0
    %754 = vmatpush2.bf16.msra.mxu0 0
    %755 = vmatprep.mubr.bf16.mxu0 0
    %756 = vmatmul.mubr.bf16.gmra.mxu0 %v721
    %v757 = vpop.f32.mrf.mxu0
    %v758 = vadd.f32 0.0, %v757
    %v759 = vpop.f32.mrf.mxu0
    %v760 = vpop.f32.mrf.mxu0
    %v761 = vpop.f32.mrf.mxu0
    %762 = vdwg.mxu0
    %v763 = vadd.f32 %v355, %v758
    %v764 = vxor.u32 %v763, 2147483648
    %v765 = vmul.f32 %v764, 1.442695
    %v766 = vpow.pop %v765
    %v767 = vadd.f32 %v766, 1.0
    %v768 = vrcp.pop %v767
    %v769 = vmul.f32 1.0, %v768
    %v772 = vunpack.c.l.s4 1983009808
    %v773 = vunpack.c.0.s8 %v772
    %v774 = vlaneseq
    %v775 = vshrl.u32 %v774, 7
    %v776 = vsub.s32 %v773, %v775
    %v777 = vrot.slane %v758, %v776
    %778 = vrot.lane.b32.xlu0 %v777, 96
    %v779 = vpop.permute.xlu0 %778
    %v781 = vadd.f32 %v455, %v779
    %v782 = vxor.u32 %v781, 2147483648
    %v783 = vmul.f32 %v782, 1.442695
    %v784 = vpow.pop %v783
    %v785 = vadd.f32 %v784, 1.0
    %v786 = vrcp.pop %v785
    %v787 = vmul.f32 1.0, %v786
    %v788 = vadd.f32 %v758, %v696
    %v791 = vunpack.c.l.s4 1983009808
    %v792 = vunpack.c.0.s8 %v791
    %v793 = vlaneseq
    %v794 = vshrl.u32 %v793, 7
    %v795 = vsub.s32 %v792, %v794
    %v796 = vrot.slane %v788, %v795
    %797 = vrot.lane.b32.xlu0 %v796, 64
    %v798 = vpop.permute.xlu0 %797
    %v800 = vmul.f32 %v769, %v798
    %v801 = vadd.f32 %v555, %v800
    %v802 = vtanh.pop %v801
    %v803 = vsub.f32 1.0, %v787
    %v804 = vmul.f32 %v803, %v802
    %v805 = vmul.f32 %v787, %v716
    %v806 = vadd.f32 %v804, %v805
    %s807 = scalar_lea.vmem [#allocation2], 4
    %808 = vst.msk [vmem:[%s807] sm:$0x3] %vm611, %v806
    %v809 = vpack.c.bf16 %v806, %v806
    %v811 = vsel %vm626, %v809, 0
    %813 = vmatprep.subr.bf16.mxu0 0
    %814 = vmatpush1.bf16.msra.mxu0 0
    %815 = vmatprep.subr.bf16.mxu0 0
    %816 = vmatpush1.bf16.msra.mxu0 0
    %817 = vmatprep.subr.bf16.mxu0 0
    %818 = vmatpush1.bf16.msra.mxu0 0
    %819 = vmatprep.subr.bf16.mxu0 0
    %820 = vmatpush1.bf16.msra.mxu0 0
    %821 = vmatprep.subr.bf16.mxu0 0
    %822 = vmatpush1.bf16.msra.mxu0 0
    %823 = vmatprep.subr.bf16.mxu0 0
    %824 = vmatpush1.bf16.msra.mxu0 0
    %825 = vmatprep.subr.bf16.mxu0 0
    %826 = vmatpush1.bf16.msra.mxu0 %v623
    %827 = vmatprep.subr.bf16.mxu0 0
    %828 = vmatpush1.bf16.msra.mxu0 %v622
    %829 = vmatprep.subr.bf16.mxu0 0
    %830 = vmatpush2.bf16.msra.mxu0 0
    %831 = vmatprep.subr.bf16.mxu0 0
    %832 = vmatpush2.bf16.msra.mxu0 0
    %833 = vmatprep.subr.bf16.mxu0 0
    %834 = vmatpush2.bf16.msra.mxu0 0
    %835 = vmatprep.subr.bf16.mxu0 0
    %836 = vmatpush2.bf16.msra.mxu0 0
    %837 = vmatprep.subr.bf16.mxu0 0
    %838 = vmatpush2.bf16.msra.mxu0 0
    %839 = vmatprep.subr.bf16.mxu0 0
    %840 = vmatpush2.bf16.msra.mxu0 0
    %841 = vmatprep.subr.bf16.mxu0 0
    %842 = vmatpush2.bf16.msra.mxu0 0
    %843 = vmatprep.subr.bf16.mxu0 0
    %844 = vmatpush2.bf16.msra.mxu0 0
    %845 = vmatprep.mubr.bf16.mxu0 0
    %846 = vmatmul.mubr.bf16.gmra.mxu0 %v811
    %v847 = vpop.f32.mrf.mxu0
    %v848 = vadd.f32 0.0, %v847
    %v849 = vpop.f32.mrf.mxu0
    %v850 = vpop.f32.mrf.mxu0
    %v851 = vpop.f32.mrf.mxu0
    %852 = vdwg.mxu0
    %v853 = vadd.f32 %v357, %v848
    %v854 = vxor.u32 %v853, 2147483648
    %v855 = vmul.f32 %v854, 1.442695
    %v856 = vpow.pop %v855
    %v857 = vadd.f32 %v856, 1.0
    %v858 = vrcp.pop %v857
    %v859 = vmul.f32 1.0, %v858
    %v862 = vunpack.c.l.s4 1983009808
    %v863 = vunpack.c.0.s8 %v862
    %v864 = vlaneseq
    %v865 = vshrl.u32 %v864, 7
    %v866 = vsub.s32 %v863, %v865
    %v867 = vrot.slane %v848, %v866
    %868 = vrot.lane.b32.xlu0 %v867, 96
    %v869 = vpop.permute.xlu0 %868
    %v871 = vadd.f32 %v457, %v869
    %v872 = vxor.u32 %v871, 2147483648
    %v873 = vmul.f32 %v872, 1.442695
    %v874 = vpow.pop %v873
    %v875 = vadd.f32 %v874, 1.0
    %v876 = vrcp.pop %v875
    %v877 = vmul.f32 1.0, %v876
    %v878 = vadd.f32 %v848, %v696
    %v881 = vunpack.c.l.s4 1983009808
    %v882 = vunpack.c.0.s8 %v881
    %v883 = vlaneseq
    %v884 = vshrl.u32 %v883, 7
    %v885 = vsub.s32 %v882, %v884
    %v886 = vrot.slane %v878, %v885
    %887 = vrot.lane.b32.xlu0 %v886, 64
    %v888 = vpop.permute.xlu0 %887
    %v890 = vmul.f32 %v859, %v888
    %v891 = vadd.f32 %v557, %v890
    %v892 = vtanh.pop %v891
    %v893 = vsub.f32 1.0, %v877
    %v894 = vmul.f32 %v893, %v892
    %v895 = vmul.f32 %v877, %v806
    %v896 = vadd.f32 %v894, %v895
    %s897 = scalar_lea.vmem [#allocation2], 6
    %898 = vst.msk [vmem:[%s897] sm:$0x3] %vm611, %v896
    %v899 = vpack.c.bf16 %v896, %v896
    %v901 = vsel %vm626, %v899, 0
    %903 = vmatprep.subr.bf16.mxu0 0
    %904 = vmatpush1.bf16.msra.mxu0 0
    %905 = vmatprep.subr.bf16.mxu0 0
    %906 = vmatpush1.bf16.msra.mxu0 0
    %907 = vmatprep.subr.bf16.mxu0 0
    %908 = vmatpush1.bf16.msra.mxu0 0
    %909 = vmatprep.subr.bf16.mxu0 0
    %910 = vmatpush1.bf16.msra.mxu0 0
    %911 = vmatprep.subr.bf16.mxu0 0
    %912 = vmatpush1.bf16.msra.mxu0 0
    %913 = vmatprep.subr.bf16.mxu0 0
    %914 = vmatpush1.bf16.msra.mxu0 0
    %915 = vmatprep.subr.bf16.mxu0 0
    %916 = vmatpush1.bf16.msra.mxu0 %v623
    %917 = vmatprep.subr.bf16.mxu0 0
    %918 = vmatpush1.bf16.msra.mxu0 %v622
    %919 = vmatprep.subr.bf16.mxu0 0
    %920 = vmatpush2.bf16.msra.mxu0 0
    %921 = vmatprep.subr.bf16.mxu0 0
    %922 = vmatpush2.bf16.msra.mxu0 0
    %923 = vmatprep.subr.bf16.mxu0 0
    %924 = vmatpush2.bf16.msra.mxu0 0
    %925 = vmatprep.subr.bf16.mxu0 0
    %926 = vmatpush2.bf16.msra.mxu0 0
    %927 = vmatprep.subr.bf16.mxu0 0
    %928 = vmatpush2.bf16.msra.mxu0 0
    %929 = vmatprep.subr.bf16.mxu0 0
    %930 = vmatpush2.bf16.msra.mxu0 0
    %931 = vmatprep.subr.bf16.mxu0 0
    %932 = vmatpush2.bf16.msra.mxu0 0
    %933 = vmatprep.subr.bf16.mxu0 0
    %934 = vmatpush2.bf16.msra.mxu0 0
    %935 = vmatprep.mubr.bf16.mxu0 0
    %936 = vmatmul.mubr.bf16.gmra.mxu0 %v901
    %v937 = vpop.f32.mrf.mxu0
    %v938 = vadd.f32 0.0, %v937
    %v939 = vpop.f32.mrf.mxu0
    %v940 = vpop.f32.mrf.mxu0
    %v941 = vpop.f32.mrf.mxu0
    %942 = vdwg.mxu0
    %v943 = vadd.f32 %v365, %v938
    %v944 = vxor.u32 %v943, 2147483648
    %v945 = vmul.f32 %v944, 1.442695
    %v946 = vpow.pop %v945
    %v947 = vadd.f32 %v946, 1.0
    %v948 = vrcp.pop %v947
    %v949 = vmul.f32 1.0, %v948
    %v952 = vunpack.c.l.s4 1983009808
    %v953 = vunpack.c.0.s8 %v952
    %v954 = vlaneseq
    %v955 = vshrl.u32 %v954, 7
    %v956 = vsub.s32 %v953, %v955
    %v957 = vrot.slane %v938, %v956
    %958 = vrot.lane.b32.xlu0 %v957, 96
    %v959 = vpop.permute.xlu0 %958
    %v961 = vadd.f32 %v465, %v959
    %v962 = vxor.u32 %v961, 2147483648
    %v963 = vmul.f32 %v962, 1.442695
    %v964 = vpow.pop %v963
    %v965 = vadd.f32 %v964, 1.0
    %v966 = vrcp.pop %v965
    %v967 = vmul.f32 1.0, %v966
    %v968 = vadd.f32 %v938, %v696
    %v971 = vunpack.c.l.s4 1983009808
    %v972 = vunpack.c.0.s8 %v971
    %v973 = vlaneseq
    %v974 = vshrl.u32 %v973, 7
    %v975 = vsub.s32 %v972, %v974
    %v976 = vrot.slane %v968, %v975
    %977 = vrot.lane.b32.xlu0 %v976, 64
    %v978 = vpop.permute.xlu0 %977
    %v980 = vmul.f32 %v949, %v978
    %v981 = vadd.f32 %v565, %v980
    %v982 = vtanh.pop %v981
    %v983 = vsub.f32 1.0, %v967
    %v984 = vmul.f32 %v983, %v982
    %v985 = vmul.f32 %v967, %v896
    %v986 = vadd.f32 %v984, %v985
    %s987 = scalar_lea.vmem [#allocation2], 8
    %988 = vst.msk [vmem:[%s987] sm:$0x3] %vm611, %v986
    %v989 = vpack.c.bf16 %v986, %v986
    %v991 = vsel %vm626, %v989, 0
    %993 = vmatprep.subr.bf16.mxu0 0
    %994 = vmatpush1.bf16.msra.mxu0 0
    %995 = vmatprep.subr.bf16.mxu0 0
    %996 = vmatpush1.bf16.msra.mxu0 0
    %997 = vmatprep.subr.bf16.mxu0 0
    %998 = vmatpush1.bf16.msra.mxu0 0
    %999 = vmatprep.subr.bf16.mxu0 0
    %1000 = vmatpush1.bf16.msra.mxu0 0
    %1001 = vmatprep.subr.bf16.mxu0 0
    %1002 = vmatpush1.bf16.msra.mxu0 0
    %1003 = vmatprep.subr.bf16.mxu0 0
    %1004 = vmatpush1.bf16.msra.mxu0 0
    %1005 = vmatprep.subr.bf16.mxu0 0
    %1006 = vmatpush1.bf16.msra.mxu0 %v623
    %1007 = vmatprep.subr.bf16.mxu0 0
    %1008 = vmatpush1.bf16.msra.mxu0 %v622
    %1009 = vmatprep.subr.bf16.mxu0 0
    %1010 = vmatpush2.bf16.msra.mxu0 0
    %1011 = vmatprep.subr.bf16.mxu0 0
    %1012 = vmatpush2.bf16.msra.mxu0 0
    %1013 = vmatprep.subr.bf16.mxu0 0
    %1014 = vmatpush2.bf16.msra.mxu0 0
    %1015 = vmatprep.subr.bf16.mxu0 0
    %1016 = vmatpush2.bf16.msra.mxu0 0
    %1017 = vmatprep.subr.bf16.mxu0 0
    %1018 = vmatpush2.bf16.msra.mxu0 0
    %1019 = vmatprep.subr.bf16.mxu0 0
    %1020 = vmatpush2.bf16.msra.mxu0 0
    %1021 = vmatprep.subr.bf16.mxu0 0
    %1022 = vmatpush2.bf16.msra.mxu0 0
    %1023 = vmatprep.subr.bf16.mxu0 0
    %1024 = vmatpush2.bf16.msra.mxu0 0
    %1025 = vmatprep.mubr.bf16.mxu0 0
    %1026 = vmatmul.mubr.bf16.gmra.mxu0 %v991
    %v1027 = vpop.f32.mrf.mxu0
    %v1028 = vadd.f32 0.0, %v1027
    %v1029 = vpop.f32.mrf.mxu0
    %v1030 = vpop.f32.mrf.mxu0
    %v1031 = vpop.f32.mrf.mxu0
    %1032 = vdwg.mxu0
    %v1033 = vadd.f32 %v373, %v1028
    %v1034 = vxor.u32 %v1033, 2147483648
    %v1035 = vmul.f32 %v1034, 1.442695
    %v1036 = vpow.pop %v1035
    %v1037 = vadd.f32 %v1036, 1.0
    %v1038 = vrcp.pop %v1037
    %v1039 = vmul.f32 1.0, %v1038
    %v1042 = vunpack.c.l.s4 1983009808
    %v1043 = vunpack.c.0.s8 %v1042
    %v1044 = vlaneseq
    %v1045 = vshrl.u32 %v1044, 7
    %v1046 = vsub.s32 %v1043, %v1045
    %v1047 = vrot.slane %v1028, %v1046
    %1048 = vrot.lane.b32.xlu0 %v1047, 96
    %v1049 = vpop.permute.xlu0 %1048
    %v1051 = vadd.f32 %v473, %v1049
    %v1052 = vxor.u32 %v1051, 2147483648
    %v1053 = vmul.f32 %v1052, 1.442695
    %v1054 = vpow.pop %v1053
    %v1055 = vadd.f32 %v1054, 1.0
    %v1056 = vrcp.pop %v1055
    %v1057 = vmul.f32 1.0, %v1056
    %v1058 = vadd.f32 %v1028, %v696
    %v1061 = vunpack.c.l.s4 1983009808
    %v1062 = vunpack.c.0.s8 %v1061
    %v1063 = vlaneseq
    %v1064 = vshrl.u32 %v1063, 7
    %v1065 = vsub.s32 %v1062, %v1064
    %v1066 = vrot.slane %v1058, %v1065
    %1067 = vrot.lane.b32.xlu0 %v1066, 64
    %v1068 = vpop.permute.xlu0 %1067
    %v1070 = vmul.f32 %v1039, %v1068
    %v1071 = vadd.f32 %v573, %v1070
    %v1072 = vtanh.pop %v1071
    %v1073 = vsub.f32 1.0, %v1057
    %v1074 = vmul.f32 %v1073, %v1072
    %v1075 = vmul.f32 %v1057, %v986
    %v1076 = vadd.f32 %v1074, %v1075
    %s1077 = scalar_lea.vmem [#allocation2], 10
    %1078 = vst.msk [vmem:[%s1077] sm:$0x3] %vm611, %v1076
    %v1079 = vpack.c.bf16 %v1076, %v1076
    %v1081 = vsel %vm626, %v1079, 0
    %1083 = vmatprep.subr.bf16.mxu0 0
    %1084 = vmatpush1.bf16.msra.mxu0 0
    %1085 = vmatprep.subr.bf16.mxu0 0
    %1086 = vmatpush1.bf16.msra.mxu0 0
    %1087 = vmatprep.subr.bf16.mxu0 0
    %1088 = vmatpush1.bf16.msra.mxu0 0
    %1089 = vmatprep.subr.bf16.mxu0 0
    %1090 = vmatpush1.bf16.msra.mxu0 0
    %1091 = vmatprep.subr.bf16.mxu0 0
    %1092 = vmatpush1.bf16.msra.mxu0 0
    %1093 = vmatprep.subr.bf16.mxu0 0
    %1094 = vmatpush1.bf16.msra.mxu0 0
    %1095 = vmatprep.subr.bf16.mxu0 0
    %1096 = vmatpush1.bf16.msra.mxu0 %v623
    %1097 = vmatprep.subr.bf16.mxu0 0
    %1098 = vmatpush1.bf16.msra.mxu0 %v622
    %1099 = vmatprep.subr.bf16.mxu0 0
    %1100 = vmatpush2.bf16.msra.mxu0 0
    %1101 = vmatprep.subr.bf16.mxu0 0
    %1102 = vmatpush2.bf16.msra.mxu0 0
    %1103 = vmatprep.subr.bf16.mxu0 0
    %1104 = vmatpush2.bf16.msra.mxu0 0
    %1105 = vmatprep.subr.bf16.mxu0 0
    %1106 = vmatpush2.bf16.msra.mxu0 0
    %1107 = vmatprep.subr.bf16.mxu0 0
    %1108 = vmatpush2.bf16.msra.mxu0 0
    %1109 = vmatprep.subr.bf16.mxu0 0
    %1110 = vmatpush2.bf16.msra.mxu0 0
    %1111 = vmatprep.subr.bf16.mxu0 0
    %1112 = vmatpush2.bf16.msra.mxu0 0
    %1113 = vmatprep.subr.bf16.mxu0 0
    %1114 = vmatpush2.bf16.msra.mxu0 0
    %1115 = vmatprep.mubr.bf16.mxu0 0
    %1116 = vmatmul.mubr.bf16.gmra.mxu0 %v1081
    %v1117 = vpop.f32.mrf.mxu0
    %v1118 = vadd.f32 0.0, %v1117
    %v1119 = vpop.f32.mrf.mxu0
    %v1120 = vpop.f32.mrf.mxu0
    %v1121 = vpop.f32.mrf.mxu0
    %1122 = vdwg.mxu0
    %v1123 = vadd.f32 %v372, %v1118
    %v1124 = vxor.u32 %v1123, 2147483648
    %v1125 = vmul.f32 %v1124, 1.442695
    %v1126 = vpow.pop %v1125
    %v1127 = vadd.f32 %v1126, 1.0
    %v1128 = vrcp.pop %v1127
    %v1129 = vmul.f32 1.0, %v1128
    %v1132 = vunpack.c.l.s4 1983009808
    %v1133 = vunpack.c.0.s8 %v1132
    %v1134 = vlaneseq
    %v1135 = vshrl.u32 %v1134, 7
    %v1136 = vsub.s32 %v1133, %v1135
    %v1137 = vrot.slane %v1118, %v1136
    %1138 = vrot.lane.b32.xlu0 %v1137, 96
    %v1139 = vpop.permute.xlu0 %1138
    %v1141 = vadd.f32 %v472, %v1139
    %v1142 = vxor.u32 %v1141, 2147483648
    %v1143 = vmul.f32 %v1142, 1.442695
    %v1144 = vpow.pop %v1143
    %v1145 = vadd.f32 %v1144, 1.0
    %v1146 = vrcp.pop %v1145
    %v1147 = vmul.f32 1.0, %v1146
    %v1148 = vadd.f32 %v1118, %v696
    %v1151 = vunpack.c.l.s4 1983009808
    %v1152 = vunpack.c.0.s8 %v1151
    %v1153 = vlaneseq
    %v1154 = vshrl.u32 %v1153, 7
    %v1155 = vsub.s32 %v1152, %v1154
    %v1156 = vrot.slane %v1148, %v1155
    %1157 = vrot.lane.b32.xlu0 %v1156, 64
    %v1158 = vpop.permute.xlu0 %1157
    %v1160 = vmul.f32 %v1129, %v1158
    %v1161 = vadd.f32 %v572, %v1160
    %v1162 = vtanh.pop %v1161
    %v1163 = vsub.f32 1.0, %v1147
    %v1164 = vmul.f32 %v1163, %v1162
    %v1165 = vmul.f32 %v1147, %v1076
    %v1166 = vadd.f32 %v1164, %v1165
    %s1167 = scalar_lea.vmem [#allocation2], 12
    %1168 = vst.msk [vmem:[%s1167] sm:$0x3] %vm611, %v1166
    %v1169 = vpack.c.bf16 %v1166, %v1166
    %v1171 = vsel %vm626, %v1169, 0
    %1173 = vmatprep.subr.bf16.mxu0 0
    %1174 = vmatpush1.bf16.msra.mxu0 0
    %1175 = vmatprep.subr.bf16.mxu0 0
    %1176 = vmatpush1.bf16.msra.mxu0 0
    %1177 = vmatprep.subr.bf16.mxu0 0
    %1178 = vmatpush1.bf16.msra.mxu0 0
    %1179 = vmatprep.subr.bf16.mxu0 0
    %1180 = vmatpush1.bf16.msra.mxu0 0
    %1181 = vmatprep.subr.bf16.mxu0 0
    %1182 = vmatpush1.bf16.msra.mxu0 0
    %1183 = vmatprep.subr.bf16.mxu0 0
    %1184 = vmatpush1.bf16.msra.mxu0 0
    %1185 = vmatprep.subr.bf16.mxu0 0
    %1186 = vmatpush1.bf16.msra.mxu0 %v623
    %1187 = vmatprep.subr.bf16.mxu0 0
    %1188 = vmatpush1.bf16.msra.mxu0 %v622
    %1189 = vmatprep.subr.bf16.mxu0 0
    %1190 = vmatpush2.bf16.msra.mxu0 0
    %1191 = vmatprep.subr.bf16.mxu0 0
    %1192 = vmatpush2.bf16.msra.mxu0 0
    %1193 = vmatprep.subr.bf16.mxu0 0
    %1194 = vmatpush2.bf16.msra.mxu0 0
    %1195 = vmatprep.subr.bf16.mxu0 0
    %1196 = vmatpush2.bf16.msra.mxu0 0
    %1197 = vmatprep.subr.bf16.mxu0 0
    %1198 = vmatpush2.bf16.msra.mxu0 0
    %1199 = vmatprep.subr.bf16.mxu0 0
    %1200 = vmatpush2.bf16.msra.mxu0 0
    %1201 = vmatprep.subr.bf16.mxu0 0
    %1202 = vmatpush2.bf16.msra.mxu0 0
    %1203 = vmatprep.subr.bf16.mxu0 0
    %1204 = vmatpush2.bf16.msra.mxu0 0
    %1205 = vmatprep.mubr.bf16.mxu0 0
    %1206 = vmatmul.mubr.bf16.gmra.mxu0 %v1171
    %v1207 = vpop.f32.mrf.mxu0
    %v1208 = vadd.f32 0.0, %v1207
    %v1209 = vpop.f32.mrf.mxu0
    %v1210 = vpop.f32.mrf.mxu0
    %v1211 = vpop.f32.mrf.mxu0
    %1212 = vdwg.mxu0
    %v1213 = vadd.f32 %v374, %v1208
    %v1214 = vxor.u32 %v1213, 2147483648
    %v1215 = vmul.f32 %v1214, 1.442695
    %v1216 = vpow.pop %v1215
    %v1217 = vadd.f32 %v1216, 1.0
    %v1218 = vrcp.pop %v1217
    %v1219 = vmul.f32 1.0, %v1218
    %v1222 = vunpack.c.l.s4 1983009808
    %v1223 = vunpack.c.0.s8 %v1222
    %v1224 = vlaneseq
    %v1225 = vshrl.u32 %v1224, 7
    %v1226 = vsub.s32 %v1223, %v1225
    %v1227 = vrot.slane %v1208, %v1226
    %1228 = vrot.lane.b32.xlu0 %v1227, 96
    %v1229 = vpop.permute.xlu0 %1228
    %v1231 = vadd.f32 %v474, %v1229
    %v1232 = vxor.u32 %v1231, 2147483648
    %v1233 = vmul.f32 %v1232, 1.442695
    %v1234 = vpow.pop %v1233
    %v1235 = vadd.f32 %v1234, 1.0
    %v1236 = vrcp.pop %v1235
    %v1237 = vmul.f32 1.0, %v1236
    %v1238 = vadd.f32 %v1208, %v696
    %v1241 = vunpack.c.l.s4 1983009808
    %v1242 = vunpack.c.0.s8 %v1241
    %v1243 = vlaneseq
    %v1244 = vshrl.u32 %v1243, 7
    %v1245 = vsub.s32 %v1242, %v1244
    %v1246 = vrot.slane %v1238, %v1245
    %1247 = vrot.lane.b32.xlu0 %v1246, 64
    %v1248 = vpop.permute.xlu0 %1247
    %v1250 = vmul.f32 %v1219, %v1248
    %v1251 = vadd.f32 %v574, %v1250
    %v1252 = vtanh.pop %v1251
    %v1253 = vsub.f32 1.0, %v1237
    %v1254 = vmul.f32 %v1253, %v1252
    %v1255 = vmul.f32 %v1237, %v1166
    %v1256 = vadd.f32 %v1254, %v1255
    %s1257 = scalar_lea.vmem [#allocation2], 14
    %1258 = vst.msk [vmem:[%s1257] sm:$0x3] %vm611, %v1256
    %v1259 = vld [vmem:[#allocation2] sm:$0x3]
    %v1260 = vld [vmem:[#allocation2 + $0x2] sm:$0x3]
    %v1261 = vld [vmem:[#allocation2 + $0x4] sm:$0x3]
    %v1262 = vld [vmem:[#allocation2 + $0x6] sm:$0x3]
    %v1263 = vld [vmem:[#allocation2 + $0x8] sm:$0x3]
    %v1264 = vld [vmem:[#allocation2 + $0xa] sm:$0x3]
    %v1265 = vld [vmem:[#allocation2 + $0xc] sm:$0x3]
    %v1266 = vld [vmem:[#allocation2 + $0xe] sm:$0x3]
    %v1267 = vld [vmem:[#allocation13] sm:$0x1]
    %v1269 = vlaneseq
    %v1270 = vshrl.u32 %v1269, 7
    %v1271 = vsub.s32 0, %v1270
    %v1272 = vrot.slane %v1267, %v1271
    %v1274 = vmul.f32 %v1259, %v1272
    %v1275 = vmul.f32 %v1260, %v1272
    %v1276 = vmul.f32 %v1261, %v1272
    %v1277 = vmul.f32 %v1262, %v1272
    %v1278 = vmul.f32 %v1263, %v1272
    %v1279 = vmul.f32 %v1264, %v1272
    %v1280 = vmul.f32 %v1265, %v1272
    %v1281 = vmul.f32 %v1266, %v1272
    %v1282 = vsel %vm611, %v1274, 0.0
    %1283 = vadd.xlane.f32.xlu0 %v1282
    %v1284 = vpop.xlane.xlu0 %1283
    %v1285 = vsel %vm611, %v1275, 0.0
    %1286 = vadd.xlane.f32.xlu0 %v1285
    %v1287 = vpop.xlane.xlu0 %1286
    %v1288 = vsel %vm611, %v1276, 0.0
    %1289 = vadd.xlane.f32.xlu0 %v1288
    %v1290 = vpop.xlane.xlu0 %1289
    %v1291 = vsel %vm611, %v1277, 0.0
    %1292 = vadd.xlane.f32.xlu0 %v1291
    %v1293 = vpop.xlane.xlu0 %1292
    %v1294 = vsel %vm611, %v1278, 0.0
    %1295 = vadd.xlane.f32.xlu0 %v1294
    %v1296 = vpop.xlane.xlu0 %1295
    %v1297 = vsel %vm611, %v1279, 0.0
    %1298 = vadd.xlane.f32.xlu0 %v1297
    %v1299 = vpop.xlane.xlu0 %1298
    %v1300 = vsel %vm611, %v1280, 0.0
    %1301 = vadd.xlane.f32.xlu0 %v1300
    %v1302 = vpop.xlane.xlu0 %1301
    %v1303 = vsel %vm611, %v1281, 0.0
    %1304 = vadd.xlane.f32.xlu0 %v1303
    %v1305 = vpop.xlane.xlu0 %1304
    %v1306 = vadd.f32 %v1284, %v206
    %v1307 = vadd.f32 %v1287, %v207
    %v1308 = vadd.f32 %v1290, %v208
    %v1309 = vadd.f32 %v1293, %v209
    %v1310 = vadd.f32 %v1296, %v210
    %v1311 = vadd.f32 %v1299, %v211
    %v1312 = vadd.f32 %v1302, %v212
    %v1313 = vadd.f32 %v1305, %v213
    %vm1314 = vcmask 1024
    %v1315 = vsel %vm1314, %v1306, -inf
    %v1316 = vsel %vm1314, %v1307, -inf
    %v1317 = vsel %vm1314, %v1308, -inf
    %v1318 = vsel %vm1314, %v1309, -inf
    %v1319 = vsel %vm1314, %v1310, -inf
    %v1320 = vmax.f32 %v1315, %v1319
    %v1321 = vsel %vm1314, %v1311, -inf
    %v1322 = vmax.f32 %v1316, %v1321
    %v1323 = vsel %vm1314, %v1312, -inf
    %v1324 = vmax.f32 %v1317, %v1323
    %v1325 = vsel %vm1314, %v1313, -inf
    %v1326 = vmax.f32 %v1318, %v1325
    %v1327 = vmax.f32 %v1320, %v1322
    %v1328 = vmax.f32 %v1324, %v1326
    %v1329 = vmax.f32 %v1327, %v1328
    %v1330 = vsub.f32 %v1306, %v1329
    %v1331 = vsub.f32 %v1307, %v1329
    %v1332 = vsub.f32 %v1308, %v1329
    %v1333 = vsub.f32 %v1309, %v1329
    %v1334 = vsub.f32 %v1310, %v1329
    %v1335 = vsub.f32 %v1311, %v1329
    %v1336 = vsub.f32 %v1312, %v1329
    %v1337 = vsub.f32 %v1313, %v1329
    %v1338 = vmul.f32 %v1330, 1.442695
    %v1339 = vpow.pop %v1338
    %v1340 = vmul.f32 %v1331, 1.442695
    %v1341 = vpow.pop %v1340
    %v1342 = vmul.f32 %v1332, 1.442695
    %v1343 = vpow.pop %v1342
    %v1344 = vmul.f32 %v1333, 1.442695
    %v1345 = vpow.pop %v1344
    %v1346 = vmul.f32 %v1334, 1.442695
    %v1347 = vpow.pop %v1346
    %v1348 = vmul.f32 %v1335, 1.442695
    %v1349 = vpow.pop %v1348
    %v1350 = vmul.f32 %v1336, 1.442695
    %v1351 = vpow.pop %v1350
    %v1352 = vmul.f32 %v1337, 1.442695
    %v1353 = vpow.pop %v1352
    %v1354 = vsel %vm1314, %v1339, 0.0
    %v1355 = vsel %vm1314, %v1341, 0.0
    %v1356 = vadd.f32 %v1354, %v1355
    %v1357 = vsel %vm1314, %v1343, 0.0
    %v1358 = vadd.f32 %v1356, %v1357
    %v1359 = vsel %vm1314, %v1345, 0.0
    %v1360 = vadd.f32 %v1358, %v1359
    %v1361 = vsel %vm1314, %v1347, 0.0
    %v1362 = vadd.f32 %v1360, %v1361
    %v1363 = vsel %vm1314, %v1349, 0.0
    %v1364 = vadd.f32 %v1362, %v1363
    %v1365 = vsel %vm1314, %v1351, 0.0
    %v1366 = vadd.f32 %v1364, %v1365
    %v1367 = vsel %vm1314, %v1353, 0.0
    %v1368 = vadd.f32 %v1366, %v1367
    %v1369 = vadd.f32 %v1368, 1e-20
    %v1370 = vrcp.pop %v1369
    %v1371 = vmul.f32 %v1339, %v1370
    %v1372 = vmul.f32 %v1341, %v1370
    %v1373 = vmul.f32 %v1343, %v1370
    %v1374 = vmul.f32 %v1345, %v1370
    %v1375 = vmul.f32 %v1347, %v1370
    %v1376 = vmul.f32 %v1349, %v1370
    %v1377 = vmul.f32 %v1351, %v1370
    %v1378 = vmul.f32 %v1353, %v1370
    %1380 = vset.pattern.permute.xlu0 0
    %1381 = vperm.xlu0 %1380, %v1371
    %v1382 = vpop.permute.xlu0 %1381
    %1385 = vset.pattern.permute.xlu0 0
    %1386 = vperm.xlu0 %1385, %v1372
    %v1387 = vpop.permute.xlu0 %1386
    %1390 = vset.pattern.permute.xlu0 0
    %1391 = vperm.xlu0 %1390, %v1373
    %v1392 = vpop.permute.xlu0 %1391
    %1395 = vset.pattern.permute.xlu0 0
    %1396 = vperm.xlu0 %1395, %v1374
    %v1397 = vpop.permute.xlu0 %1396
    %1400 = vset.pattern.permute.xlu0 0
    %1401 = vperm.xlu0 %1400, %v1375
    %v1402 = vpop.permute.xlu0 %1401
    %1405 = vset.pattern.permute.xlu0 0
    %1406 = vperm.xlu0 %1405, %v1376
    %v1407 = vpop.permute.xlu0 %1406
    %1410 = vset.pattern.permute.xlu0 0
    %1411 = vperm.xlu0 %1410, %v1377
    %v1412 = vpop.permute.xlu0 %1411
    %1415 = vset.pattern.permute.xlu0 0
    %1416 = vperm.xlu0 %1415, %v1378
    %v1417 = vpop.permute.xlu0 %1416
    %v1419 = vmul.f32 %v1382, %v1259
    %v1420 = vmul.f32 %v1387, %v1260
    %v1421 = vmul.f32 %v1392, %v1261
    %v1422 = vmul.f32 %v1397, %v1262
    %v1423 = vmul.f32 %v1402, %v1263
    %v1424 = vmul.f32 %v1407, %v1264
    %v1425 = vmul.f32 %v1412, %v1265
    %v1426 = vmul.f32 %v1417, %v1266
    %v1427 = vsel %vm611, %v1419, 0.0
    %v1428 = vsel %vm611, %v1420, 0.0
    %v1429 = vadd.f32 %v1427, %v1428
    %v1430 = vsel %vm611, %v1421, 0.0
    %v1431 = vadd.f32 %v1429, %v1430
    %v1432 = vsel %vm611, %v1422, 0.0
    %v1433 = vadd.f32 %v1431, %v1432
    %v1434 = vsel %vm611, %v1423, 0.0
    %v1435 = vadd.f32 %v1433, %v1434
    %v1436 = vsel %vm611, %v1424, 0.0
    %v1437 = vadd.f32 %v1435, %v1436
    %v1438 = vsel %vm611, %v1425, 0.0
    %v1439 = vadd.f32 %v1437, %v1438
    %v1440 = vsel %vm611, %v1426, 0.0
    %v1441 = vadd.f32 %v1439, %v1440
    %v1442 = vld [vmem:[%s12] sm:$0x1]
    %v1443 = vld [vmem:[%s12 + $0x1] sm:$0x1]
    %v1444 = vld [vmem:[%s12 + $0x2] sm:$0x1]
    %v1445 = vld [vmem:[%s12 + $0x3] sm:$0x1]
    %v1446 = vld [vmem:[%s12 + $0x4] sm:$0x1]
    %v1447 = vld [vmem:[%s12 + $0x5] sm:$0x1]
    %v1448 = vld [vmem:[%s12 + $0x6] sm:$0x1]
    %v1449 = vld [vmem:[%s12 + $0x7] sm:$0x1]
    %v1450 = vld [vmem:[%s13] sm:$0xf]
    %v1451 = vld [vmem:[%s13 + $0x4] sm:$0x3]
    %v1452 = vld [vmem:[%s17] sm:$0x1]
    %v1454 = vlaneseq
    %v1455 = vshrl.u32 %v1454, 7
    %v1456 = vsub.s32 0, %v1455
    %v1457 = vrot.slane %v1452, %v1456
    %v1467 = vcombine.low %v1442, %v1443
    %v1468 = vcombine.low %v1444, %v1445
    %v1469 = vcombine.low %v1446, %v1447
    %v1470 = vcombine.low %v1448, %v1449
    %v1472 = vunpack.c.l.s4 1966171168
    %v1473 = vunpack.c.0.s8 %v1472
    %v1474 = vlaneseq
    %v1475 = vshrl.u32 %v1474, 7
    %v1476 = vsub.s32 %v1473, %v1475
    %v1477 = vrot.slane %v1467, %v1476
    %v1479 = vunpack.c.l.s4 1966171168
    %v1480 = vunpack.c.0.s8 %v1479
    %v1481 = vlaneseq
    %v1482 = vshrl.u32 %v1481, 7
    %v1483 = vsub.s32 %v1480, %v1482
    %v1484 = vrot.slane %v1468, %v1483
    %v1486 = vunpack.c.l.s4 1966171168
    %v1487 = vunpack.c.0.s8 %v1486
    %v1488 = vlaneseq
    %v1489 = vshrl.u32 %v1488, 7
    %v1490 = vsub.s32 %v1487, %v1489
    %v1491 = vrot.slane %v1469, %v1490
    %v1493 = vunpack.c.l.s4 1966171168
    %v1494 = vunpack.c.0.s8 %v1493
    %v1495 = vlaneseq
    %v1496 = vshrl.u32 %v1495, 7
    %v1497 = vsub.s32 %v1494, %v1496
    %v1498 = vrot.slane %v1470, %v1497
    %v1499 = vcombine.low %v1477, %v1484
    %v1500 = vcombine.low %v1491, %v1498
    %v1502 = vunpack.c.l.s4 1966171168
    %v1503 = vunpack.c.0.s8 %v1502
    %v1504 = vlaneseq
    %v1505 = vshrl.u32 %v1504, 7
    %v1506 = vsub.s32 %v1503, %v1505
    %v1507 = vrot.slane %v1499, %v1506
    %v1509 = vunpack.c.l.s4 1966171168
    %v1510 = vunpack.c.0.s8 %v1509
    %v1511 = vlaneseq
    %v1512 = vshrl.u32 %v1511, 7
    %v1513 = vsub.s32 %v1510, %v1512
    %v1514 = vrot.slane %v1500, %v1513
    %v1515 = vcombine.low %v1507, %v1514
    %v1518 = vunpack.c.l.b16 %v1450
    %v1519 = vunpack.c.l.b16 %v1451
    %v1520 = vpack.c.b16 %v1519, %v1518
    %vm1521 = vcmask 97280
    %v1523 = vsel %vm1521, %v1515, 0
    %vm1525 = vcmask 1045504
    %v1527 = vsel %vm1525, %v1520, 0
    %1529 = vmatprep.subr.bf16.mxu0 0
    %1530 = vmatpush1.bf16.msra.mxu0 0
    %1531 = vmatprep.subr.bf16.mxu0 0
    %1532 = vmatpush1.bf16.msra.mxu0 0
    %1533 = vmatprep.subr.bf16.mxu0 0
    %1534 = vmatpush1.bf16.msra.mxu0 0
    %1535 = vmatprep.subr.bf16.mxu0 0
    %1536 = vmatpush1.bf16.msra.mxu0 0
    %1537 = vmatprep.subr.bf16.mxu0 0
    %1538 = vmatpush1.bf16.msra.mxu0 0
    %1539 = vmatprep.subr.bf16.mxu0 0
    %1540 = vmatpush1.bf16.msra.mxu0 0
    %1541 = vmatprep.subr.bf16.mxu0 0
    %1542 = vmatpush1.bf16.msra.mxu0 0
    %1543 = vmatprep.subr.bf16.mxu0 0
    %1544 = vmatpush1.bf16.msra.mxu0 %v1527
    %1545 = vmatprep.subr.bf16.mxu0 0
    %1546 = vmatpush2.bf16.msra.mxu0 0
    %1547 = vmatprep.subr.bf16.mxu0 0
    %1548 = vmatpush2.bf16.msra.mxu0 0
    %1549 = vmatprep.subr.bf16.mxu0 0
    %1550 = vmatpush2.bf16.msra.mxu0 0
    %1551 = vmatprep.subr.bf16.mxu0 0
    %1552 = vmatpush2.bf16.msra.mxu0 0
    %1553 = vmatprep.subr.bf16.mxu0 0
    %1554 = vmatpush2.bf16.msra.mxu0 0
    %1555 = vmatprep.subr.bf16.mxu0 0
    %1556 = vmatpush2.bf16.msra.mxu0 0
    %1557 = vmatprep.subr.bf16.mxu0 0
    %1558 = vmatpush2.bf16.msra.mxu0 0
    %1559 = vmatprep.subr.bf16.mxu0 0
    %1560 = vmatpush2.bf16.msra.mxu0 0
    %1561 = vmatprep.mubr.bf16.mxu0 0
    %1562 = vmatmul.mubr.bf16.gmra.mxu0 %v1523
    %v1563 = vpop.f32.mrf.mxu0
    %v1564 = vadd.f32 %v1457, %v1563
    %v1565 = vpop.f32.mrf.mxu0
    %v1566 = vpop.f32.mrf.mxu0
    %v1567 = vadd.f32 %v1457, %v1566
    %v1568 = vpop.f32.mrf.mxu0
    %1569 = vdwg.mxu0
    %v1572 = vcombine.high %v1564, %v1564
    %v1574 = vunpack.c.l.s4 1983009808
    %v1575 = vunpack.c.0.s8 %v1574
    %v1576 = vlaneseq
    %v1577 = vshrl.u32 %v1576, 7
    %v1578 = vsub.s32 %v1575, %v1577
    %v1579 = vrot.slane %v1564, %v1578
    %v1581 = vunpack.c.l.s4 1983009808
    %v1582 = vunpack.c.0.s8 %v1581
    %v1583 = vlaneseq
    %v1584 = vshrl.u32 %v1583, 7
    %v1585 = vsub.s32 %v1582, %v1584
    %v1586 = vrot.slane %v1572, %v1585
    %v1587 = vcombine.high %v1579, %v1579
    %v1588 = vcombine.high %v1586, %v1586
    %v1589 = vcombine.high %v1567, %v1567
    %v1591 = vunpack.c.l.s4 1983009808
    %v1592 = vunpack.c.0.s8 %v1591
    %v1593 = vlaneseq
    %v1594 = vshrl.u32 %v1593, 7
    %v1595 = vsub.s32 %v1592, %v1594
    %v1596 = vrot.slane %v1567, %v1595
    %v1598 = vunpack.c.l.s4 1983009808
    %v1599 = vunpack.c.0.s8 %v1598
    %v1600 = vlaneseq
    %v1601 = vshrl.u32 %v1600, 7
    %v1602 = vsub.s32 %v1599, %v1601
    %v1603 = vrot.slane %v1589, %v1602
    %v1604 = vcombine.high %v1596, %v1596
    %v1605 = vcombine.high %v1603, %v1603
    %v1614 = vld [vmem:[#allocation15] sm:$0xf]
    %v1615 = vld [vmem:[#allocation15 + $0x4] sm:$0x3]
    %v1616 = vld [vmem:[%s18] sm:$0x1]
    %v1618 = vlaneseq
    %v1619 = vshrl.u32 %v1618, 7
    %v1620 = vsub.s32 0, %v1619
    %v1621 = vrot.slane %v1616, %v1620
    %v1625 = vunpack.c.l.b16 %v1614
    %v1626 = vunpack.c.l.b16 %v1615
    %v1627 = vpack.c.b16 %v1626, %v1625
    %v1629 = vsel %vm1525, %v1627, 0
    %1631 = vmatprep.subr.bf16.mxu0 0
    %1632 = vmatpush1.bf16.msra.mxu0 0
    %1633 = vmatprep.subr.bf16.mxu0 0
    %1634 = vmatpush1.bf16.msra.mxu0 0
    %1635 = vmatprep.subr.bf16.mxu0 0
    %1636 = vmatpush1.bf16.msra.mxu0 0
    %1637 = vmatprep.subr.bf16.mxu0 0
    %1638 = vmatpush1.bf16.msra.mxu0 0
    %1639 = vmatprep.subr.bf16.mxu0 0
    %1640 = vmatpush1.bf16.msra.mxu0 0
    %1641 = vmatprep.subr.bf16.mxu0 0
    %1642 = vmatpush1.bf16.msra.mxu0 0
    %1643 = vmatprep.subr.bf16.mxu0 0
    %1644 = vmatpush1.bf16.msra.mxu0 0
    %1645 = vmatprep.subr.bf16.mxu0 0
    %1646 = vmatpush1.bf16.msra.mxu0 %v1629
    %1647 = vmatprep.subr.bf16.mxu0 0
    %1648 = vmatpush2.bf16.msra.mxu0 0
    %1649 = vmatprep.subr.bf16.mxu0 0
    %1650 = vmatpush2.bf16.msra.mxu0 0
    %1651 = vmatprep.subr.bf16.mxu0 0
    %1652 = vmatpush2.bf16.msra.mxu0 0
    %1653 = vmatprep.subr.bf16.mxu0 0
    %1654 = vmatpush2.bf16.msra.mxu0 0
    %1655 = vmatprep.subr.bf16.mxu0 0
    %1656 = vmatpush2.bf16.msra.mxu0 0
    %1657 = vmatprep.subr.bf16.mxu0 0
    %1658 = vmatpush2.bf16.msra.mxu0 0
    %1659 = vmatprep.subr.bf16.mxu0 0
    %1660 = vmatpush2.bf16.msra.mxu0 0
    %1661 = vmatprep.subr.bf16.mxu0 0
    %1662 = vmatpush2.bf16.msra.mxu0 0
    %1663 = vmatprep.mubr.bf16.mxu0 0
    %1664 = vmatmul.mubr.bf16.gmra.mxu0 %v1523
    %v1665 = vpop.f32.mrf.mxu0
    %v1666 = vadd.f32 %v1621, %v1665
    %v1667 = vpop.f32.mrf.mxu0
    %v1668 = vpop.f32.mrf.mxu0
    %v1669 = vadd.f32 %v1621, %v1668
    %v1670 = vpop.f32.mrf.mxu0
    %1671 = vdwg.mxu0
    %v1674 = vcombine.high %v1666, %v1666
    %v1676 = vunpack.c.l.s4 1983009808
    %v1677 = vunpack.c.0.s8 %v1676
    %v1678 = vlaneseq
    %v1679 = vshrl.u32 %v1678, 7
    %v1680 = vsub.s32 %v1677, %v1679
    %v1681 = vrot.slane %v1666, %v1680
    %v1683 = vunpack.c.l.s4 1983009808
    %v1684 = vunpack.c.0.s8 %v1683
    %v1685 = vlaneseq
    %v1686 = vshrl.u32 %v1685, 7
    %v1687 = vsub.s32 %v1684, %v1686
    %v1688 = vrot.slane %v1674, %v1687
    %v1689 = vcombine.high %v1681, %v1681
    %v1690 = vcombine.high %v1688, %v1688
    %v1691 = vcombine.high %v1669, %v1669
    %v1693 = vunpack.c.l.s4 1983009808
    %v1694 = vunpack.c.0.s8 %v1693
    %v1695 = vlaneseq
    %v1696 = vshrl.u32 %v1695, 7
    %v1697 = vsub.s32 %v1694, %v1696
    %v1698 = vrot.slane %v1669, %v1697
    %v1700 = vunpack.c.l.s4 1983009808
    %v1701 = vunpack.c.0.s8 %v1700
    %v1702 = vlaneseq
    %v1703 = vshrl.u32 %v1702, 7
    %v1704 = vsub.s32 %v1701, %v1703
    %v1705 = vrot.slane %v1691, %v1704
    %v1706 = vcombine.high %v1698, %v1698
    %v1707 = vcombine.high %v1705, %v1705
    %v1716 = vld [vmem:[#allocation16] sm:$0xf]
    %v1717 = vld [vmem:[#allocation16 + $0x4] sm:$0x3]
    %v1718 = vld [vmem:[%s19] sm:$0x1]
    %v1720 = vlaneseq
    %v1721 = vshrl.u32 %v1720, 7
    %v1722 = vsub.s32 0, %v1721
    %v1723 = vrot.slane %v1718, %v1722
    %v1727 = vunpack.c.l.b16 %v1716
    %v1728 = vunpack.c.l.b16 %v1717
    %v1729 = vpack.c.b16 %v1728, %v1727
    %v1731 = vsel %vm1525, %v1729, 0
    %1733 = vmatprep.subr.bf16.mxu0 0
    %1734 = vmatpush1.bf16.msra.mxu0 0
    %1735 = vmatprep.subr.bf16.mxu0 0
    %1736 = vmatpush1.bf16.msra.mxu0 0
    %1737 = vmatprep.subr.bf16.mxu0 0
    %1738 = vmatpush1.bf16.msra.mxu0 0
    %1739 = vmatprep.subr.bf16.mxu0 0
    %1740 = vmatpush1.bf16.msra.mxu0 0
    %1741 = vmatprep.subr.bf16.mxu0 0
    %1742 = vmatpush1.bf16.msra.mxu0 0
    %1743 = vmatprep.subr.bf16.mxu0 0
    %1744 = vmatpush1.bf16.msra.mxu0 0
    %1745 = vmatprep.subr.bf16.mxu0 0
    %1746 = vmatpush1.bf16.msra.mxu0 0
    %1747 = vmatprep.subr.bf16.mxu0 0
    %1748 = vmatpush1.bf16.msra.mxu0 %v1731
    %1749 = vmatprep.subr.bf16.mxu0 0
    %1750 = vmatpush2.bf16.msra.mxu0 0
    %1751 = vmatprep.subr.bf16.mxu0 0
    %1752 = vmatpush2.bf16.msra.mxu0 0
    %1753 = vmatprep.subr.bf16.mxu0 0
    %1754 = vmatpush2.bf16.msra.mxu0 0
    %1755 = vmatprep.subr.bf16.mxu0 0
    %1756 = vmatpush2.bf16.msra.mxu0 0
    %1757 = vmatprep.subr.bf16.mxu0 0
    %1758 = vmatpush2.bf16.msra.mxu0 0
    %1759 = vmatprep.subr.bf16.mxu0 0
    %1760 = vmatpush2.bf16.msra.mxu0 0
    %1761 = vmatprep.subr.bf16.mxu0 0
    %1762 = vmatpush2.bf16.msra.mxu0 0
    %1763 = vmatprep.subr.bf16.mxu0 0
    %1764 = vmatpush2.bf16.msra.mxu0 0
    %1765 = vmatprep.mubr.bf16.mxu0 0
    %1766 = vmatmul.mubr.bf16.gmra.mxu0 %v1523
    %v1767 = vpop.f32.mrf.mxu0
    %v1768 = vadd.f32 %v1723, %v1767
    %v1769 = vpop.f32.mrf.mxu0
    %v1770 = vpop.f32.mrf.mxu0
    %v1771 = vadd.f32 %v1723, %v1770
    %v1772 = vpop.f32.mrf.mxu0
    %1773 = vdwg.mxu0
    %v1776 = vcombine.high %v1768, %v1768
    %v1778 = vunpack.c.l.s4 1983009808
    %v1779 = vunpack.c.0.s8 %v1778
    %v1780 = vlaneseq
    %v1781 = vshrl.u32 %v1780, 7
    %v1782 = vsub.s32 %v1779, %v1781
    %v1783 = vrot.slane %v1768, %v1782
    %v1785 = vunpack.c.l.s4 1983009808
    %v1786 = vunpack.c.0.s8 %v1785
    %v1787 = vlaneseq
    %v1788 = vshrl.u32 %v1787, 7
    %v1789 = vsub.s32 %v1786, %v1788
    %v1790 = vrot.slane %v1776, %v1789
    %v1791 = vcombine.high %v1783, %v1783
    %v1792 = vcombine.high %v1790, %v1790
    %v1793 = vcombine.high %v1771, %v1771
    %v1795 = vunpack.c.l.s4 1983009808
    %v1796 = vunpack.c.0.s8 %v1795
    %v1797 = vlaneseq
    %v1798 = vshrl.u32 %v1797, 7
    %v1799 = vsub.s32 %v1796, %v1798
    %v1800 = vrot.slane %v1771, %v1799
    %v1802 = vunpack.c.l.s4 1983009808
    %v1803 = vunpack.c.0.s8 %v1802
    %v1804 = vlaneseq
    %v1805 = vshrl.u32 %v1804, 7
    %v1806 = vsub.s32 %v1803, %v1805
    %v1807 = vrot.slane %v1793, %v1806
    %v1808 = vcombine.high %v1800, %v1800
    %v1809 = vcombine.high %v1807, %v1807
    %v1818 = vld [vmem:[#allocation18] sm:$0xf]
    %v1819 = vld [vmem:[#allocation18 + $0x4] sm:$0xf]
    %v1820 = vld [vmem:[%s20] sm:$0x1]
    %v1821 = vxor.u32 %v1579, 2147483648
    %v1822 = vmul.f32 %v1821, 1.442695
    %v1823 = vpow.pop %v1822
    %v1824 = vadd.f32 %v1823, 1.0
    %v1825 = vrcp.pop %v1824
    %v1826 = vmul.f32 1.0, %v1825
    %v1827 = vxor.u32 %v1681, 2147483648
    %v1828 = vmul.f32 %v1827, 1.442695
    %v1829 = vpow.pop %v1828
    %v1830 = vadd.f32 %v1829, 1.0
    %v1831 = vrcp.pop %v1830
    %v1832 = vmul.f32 1.0, %v1831
    %v1834 = vlaneseq
    %v1835 = vshrl.u32 %v1834, 7
    %v1836 = vsub.s32 0, %v1835
    %v1837 = vrot.slane %v1820, %v1836
    %v1839 = vmul.f32 %v1826, %v1837
    %v1840 = vadd.f32 %v1783, %v1839
    %v1841 = vtanh.pop %v1840
    %v1842 = vsub.f32 1.0, %v1832
    %v1843 = vmul.f32 %v1842, %v1841
    %vm1844 = vcmask 123904
    %1845 = vst.msk [vmem:[#allocation3] sm:$0x3] %vm1844, %v1843
    %v1846 = vpack.c.bf16 %v1843, %v1843
    %v1849 = vunpack.c.l.b16 %v1818
    %v1850 = vunpack.c.l.b16 %v1819
    %v1851 = vpack.c.b16 %v1850, %v1849
    %v1854 = vsel %vm294, %v1846, 0
    %1856 = vmatprep.subr.bf16.mxu0 0
    %1857 = vmatpush1.bf16.msra.mxu0 0
    %1858 = vmatprep.subr.bf16.mxu0 0
    %1859 = vmatpush1.bf16.msra.mxu0 0
    %1860 = vmatprep.subr.bf16.mxu0 0
    %1861 = vmatpush1.bf16.msra.mxu0 0
    %1862 = vmatprep.subr.bf16.mxu0 0
    %1863 = vmatpush1.bf16.msra.mxu0 0
    %1864 = vmatprep.subr.bf16.mxu0 0
    %1865 = vmatpush1.bf16.msra.mxu0 0
    %1866 = vmatprep.subr.bf16.mxu0 0
    %1867 = vmatpush1.bf16.msra.mxu0 0
    %1868 = vmatprep.subr.bf16.mxu0 0
    %1869 = vmatpush1.bf16.msra.mxu0 0
    %1870 = vmatprep.subr.bf16.mxu0 0
    %1871 = vmatpush1.bf16.msra.mxu0 %v1851
    %1872 = vmatprep.subr.bf16.mxu0 0
    %1873 = vmatpush2.bf16.msra.mxu0 0
    %1874 = vmatprep.subr.bf16.mxu0 0
    %1875 = vmatpush2.bf16.msra.mxu0 0
    %1876 = vmatprep.subr.bf16.mxu0 0
    %1877 = vmatpush2.bf16.msra.mxu0 0
    %1878 = vmatprep.subr.bf16.mxu0 0
    %1879 = vmatpush2.bf16.msra.mxu0 0
    %1880 = vmatprep.subr.bf16.mxu0 0
    %1881 = vmatpush2.bf16.msra.mxu0 0
    %1882 = vmatprep.subr.bf16.mxu0 0
    %1883 = vmatpush2.bf16.msra.mxu0 0
    %1884 = vmatprep.subr.bf16.mxu0 0
    %1885 = vmatpush2.bf16.msra.mxu0 0
    %1886 = vmatprep.subr.bf16.mxu0 0
    %1887 = vmatpush2.bf16.msra.mxu0 0
    %1888 = vmatprep.mubr.bf16.mxu0 0
    %1889 = vmatmul.mubr.bf16.gmra.mxu0 %v1854
    %v1890 = vpop.f32.mrf.mxu0
    %v1891 = vadd.f32 0.0, %v1890
    %v1892 = vpop.f32.mrf.mxu0
    %v1893 = vpop.f32.mrf.mxu0
    %v1894 = vpop.f32.mrf.mxu0
    %1895 = vdwg.mxu0
    %v1896 = vadd.f32 %v1587, %v1891
    %v1897 = vxor.u32 %v1896, 2147483648
    %v1898 = vmul.f32 %v1897, 1.442695
    %v1899 = vpow.pop %v1898
    %v1900 = vadd.f32 %v1899, 1.0
    %v1901 = vrcp.pop %v1900
    %v1902 = vmul.f32 1.0, %v1901
    %v1905 = vunpack.c.l.s4 1983009808
    %v1906 = vunpack.c.0.s8 %v1905
    %v1907 = vlaneseq
    %v1908 = vshrl.u32 %v1907, 7
    %v1909 = vsub.s32 %v1906, %v1908
    %v1910 = vrot.slane %v1891, %v1909
    %1911 = vrot.lane.b32.xlu0 %v1910, 112
    %v1912 = vpop.permute.xlu0 %1911
    %v1914 = vadd.f32 %v1689, %v1912
    %v1915 = vxor.u32 %v1914, 2147483648
    %v1916 = vmul.f32 %v1915, 1.442695
    %v1917 = vpow.pop %v1916
    %v1918 = vadd.f32 %v1917, 1.0
    %v1919 = vrcp.pop %v1918
    %v1920 = vmul.f32 1.0, %v1919
    %1921 = vrot.lane.b32.xlu0 %v1837, 32
    %v1922 = vpop.permute.xlu0 %1921
    %v1924 = vadd.f32 %v1891, %v1922
    %v1927 = vunpack.c.l.s4 1983009808
    %v1928 = vunpack.c.0.s8 %v1927
    %v1929 = vlaneseq
    %v1930 = vshrl.u32 %v1929, 7
    %v1931 = vsub.s32 %v1928, %v1930
    %v1932 = vrot.slane %v1924, %v1931
    %1933 = vrot.lane.b32.xlu0 %v1932, 96
    %v1934 = vpop.permute.xlu0 %1933
    %v1936 = vmul.f32 %v1902, %v1934
    %v1937 = vadd.f32 %v1791, %v1936
    %v1938 = vtanh.pop %v1937
    %v1939 = vsub.f32 1.0, %v1920
    %v1940 = vmul.f32 %v1939, %v1938
    %v1941 = vmul.f32 %v1920, %v1843
    %v1942 = vadd.f32 %v1940, %v1941
    %s1943 = scalar_lea.vmem [#allocation3], 2
    %1944 = vst.msk [vmem:[%s1943] sm:$0x3] %vm1844, %v1942
    %v1945 = vpack.c.bf16 %v1942, %v1942
    %v1947 = vsel %vm294, %v1945, 0
    %1949 = vmatprep.subr.bf16.mxu0 0
    %1950 = vmatpush1.bf16.msra.mxu0 0
    %1951 = vmatprep.subr.bf16.mxu0 0
    %1952 = vmatpush1.bf16.msra.mxu0 0
    %1953 = vmatprep.subr.bf16.mxu0 0
    %1954 = vmatpush1.bf16.msra.mxu0 0
    %1955 = vmatprep.subr.bf16.mxu0 0
    %1956 = vmatpush1.bf16.msra.mxu0 0
    %1957 = vmatprep.subr.bf16.mxu0 0
    %1958 = vmatpush1.bf16.msra.mxu0 0
    %1959 = vmatprep.subr.bf16.mxu0 0
    %1960 = vmatpush1.bf16.msra.mxu0 0
    %1961 = vmatprep.subr.bf16.mxu0 0
    %1962 = vmatpush1.bf16.msra.mxu0 0
    %1963 = vmatprep.subr.bf16.mxu0 0
    %1964 = vmatpush1.bf16.msra.mxu0 %v1851
    %1965 = vmatprep.subr.bf16.mxu0 0
    %1966 = vmatpush2.bf16.msra.mxu0 0
    %1967 = vmatprep.subr.bf16.mxu0 0
    %1968 = vmatpush2.bf16.msra.mxu0 0
    %1969 = vmatprep.subr.bf16.mxu0 0
    %1970 = vmatpush2.bf16.msra.mxu0 0
    %1971 = vmatprep.subr.bf16.mxu0 0
    %1972 = vmatpush2.bf16.msra.mxu0 0
    %1973 = vmatprep.subr.bf16.mxu0 0
    %1974 = vmatpush2.bf16.msra.mxu0 0
    %1975 = vmatprep.subr.bf16.mxu0 0
    %1976 = vmatpush2.bf16.msra.mxu0 0
    %1977 = vmatprep.subr.bf16.mxu0 0
    %1978 = vmatpush2.bf16.msra.mxu0 0
    %1979 = vmatprep.subr.bf16.mxu0 0
    %1980 = vmatpush2.bf16.msra.mxu0 0
    %1981 = vmatprep.mubr.bf16.mxu0 0
    %1982 = vmatmul.mubr.bf16.gmra.mxu0 %v1947
    %v1983 = vpop.f32.mrf.mxu0
    %v1984 = vadd.f32 0.0, %v1983
    %v1985 = vpop.f32.mrf.mxu0
    %v1986 = vpop.f32.mrf.mxu0
    %v1987 = vpop.f32.mrf.mxu0
    %1988 = vdwg.mxu0
    %v1989 = vadd.f32 %v1586, %v1984
    %v1990 = vxor.u32 %v1989, 2147483648
    %v1991 = vmul.f32 %v1990, 1.442695
    %v1992 = vpow.pop %v1991
    %v1993 = vadd.f32 %v1992, 1.0
    %v1994 = vrcp.pop %v1993
    %v1995 = vmul.f32 1.0, %v1994
    %v1998 = vunpack.c.l.s4 1983009808
    %v1999 = vunpack.c.0.s8 %v1998
    %v2000 = vlaneseq
    %v2001 = vshrl.u32 %v2000, 7
    %v2002 = vsub.s32 %v1999, %v2001
    %v2003 = vrot.slane %v1984, %v2002
    %2004 = vrot.lane.b32.xlu0 %v2003, 112
    %v2005 = vpop.permute.xlu0 %2004
    %v2007 = vadd.f32 %v1688, %v2005
    %v2008 = vxor.u32 %v2007, 2147483648
    %v2009 = vmul.f32 %v2008, 1.442695
    %v2010 = vpow.pop %v2009
    %v2011 = vadd.f32 %v2010, 1.0
    %v2012 = vrcp.pop %v2011
    %v2013 = vmul.f32 1.0, %v2012
    %v2014 = vadd.f32 %v1984, %v1922
    %v2017 = vunpack.c.l.s4 1983009808
    %v2018 = vunpack.c.0.s8 %v2017
    %v2019 = vlaneseq
    %v2020 = vshrl.u32 %v2019, 7
    %v2021 = vsub.s32 %v2018, %v2020
    %v2022 = vrot.slane %v2014, %v2021
    %2023 = vrot.lane.b32.xlu0 %v2022, 96
    %v2024 = vpop.permute.xlu0 %2023
    %v2026 = vmul.f32 %v1995, %v2024
    %v2027 = vadd.f32 %v1790, %v2026
    %v2028 = vtanh.pop %v2027
    %v2029 = vsub.f32 1.0, %v2013
    %v2030 = vmul.f32 %v2029, %v2028
    %v2031 = vmul.f32 %v2013, %v1942
    %v2032 = vadd.f32 %v2030, %v2031
    %s2033 = scalar_lea.vmem [#allocation3], 4
    %2034 = vst.msk [vmem:[%s2033] sm:$0x3] %vm1844, %v2032
    %v2035 = vpack.c.bf16 %v2032, %v2032
    %v2037 = vsel %vm294, %v2035, 0
    %2039 = vmatprep.subr.bf16.mxu0 0
    %2040 = vmatpush1.bf16.msra.mxu0 0
    %2041 = vmatprep.subr.bf16.mxu0 0
    %2042 = vmatpush1.bf16.msra.mxu0 0
    %2043 = vmatprep.subr.bf16.mxu0 0
    %2044 = vmatpush1.bf16.msra.mxu0 0
    %2045 = vmatprep.subr.bf16.mxu0 0
    %2046 = vmatpush1.bf16.msra.mxu0 0
    %2047 = vmatprep.subr.bf16.mxu0 0
    %2048 = vmatpush1.bf16.msra.mxu0 0
    %2049 = vmatprep.subr.bf16.mxu0 0
    %2050 = vmatpush1.bf16.msra.mxu0 0
    %2051 = vmatprep.subr.bf16.mxu0 0
    %2052 = vmatpush1.bf16.msra.mxu0 0
    %2053 = vmatprep.subr.bf16.mxu0 0
    %2054 = vmatpush1.bf16.msra.mxu0 %v1851
    %2055 = vmatprep.subr.bf16.mxu0 0
    %2056 = vmatpush2.bf16.msra.mxu0 0
    %2057 = vmatprep.subr.bf16.mxu0 0
    %2058 = vmatpush2.bf16.msra.mxu0 0
    %2059 = vmatprep.subr.bf16.mxu0 0
    %2060 = vmatpush2.bf16.msra.mxu0 0
    %2061 = vmatprep.subr.bf16.mxu0 0
    %2062 = vmatpush2.bf16.msra.mxu0 0
    %2063 = vmatprep.subr.bf16.mxu0 0
    %2064 = vmatpush2.bf16.msra.mxu0 0
    %2065 = vmatprep.subr.bf16.mxu0 0
    %2066 = vmatpush2.bf16.msra.mxu0 0
    %2067 = vmatprep.subr.bf16.mxu0 0
    %2068 = vmatpush2.bf16.msra.mxu0 0
    %2069 = vmatprep.subr.bf16.mxu0 0
    %2070 = vmatpush2.bf16.msra.mxu0 0
    %2071 = vmatprep.mubr.bf16.mxu0 0
    %2072 = vmatmul.mubr.bf16.gmra.mxu0 %v2037
    %v2073 = vpop.f32.mrf.mxu0
    %v2074 = vadd.f32 0.0, %v2073
    %v2075 = vpop.f32.mrf.mxu0
    %v2076 = vpop.f32.mrf.mxu0
    %v2077 = vpop.f32.mrf.mxu0
    %2078 = vdwg.mxu0
    %v2079 = vadd.f32 %v1588, %v2074
    %v2080 = vxor.u32 %v2079, 2147483648
    %v2081 = vmul.f32 %v2080, 1.442695
    %v2082 = vpow.pop %v2081
    %v2083 = vadd.f32 %v2082, 1.0
    %v2084 = vrcp.pop %v2083
    %v2085 = vmul.f32 1.0, %v2084
    %v2088 = vunpack.c.l.s4 1983009808
    %v2089 = vunpack.c.0.s8 %v2088
    %v2090 = vlaneseq
    %v2091 = vshrl.u32 %v2090, 7
    %v2092 = vsub.s32 %v2089, %v2091
    %v2093 = vrot.slane %v2074, %v2092
    %2094 = vrot.lane.b32.xlu0 %v2093, 112
    %v2095 = vpop.permute.xlu0 %2094
    %v2097 = vadd.f32 %v1690, %v2095
    %v2098 = vxor.u32 %v2097, 2147483648
    %v2099 = vmul.f32 %v2098, 1.442695
    %v2100 = vpow.pop %v2099
    %v2101 = vadd.f32 %v2100, 1.0
    %v2102 = vrcp.pop %v2101
    %v2103 = vmul.f32 1.0, %v2102
    %v2104 = vadd.f32 %v2074, %v1922
    %v2107 = vunpack.c.l.s4 1983009808
    %v2108 = vunpack.c.0.s8 %v2107
    %v2109 = vlaneseq
    %v2110 = vshrl.u32 %v2109, 7
    %v2111 = vsub.s32 %v2108, %v2110
    %v2112 = vrot.slane %v2104, %v2111
    %2113 = vrot.lane.b32.xlu0 %v2112, 96
    %v2114 = vpop.permute.xlu0 %2113
    %v2116 = vmul.f32 %v2085, %v2114
    %v2117 = vadd.f32 %v1792, %v2116
    %v2118 = vtanh.pop %v2117
    %v2119 = vsub.f32 1.0, %v2103
    %v2120 = vmul.f32 %v2119, %v2118
    %v2121 = vmul.f32 %v2103, %v2032
    %v2122 = vadd.f32 %v2120, %v2121
    %s2123 = scalar_lea.vmem [#allocation3], 6
    %2124 = vst.msk [vmem:[%s2123] sm:$0x3] %vm1844, %v2122
    %v2125 = vpack.c.bf16 %v2122, %v2122
    %v2127 = vsel %vm294, %v2125, 0
    %2129 = vmatprep.subr.bf16.mxu0 0
    %2130 = vmatpush1.bf16.msra.mxu0 0
    %2131 = vmatprep.subr.bf16.mxu0 0
    %2132 = vmatpush1.bf16.msra.mxu0 0
    %2133 = vmatprep.subr.bf16.mxu0 0
    %2134 = vmatpush1.bf16.msra.mxu0 0
    %2135 = vmatprep.subr.bf16.mxu0 0
    %2136 = vmatpush1.bf16.msra.mxu0 0
    %2137 = vmatprep.subr.bf16.mxu0 0
    %2138 = vmatpush1.bf16.msra.mxu0 0
    %2139 = vmatprep.subr.bf16.mxu0 0
    %2140 = vmatpush1.bf16.msra.mxu0 0
    %2141 = vmatprep.subr.bf16.mxu0 0
    %2142 = vmatpush1.bf16.msra.mxu0 0
    %2143 = vmatprep.subr.bf16.mxu0 0
    %2144 = vmatpush1.bf16.msra.mxu0 %v1851
    %2145 = vmatprep.subr.bf16.mxu0 0
    %2146 = vmatpush2.bf16.msra.mxu0 0
    %2147 = vmatprep.subr.bf16.mxu0 0
    %2148 = vmatpush2.bf16.msra.mxu0 0
    %2149 = vmatprep.subr.bf16.mxu0 0
    %2150 = vmatpush2.bf16.msra.mxu0 0
    %2151 = vmatprep.subr.bf16.mxu0 0
    %2152 = vmatpush2.bf16.msra.mxu0 0
    %2153 = vmatprep.subr.bf16.mxu0 0
    %2154 = vmatpush2.bf16.msra.mxu0 0
    %2155 = vmatprep.subr.bf16.mxu0 0
    %2156 = vmatpush2.bf16.msra.mxu0 0
    %2157 = vmatprep.subr.bf16.mxu0 0
    %2158 = vmatpush2.bf16.msra.mxu0 0
    %2159 = vmatprep.subr.bf16.mxu0 0
    %2160 = vmatpush2.bf16.msra.mxu0 0
    %2161 = vmatprep.mubr.bf16.mxu0 0
    %2162 = vmatmul.mubr.bf16.gmra.mxu0 %v2127
    %v2163 = vpop.f32.mrf.mxu0
    %v2164 = vadd.f32 0.0, %v2163
    %v2165 = vpop.f32.mrf.mxu0
    %v2166 = vpop.f32.mrf.mxu0
    %v2167 = vpop.f32.mrf.mxu0
    %2168 = vdwg.mxu0
    %v2169 = vadd.f32 %v1596, %v2164
    %v2170 = vxor.u32 %v2169, 2147483648
    %v2171 = vmul.f32 %v2170, 1.442695
    %v2172 = vpow.pop %v2171
    %v2173 = vadd.f32 %v2172, 1.0
    %v2174 = vrcp.pop %v2173
    %v2175 = vmul.f32 1.0, %v2174
    %v2178 = vunpack.c.l.s4 1983009808
    %v2179 = vunpack.c.0.s8 %v2178
    %v2180 = vlaneseq
    %v2181 = vshrl.u32 %v2180, 7
    %v2182 = vsub.s32 %v2179, %v2181
    %v2183 = vrot.slane %v2164, %v2182
    %2184 = vrot.lane.b32.xlu0 %v2183, 112
    %v2185 = vpop.permute.xlu0 %2184
    %v2187 = vadd.f32 %v1698, %v2185
    %v2188 = vxor.u32 %v2187, 2147483648
    %v2189 = vmul.f32 %v2188, 1.442695
    %v2190 = vpow.pop %v2189
    %v2191 = vadd.f32 %v2190, 1.0
    %v2192 = vrcp.pop %v2191
    %v2193 = vmul.f32 1.0, %v2192
    %v2194 = vadd.f32 %v2164, %v1922
    %v2197 = vunpack.c.l.s4 1983009808
    %v2198 = vunpack.c.0.s8 %v2197
    %v2199 = vlaneseq
    %v2200 = vshrl.u32 %v2199, 7
    %v2201 = vsub.s32 %v2198, %v2200
    %v2202 = vrot.slane %v2194, %v2201
    %2203 = vrot.lane.b32.xlu0 %v2202, 96
    %v2204 = vpop.permute.xlu0 %2203
    %v2206 = vmul.f32 %v2175, %v2204
    %v2207 = vadd.f32 %v1800, %v2206
    %v2208 = vtanh.pop %v2207
    %v2209 = vsub.f32 1.0, %v2193
    %v2210 = vmul.f32 %v2209, %v2208
    %v2211 = vmul.f32 %v2193, %v2122
    %v2212 = vadd.f32 %v2210, %v2211
    %s2213 = scalar_lea.vmem [#allocation3], 8
    %2214 = vst.msk [vmem:[%s2213] sm:$0x3] %vm1844, %v2212
    %v2215 = vpack.c.bf16 %v2212, %v2212
    %v2217 = vsel %vm294, %v2215, 0
    %2219 = vmatprep.subr.bf16.mxu0 0
    %2220 = vmatpush1.bf16.msra.mxu0 0
    %2221 = vmatprep.subr.bf16.mxu0 0
    %2222 = vmatpush1.bf16.msra.mxu0 0
    %2223 = vmatprep.subr.bf16.mxu0 0
    %2224 = vmatpush1.bf16.msra.mxu0 0
    %2225 = vmatprep.subr.bf16.mxu0 0
    %2226 = vmatpush1.bf16.msra.mxu0 0
    %2227 = vmatprep.subr.bf16.mxu0 0
    %2228 = vmatpush1.bf16.msra.mxu0 0
    %2229 = vmatprep.subr.bf16.mxu0 0
    %2230 = vmatpush1.bf16.msra.mxu0 0
    %2231 = vmatprep.subr.bf16.mxu0 0
    %2232 = vmatpush1.bf16.msra.mxu0 0
    %2233 = vmatprep.subr.bf16.mxu0 0
    %2234 = vmatpush1.bf16.msra.mxu0 %v1851
    %2235 = vmatprep.subr.bf16.mxu0 0
    %2236 = vmatpush2.bf16.msra.mxu0 0
    %2237 = vmatprep.subr.bf16.mxu0 0
    %2238 = vmatpush2.bf16.msra.mxu0 0
    %2239 = vmatprep.subr.bf16.mxu0 0
    %2240 = vmatpush2.bf16.msra.mxu0 0
    %2241 = vmatprep.subr.bf16.mxu0 0
    %2242 = vmatpush2.bf16.msra.mxu0 0
    %2243 = vmatprep.subr.bf16.mxu0 0
    %2244 = vmatpush2.bf16.msra.mxu0 0
    %2245 = vmatprep.subr.bf16.mxu0 0
    %2246 = vmatpush2.bf16.msra.mxu0 0
    %2247 = vmatprep.subr.bf16.mxu0 0
    %2248 = vmatpush2.bf16.msra.mxu0 0
    %2249 = vmatprep.subr.bf16.mxu0 0
    %2250 = vmatpush2.bf16.msra.mxu0 0
    %2251 = vmatprep.mubr.bf16.mxu0 0
    %2252 = vmatmul.mubr.bf16.gmra.mxu0 %v2217
    %v2253 = vpop.f32.mrf.mxu0
    %v2254 = vadd.f32 0.0, %v2253
    %v2255 = vpop.f32.mrf.mxu0
    %v2256 = vpop.f32.mrf.mxu0
    %v2257 = vpop.f32.mrf.mxu0
    %2258 = vdwg.mxu0
    %v2259 = vadd.f32 %v1604, %v2254
    %v2260 = vxor.u32 %v2259, 2147483648
    %v2261 = vmul.f32 %v2260, 1.442695
    %v2262 = vpow.pop %v2261
    %v2263 = vadd.f32 %v2262, 1.0
    %v2264 = vrcp.pop %v2263
    %v2265 = vmul.f32 1.0, %v2264
    %v2268 = vunpack.c.l.s4 1983009808
    %v2269 = vunpack.c.0.s8 %v2268
    %v2270 = vlaneseq
    %v2271 = vshrl.u32 %v2270, 7
    %v2272 = vsub.s32 %v2269, %v2271
    %v2273 = vrot.slane %v2254, %v2272
    %2274 = vrot.lane.b32.xlu0 %v2273, 112
    %v2275 = vpop.permute.xlu0 %2274
    %v2277 = vadd.f32 %v1706, %v2275
    %v2278 = vxor.u32 %v2277, 2147483648
    %v2279 = vmul.f32 %v2278, 1.442695
    %v2280 = vpow.pop %v2279
    %v2281 = vadd.f32 %v2280, 1.0
    %v2282 = vrcp.pop %v2281
    %v2283 = vmul.f32 1.0, %v2282
    %v2284 = vadd.f32 %v2254, %v1922
    %v2287 = vunpack.c.l.s4 1983009808
    %v2288 = vunpack.c.0.s8 %v2287
    %v2289 = vlaneseq
    %v2290 = vshrl.u32 %v2289, 7
    %v2291 = vsub.s32 %v2288, %v2290
    %v2292 = vrot.slane %v2284, %v2291
    %2293 = vrot.lane.b32.xlu0 %v2292, 96
    %v2294 = vpop.permute.xlu0 %2293
    %v2296 = vmul.f32 %v2265, %v2294
    %v2297 = vadd.f32 %v1808, %v2296
    %v2298 = vtanh.pop %v2297
    %v2299 = vsub.f32 1.0, %v2283
    %v2300 = vmul.f32 %v2299, %v2298
    %v2301 = vmul.f32 %v2283, %v2212
    %v2302 = vadd.f32 %v2300, %v2301
    %s2303 = scalar_lea.vmem [#allocation3], 10
    %2304 = vst.msk [vmem:[%s2303] sm:$0x3] %vm1844, %v2302
    %v2305 = vpack.c.bf16 %v2302, %v2302
    %v2307 = vsel %vm294, %v2305, 0
    %2309 = vmatprep.subr.bf16.mxu0 0
    %2310 = vmatpush1.bf16.msra.mxu0 0
    %2311 = vmatprep.subr.bf16.mxu0 0
    %2312 = vmatpush1.bf16.msra.mxu0 0
    %2313 = vmatprep.subr.bf16.mxu0 0
    %2314 = vmatpush1.bf16.msra.mxu0 0
    %2315 = vmatprep.subr.bf16.mxu0 0
    %2316 = vmatpush1.bf16.msra.mxu0 0
    %2317 = vmatprep.subr.bf16.mxu0 0
    %2318 = vmatpush1.bf16.msra.mxu0 0
    %2319 = vmatprep.subr.bf16.mxu0 0
    %2320 = vmatpush1.bf16.msra.mxu0 0
    %2321 = vmatprep.subr.bf16.mxu0 0
    %2322 = vmatpush1.bf16.msra.mxu0 0
    %2323 = vmatprep.subr.bf16.mxu0 0
    %2324 = vmatpush1.bf16.msra.mxu0 %v1851
    %2325 = vmatprep.subr.bf16.mxu0 0
    %2326 = vmatpush2.bf16.msra.mxu0 0
    %2327 = vmatprep.subr.bf16.mxu0 0
    %2328 = vmatpush2.bf16.msra.mxu0 0
    %2329 = vmatprep.subr.bf16.mxu0 0
    %2330 = vmatpush2.bf16.msra.mxu0 0
    %2331 = vmatprep.subr.bf16.mxu0 0
    %2332 = vmatpush2.bf16.msra.mxu0 0
    %2333 = vmatprep.subr.bf16.mxu0 0
    %2334 = vmatpush2.bf16.msra.mxu0 0
    %2335 = vmatprep.subr.bf16.mxu0 0
    %2336 = vmatpush2.bf16.msra.mxu0 0
    %2337 = vmatprep.subr.bf16.mxu0 0
    %2338 = vmatpush2.bf16.msra.mxu0 0
    %2339 = vmatprep.subr.bf16.mxu0 0
    %2340 = vmatpush2.bf16.msra.mxu0 0
    %2341 = vmatprep.mubr.bf16.mxu0 0
    %2342 = vmatmul.mubr.bf16.gmra.mxu0 %v2307
    %v2343 = vpop.f32.mrf.mxu0
    %v2344 = vadd.f32 0.0, %v2343
    %v2345 = vpop.f32.mrf.mxu0
    %v2346 = vpop.f32.mrf.mxu0
    %v2347 = vpop.f32.mrf.mxu0
    %2348 = vdwg.mxu0
    %v2349 = vadd.f32 %v1603, %v2344
    %v2350 = vxor.u32 %v2349, 2147483648
    %v2351 = vmul.f32 %v2350, 1.442695
    %v2352 = vpow.pop %v2351
    %v2353 = vadd.f32 %v2352, 1.0
    %v2354 = vrcp.pop %v2353
    %v2355 = vmul.f32 1.0, %v2354
    %v2358 = vunpack.c.l.s4 1983009808
    %v2359 = vunpack.c.0.s8 %v2358
    %v2360 = vlaneseq
    %v2361 = vshrl.u32 %v2360, 7
    %v2362 = vsub.s32 %v2359, %v2361
    %v2363 = vrot.slane %v2344, %v2362
    %2364 = vrot.lane.b32.xlu0 %v2363, 112
    %v2365 = vpop.permute.xlu0 %2364
    %v2367 = vadd.f32 %v1705, %v2365
    %v2368 = vxor.u32 %v2367, 2147483648
    %v2369 = vmul.f32 %v2368, 1.442695
    %v2370 = vpow.pop %v2369
    %v2371 = vadd.f32 %v2370, 1.0
    %v2372 = vrcp.pop %v2371
    %v2373 = vmul.f32 1.0, %v2372
    %v2374 = vadd.f32 %v2344, %v1922
    %v2377 = vunpack.c.l.s4 1983009808
    %v2378 = vunpack.c.0.s8 %v2377
    %v2379 = vlaneseq
    %v2380 = vshrl.u32 %v2379, 7
    %v2381 = vsub.s32 %v2378, %v2380
    %v2382 = vrot.slane %v2374, %v2381
    %2383 = vrot.lane.b32.xlu0 %v2382, 96
    %v2384 = vpop.permute.xlu0 %2383
    %v2386 = vmul.f32 %v2355, %v2384
    %v2387 = vadd.f32 %v1807, %v2386
    %v2388 = vtanh.pop %v2387
    %v2389 = vsub.f32 1.0, %v2373
    %v2390 = vmul.f32 %v2389, %v2388
    %v2391 = vmul.f32 %v2373, %v2302
    %v2392 = vadd.f32 %v2390, %v2391
    %s2393 = scalar_lea.vmem [#allocation3], 12
    %2394 = vst.msk [vmem:[%s2393] sm:$0x3] %vm1844, %v2392
    %v2395 = vpack.c.bf16 %v2392, %v2392
    %v2397 = vsel %vm294, %v2395, 0
    %2399 = vmatprep.subr.bf16.mxu0 0
    %2400 = vmatpush1.bf16.msra.mxu0 0
    %2401 = vmatprep.subr.bf16.mxu0 0
    %2402 = vmatpush1.bf16.msra.mxu0 0
    %2403 = vmatprep.subr.bf16.mxu0 0
    %2404 = vmatpush1.bf16.msra.mxu0 0
    %2405 = vmatprep.subr.bf16.mxu0 0
    %2406 = vmatpush1.bf16.msra.mxu0 0
    %2407 = vmatprep.subr.bf16.mxu0 0
    %2408 = vmatpush1.bf16.msra.mxu0 0
    %2409 = vmatprep.subr.bf16.mxu0 0
    %2410 = vmatpush1.bf16.msra.mxu0 0
    %2411 = vmatprep.subr.bf16.mxu0 0
    %2412 = vmatpush1.bf16.msra.mxu0 0
    %2413 = vmatprep.subr.bf16.mxu0 0
    %2414 = vmatpush1.bf16.msra.mxu0 %v1851
    %2415 = vmatprep.subr.bf16.mxu0 0
    %2416 = vmatpush2.bf16.msra.mxu0 0
    %2417 = vmatprep.subr.bf16.mxu0 0
    %2418 = vmatpush2.bf16.msra.mxu0 0
    %2419 = vmatprep.subr.bf16.mxu0 0
    %2420 = vmatpush2.bf16.msra.mxu0 0
    %2421 = vmatprep.subr.bf16.mxu0 0
    %2422 = vmatpush2.bf16.msra.mxu0 0
    %2423 = vmatprep.subr.bf16.mxu0 0
    %2424 = vmatpush2.bf16.msra.mxu0 0
    %2425 = vmatprep.subr.bf16.mxu0 0
    %2426 = vmatpush2.bf16.msra.mxu0 0
    %2427 = vmatprep.subr.bf16.mxu0 0
    %2428 = vmatpush2.bf16.msra.mxu0 0
    %2429 = vmatprep.subr.bf16.mxu0 0
    %2430 = vmatpush2.bf16.msra.mxu0 0
    %2431 = vmatprep.mubr.bf16.mxu0 0
    %2432 = vmatmul.mubr.bf16.gmra.mxu0 %v2397
    %v2433 = vpop.f32.mrf.mxu0
    %v2434 = vadd.f32 0.0, %v2433
    %v2435 = vpop.f32.mrf.mxu0
    %v2436 = vpop.f32.mrf.mxu0
    %v2437 = vpop.f32.mrf.mxu0
    %2438 = vdwg.mxu0
    %v2439 = vadd.f32 %v1605, %v2434
    %v2440 = vxor.u32 %v2439, 2147483648
    %v2441 = vmul.f32 %v2440, 1.442695
    %v2442 = vpow.pop %v2441
    %v2443 = vadd.f32 %v2442, 1.0
    %v2444 = vrcp.pop %v2443
    %v2445 = vmul.f32 1.0, %v2444
    %v2448 = vunpack.c.l.s4 1983009808
    %v2449 = vunpack.c.0.s8 %v2448
    %v2450 = vlaneseq
    %v2451 = vshrl.u32 %v2450, 7
    %v2452 = vsub.s32 %v2449, %v2451
    %v2453 = vrot.slane %v2434, %v2452
    %2454 = vrot.lane.b32.xlu0 %v2453, 112
    %v2455 = vpop.permute.xlu0 %2454
    %v2457 = vadd.f32 %v1707, %v2455
    %v2458 = vxor.u32 %v2457, 2147483648
    %v2459 = vmul.f32 %v2458, 1.442695
    %v2460 = vpow.pop %v2459
    %v2461 = vadd.f32 %v2460, 1.0
    %v2462 = vrcp.pop %v2461
    %v2463 = vmul.f32 1.0, %v2462
    %v2464 = vadd.f32 %v2434, %v1922
    %v2467 = vunpack.c.l.s4 1983009808
    %v2468 = vunpack.c.0.s8 %v2467
    %v2469 = vlaneseq
    %v2470 = vshrl.u32 %v2469, 7
    %v2471 = vsub.s32 %v2468, %v2470
    %v2472 = vrot.slane %v2464, %v2471
    %2473 = vrot.lane.b32.xlu0 %v2472, 96
    %v2474 = vpop.permute.xlu0 %2473
    %v2476 = vmul.f32 %v2445, %v2474
    %v2477 = vadd.f32 %v1809, %v2476
    %v2478 = vtanh.pop %v2477
    %v2479 = vsub.f32 1.0, %v2463
    %v2480 = vmul.f32 %v2479, %v2478
    %v2481 = vmul.f32 %v2463, %v2392
    %v2482 = vadd.f32 %v2480, %v2481
    %s2483 = scalar_lea.vmem [#allocation3], 14
    %2484 = vst.msk [vmem:[%s2483] sm:$0x3] %vm1844, %v2482
    %v2485 = vld [vmem:[#allocation3] sm:$0x3]
    %v2486 = vld [vmem:[#allocation3 + $0x2] sm:$0x3]
    %v2487 = vld [vmem:[#allocation3 + $0x4] sm:$0x3]
    %v2488 = vld [vmem:[#allocation3 + $0x6] sm:$0x3]
    %v2489 = vld [vmem:[#allocation3 + $0x8] sm:$0x3]
    %v2490 = vld [vmem:[#allocation3 + $0xa] sm:$0x3]
    %v2491 = vld [vmem:[#allocation3 + $0xc] sm:$0x3]
    %v2492 = vld [vmem:[#allocation3 + $0xe] sm:$0x3]
    %v2493 = vld [vmem:[%s21] sm:$0x1]
    %v2495 = vlaneseq
    %v2496 = vshrl.u32 %v2495, 7
    %v2497 = vsub.s32 0, %v2496
    %v2498 = vrot.slane %v2493, %v2497
    %v2500 = vmul.f32 %v2485, %v2498
    %v2501 = vmul.f32 %v2486, %v2498
    %v2502 = vmul.f32 %v2487, %v2498
    %v2503 = vmul.f32 %v2488, %v2498
    %v2504 = vmul.f32 %v2489, %v2498
    %v2505 = vmul.f32 %v2490, %v2498
    %v2506 = vmul.f32 %v2491, %v2498
    %v2507 = vmul.f32 %v2492, %v2498
    %v2508 = vsel %vm1844, %v2500, 0.0
    %2509 = vadd.xlane.f32.xlu0 %v2508
    %v2510 = vpop.xlane.xlu0 %2509
    %v2511 = vsel %vm1844, %v2501, 0.0
    %2512 = vadd.xlane.f32.xlu0 %v2511
    %v2513 = vpop.xlane.xlu0 %2512
    %v2514 = vsel %vm1844, %v2502, 0.0
    %2515 = vadd.xlane.f32.xlu0 %v2514
    %v2516 = vpop.xlane.xlu0 %2515
    %v2517 = vsel %vm1844, %v2503, 0.0
    %2518 = vadd.xlane.f32.xlu0 %v2517
    %v2519 = vpop.xlane.xlu0 %2518
    %v2520 = vsel %vm1844, %v2504, 0.0
    %2521 = vadd.xlane.f32.xlu0 %v2520
    %v2522 = vpop.xlane.xlu0 %2521
    %v2523 = vsel %vm1844, %v2505, 0.0
    %2524 = vadd.xlane.f32.xlu0 %v2523
    %v2525 = vpop.xlane.xlu0 %2524
    %v2526 = vsel %vm1844, %v2506, 0.0
    %2527 = vadd.xlane.f32.xlu0 %v2526
    %v2528 = vpop.xlane.xlu0 %2527
    %v2529 = vsel %vm1844, %v2507, 0.0
    %2530 = vadd.xlane.f32.xlu0 %v2529
    %v2531 = vpop.xlane.xlu0 %2530
    %v2532 = vadd.f32 %v2510, %v206
    %v2533 = vadd.f32 %v2513, %v207
    %v2534 = vadd.f32 %v2516, %v208
    %v2535 = vadd.f32 %v2519, %v209
    %v2536 = vadd.f32 %v2522, %v210
    %v2537 = vadd.f32 %v2525, %v211
    %v2538 = vadd.f32 %v2528, %v212
    %v2539 = vadd.f32 %v2531, %v213
    %v2540 = vsel %vm1314, %v2532, -inf
    %v2541 = vsel %vm1314, %v2533, -inf
    %v2542 = vsel %vm1314, %v2534, -inf
    %v2543 = vsel %vm1314, %v2535, -inf
    %v2544 = vsel %vm1314, %v2536, -inf
    %v2545 = vmax.f32 %v2540, %v2544
    %v2546 = vsel %vm1314, %v2537, -inf
    %v2547 = vmax.f32 %v2541, %v2546
    %v2548 = vsel %vm1314, %v2538, -inf
    %v2549 = vmax.f32 %v2542, %v2548
    %v2550 = vsel %vm1314, %v2539, -inf
    %v2551 = vmax.f32 %v2543, %v2550
    %v2552 = vmax.f32 %v2545, %v2547
    %v2553 = vmax.f32 %v2549, %v2551
    %v2554 = vmax.f32 %v2552, %v2553
    %v2555 = vsub.f32 %v2532, %v2554
    %v2556 = vsub.f32 %v2533, %v2554
    %v2557 = vsub.f32 %v2534, %v2554
    %v2558 = vsub.f32 %v2535, %v2554
    %v2559 = vsub.f32 %v2536, %v2554
    %v2560 = vsub.f32 %v2537, %v2554
    %v2561 = vsub.f32 %v2538, %v2554
    %v2562 = vsub.f32 %v2539, %v2554
    %v2563 = vmul.f32 %v2555, 1.442695
    %v2564 = vpow.pop %v2563
    %v2565 = vmul.f32 %v2556, 1.442695
    %v2566 = vpow.pop %v2565
    %v2567 = vmul.f32 %v2557, 1.442695
    %v2568 = vpow.pop %v2567
    %v2569 = vmul.f32 %v2558, 1.442695
    %v2570 = vpow.pop %v2569
    %v2571 = vmul.f32 %v2559, 1.442695
    %v2572 = vpow.pop %v2571
    %v2573 = vmul.f32 %v2560, 1.442695
    %v2574 = vpow.pop %v2573
    %v2575 = vmul.f32 %v2561, 1.442695
    %v2576 = vpow.pop %v2575
    %v2577 = vmul.f32 %v2562, 1.442695
    %v2578 = vpow.pop %v2577
    %v2579 = vsel %vm1314, %v2564, 0.0
    %v2580 = vsel %vm1314, %v2566, 0.0
    %v2581 = vadd.f32 %v2579, %v2580
    %v2582 = vsel %vm1314, %v2568, 0.0
    %v2583 = vadd.f32 %v2581, %v2582
    %v2584 = vsel %vm1314, %v2570, 0.0
    %v2585 = vadd.f32 %v2583, %v2584
    %v2586 = vsel %vm1314, %v2572, 0.0
    %v2587 = vadd.f32 %v2585, %v2586
    %v2588 = vsel %vm1314, %v2574, 0.0
    %v2589 = vadd.f32 %v2587, %v2588
    %v2590 = vsel %vm1314, %v2576, 0.0
    %v2591 = vadd.f32 %v2589, %v2590
    %v2592 = vsel %vm1314, %v2578, 0.0
    %v2593 = vadd.f32 %v2591, %v2592
    %v2594 = vadd.f32 %v2593, 1e-20
    %v2595 = vrcp.pop %v2594
    %v2596 = vmul.f32 %v2564, %v2595
    %v2597 = vmul.f32 %v2566, %v2595
    %v2598 = vmul.f32 %v2568, %v2595
    %v2599 = vmul.f32 %v2570, %v2595
    %v2600 = vmul.f32 %v2572, %v2595
    %v2601 = vmul.f32 %v2574, %v2595
    %v2602 = vmul.f32 %v2576, %v2595
    %v2603 = vmul.f32 %v2578, %v2595
    %2605 = vset.pattern.permute.xlu0 0
    %2606 = vperm.xlu0 %2605, %v2596
    %v2607 = vpop.permute.xlu0 %2606
    %2610 = vset.pattern.permute.xlu0 0
    %2611 = vperm.xlu0 %2610, %v2597
    %v2612 = vpop.permute.xlu0 %2611
    %2615 = vset.pattern.permute.xlu0 0
    %2616 = vperm.xlu0 %2615, %v2598
    %v2617 = vpop.permute.xlu0 %2616
    %2620 = vset.pattern.permute.xlu0 0
    %2621 = vperm.xlu0 %2620, %v2599
    %v2622 = vpop.permute.xlu0 %2621
    %2625 = vset.pattern.permute.xlu0 0
    %2626 = vperm.xlu0 %2625, %v2600
    %v2627 = vpop.permute.xlu0 %2626
    %2630 = vset.pattern.permute.xlu0 0
    %2631 = vperm.xlu0 %2630, %v2601
    %v2632 = vpop.permute.xlu0 %2631
    %2635 = vset.pattern.permute.xlu0 0
    %2636 = vperm.xlu0 %2635, %v2602
    %v2637 = vpop.permute.xlu0 %2636
    %2640 = vset.pattern.permute.xlu0 0
    %2641 = vperm.xlu0 %2640, %v2603
    %v2642 = vpop.permute.xlu0 %2641
    %v2644 = vmul.f32 %v2607, %v2485
    %v2645 = vmul.f32 %v2612, %v2486
    %v2646 = vmul.f32 %v2617, %v2487
    %v2647 = vmul.f32 %v2622, %v2488
    %v2648 = vmul.f32 %v2627, %v2489
    %v2649 = vmul.f32 %v2632, %v2490
    %v2650 = vmul.f32 %v2637, %v2491
    %v2651 = vmul.f32 %v2642, %v2492
    %v2652 = vsel %vm1844, %v2644, 0.0
    %v2653 = vsel %vm1844, %v2645, 0.0
    %v2654 = vadd.f32 %v2652, %v2653
    %v2655 = vsel %vm1844, %v2646, 0.0
    %v2656 = vadd.f32 %v2654, %v2655
    %v2657 = vsel %vm1844, %v2647, 0.0
    %v2658 = vadd.f32 %v2656, %v2657
    %v2659 = vsel %vm1844, %v2648, 0.0
    %v2660 = vadd.f32 %v2658, %v2659
    %v2661 = vsel %vm1844, %v2649, 0.0
    %v2662 = vadd.f32 %v2660, %v2661
    %v2663 = vsel %vm1844, %v2650, 0.0
    %v2664 = vadd.f32 %v2662, %v2663
    %v2665 = vsel %vm1844, %v2651, 0.0
    %v2666 = vadd.f32 %v2664, %v2665
    %v2667 = vld [vmem:[%s23] sm:$0x3]
    %v2668 = vld [vmem:[%s25] sm:$0x1]
    %v2670 = vlaneseq
    %v2671 = vshrl.u32 %v2670, 7
    %v2672 = vsub.s32 0, %v2671
    %v2673 = vrot.slane %v2668, %v2672
    %v2675 = vadd.f32 %v2673, 0.0
    %v2676 = vpack.c.bf16 %v1441, %v1441
    %v2677 = vld [vmem:[%s11] sm:$0xf]
    %v2678 = vld [vmem:[%s11 + $0x4] sm:$0xf]
    %v2679 = vld [vmem:[%s11 + $0x8] sm:$0xf]
    %v2680 = vld [vmem:[%s11 + $0xc] sm:$0xf]
    %v2685 = vunpack.c.l.b16 %v2677
    %v2686 = vunpack.c.l.b16 %v2678
    %v2687 = vunpack.c.l.b16 %v2679
    %v2688 = vunpack.c.l.b16 %v2680
    %v2689 = vpack.c.b16 %v2686, %v2685
    %v2690 = vpack.c.b16 %v2688, %v2687
    %v2694 = vsel %vm626, %v2676, 0
    %2696 = vmatprep.subr.bf16.mxu0 0
    %2697 = vmatpush1.bf16.msra.mxu0 0
    %2698 = vmatprep.subr.bf16.mxu0 0
    %2699 = vmatpush1.bf16.msra.mxu0 0
    %2700 = vmatprep.subr.bf16.mxu0 0
    %2701 = vmatpush1.bf16.msra.mxu0 0
    %2702 = vmatprep.subr.bf16.mxu0 0
    %2703 = vmatpush1.bf16.msra.mxu0 0
    %2704 = vmatprep.subr.bf16.mxu0 0
    %2705 = vmatpush1.bf16.msra.mxu0 0
    %2706 = vmatprep.subr.bf16.mxu0 0
    %2707 = vmatpush1.bf16.msra.mxu0 0
    %2708 = vmatprep.subr.bf16.mxu0 0
    %2709 = vmatpush1.bf16.msra.mxu0 %v2690
    %2710 = vmatprep.subr.bf16.mxu0 0
    %2711 = vmatpush1.bf16.msra.mxu0 %v2689
    %2712 = vmatprep.subr.bf16.mxu0 0
    %2713 = vmatpush2.bf16.msra.mxu0 0
    %2714 = vmatprep.subr.bf16.mxu0 0
    %2715 = vmatpush2.bf16.msra.mxu0 0
    %2716 = vmatprep.subr.bf16.mxu0 0
    %2717 = vmatpush2.bf16.msra.mxu0 0
    %2718 = vmatprep.subr.bf16.mxu0 0
    %2719 = vmatpush2.bf16.msra.mxu0 0
    %2720 = vmatprep.subr.bf16.mxu0 0
    %2721 = vmatpush2.bf16.msra.mxu0 0
    %2722 = vmatprep.subr.bf16.mxu0 0
    %2723 = vmatpush2.bf16.msra.mxu0 0
    %2724 = vmatprep.subr.bf16.mxu0 0
    %2725 = vmatpush2.bf16.msra.mxu0 0
    %2726 = vmatprep.subr.bf16.mxu0 0
    %2727 = vmatpush2.bf16.msra.mxu0 0
    %2728 = vmatprep.mubr.bf16.mxu0 0
    %2729 = vmatmul.mubr.bf16.gmra.mxu0 %v2694
    %v2730 = vpop.f32.mrf.mxu0
    %v2731 = vadd.f32 0.0, %v2730
    %v2732 = vpop.f32.mrf.mxu0
    %v2733 = vpop.f32.mrf.mxu0
    %v2734 = vpop.f32.mrf.mxu0
    %2735 = vdwg.mxu0
    %v2736 = vadd.f32 %v2675, %v2731
    %v2737 = vpack.c.bf16 %v2666, %v2666
    %v2738 = vld [vmem:[%s22] sm:$0xf]
    %v2739 = vld [vmem:[%s22 + $0x4] sm:$0xf]
    %v2742 = vunpack.c.l.b16 %v2738
    %v2743 = vunpack.c.l.b16 %v2739
    %v2744 = vpack.c.b16 %v2743, %v2742
    %v2747 = vsel %vm294, %v2737, 0
    %2749 = vmatprep.subr.bf16.mxu0 0
    %2750 = vmatpush1.bf16.msra.mxu0 0
    %2751 = vmatprep.subr.bf16.mxu0 0
    %2752 = vmatpush1.bf16.msra.mxu0 0
    %2753 = vmatprep.subr.bf16.mxu0 0
    %2754 = vmatpush1.bf16.msra.mxu0 0
    %2755 = vmatprep.subr.bf16.mxu0 0
    %2756 = vmatpush1.bf16.msra.mxu0 0
    %2757 = vmatprep.subr.bf16.mxu0 0
    %2758 = vmatpush1.bf16.msra.mxu0 0
    %2759 = vmatprep.subr.bf16.mxu0 0
    %2760 = vmatpush1.bf16.msra.mxu0 0
    %2761 = vmatprep.subr.bf16.mxu0 0
    %2762 = vmatpush1.bf16.msra.mxu0 0
    %2763 = vmatprep.subr.bf16.mxu0 0
    %2764 = vmatpush1.bf16.msra.mxu0 %v2744
    %2765 = vmatprep.subr.bf16.mxu0 0
    %2766 = vmatpush2.bf16.msra.mxu0 0
    %2767 = vmatprep.subr.bf16.mxu0 0
    %2768 = vmatpush2.bf16.msra.mxu0 0
    %2769 = vmatprep.subr.bf16.mxu0 0
    %2770 = vmatpush2.bf16.msra.mxu0 0
    %2771 = vmatprep.subr.bf16.mxu0 0
    %2772 = vmatpush2.bf16.msra.mxu0 0
    %2773 = vmatprep.subr.bf16.mxu0 0
    %2774 = vmatpush2.bf16.msra.mxu0 0
    %2775 = vmatprep.subr.bf16.mxu0 0
    %2776 = vmatpush2.bf16.msra.mxu0 0
    %2777 = vmatprep.subr.bf16.mxu0 0
    %2778 = vmatpush2.bf16.msra.mxu0 0
    %2779 = vmatprep.subr.bf16.mxu0 0
    %2780 = vmatpush2.bf16.msra.mxu0 0
    %2781 = vmatprep.mubr.bf16.mxu0 0
    %2782 = vmatmul.mubr.bf16.gmra.mxu0 %v2747
    %v2783 = vpop.f32.mrf.mxu0
    %v2784 = vadd.f32 0.0, %v2783
    %v2785 = vpop.f32.mrf.mxu0
    %v2786 = vpop.f32.mrf.mxu0
    %v2787 = vpop.f32.mrf.mxu0
    %2788 = vdwg.mxu0
    %v2789 = vadd.f32 %v2736, %v2784
    %v2790 = vld [vmem:[%s24] sm:$0x1]
    %2792 = vset.pattern.permute.xlu0 0
    %2793 = vperm.xlu0 %2792, %v2667
    %v2794 = vpop.permute.xlu0 %2793
    %v2797 = vlaneseq
    %v2798 = vshrl.u32 %v2797, 7
    %v2799 = vsub.s32 0, %v2798
    %v2800 = vrot.slane %v2790, %v2799
    %v2802 = vmul.f32 %v2794, %v2800
    %v2803 = vadd.f32 %v2789, %v2802
    %vm2804 = vcmask 25600
    %2805 = vst.msk [vmem:[#allocation19] sm:$0x3] %vm2804, %v2803
    // Predicated region
    $region142: #{tpu_custom_call.1} parent=1 // pred_check
      _
    $region143: #{tpu_custom_call.1} parent=1 // pred_check_branch
      %2807 = sbr.rel (0) target = $region145
    $region144: #{tpu_custom_call.1} parent=1 // pred_region
      %s2809 = ssub.s32 32, 32
      %2810 = vsyncadd [#allocation6], %s2809
      %s2812 = sshll.u32 [#allocation19], 4
      %s2813 = int_to_ptr.vmem [resolvable:$true] %s2812
      %2815 = dma.vmem_to_hbm [thread:$0]  %s2813, 32, %s26, [#allocation6]
    $region145: #{tpu_custom_call.1} parent=1 // pred_fallthru
      _
    // Predicated region
    $region146: #{tpu_custom_call.1} parent=1 // pred_check
      _
    $region147: #{tpu_custom_call.1} parent=1 // pred_check_branch
      %2817 = sbr.rel (0) target = $region149
    $region148: #{tpu_custom_call.1} parent=1 // pred_region
      %2818 = dma.done [#allocation6], 32
    $region149: #{tpu_custom_call.1} parent=1 // pred_fallthru
      _
    %2819 = vsyncpa [#allocation5], 1
    %2820 = vsyncpa [#allocation8], 1
    %2821 = vsyncpa [#allocation11], 1
    %2822 = vsyncpa [#allocation14], 1
    %2823 = vsyncpa [#allocation17], 1
    %2824 = vsyncpa [#allocation6], 1

</llo_original>
